<compile_context>
chip_gen: v7x
topology: tpu7x:2x2x1
jax: 0.10.0
libtpu: 0.0.40
codegen_flags: <defaults>
</compile_context>

<pallas_src>
import numpy as np
import jax
import jax.numpy as jnp
from jax.experimental import pallas as pl
from jax.experimental.pallas import tpu as pltpu


# ---------------------------------------------------------------------------
# Fused kernel: patch-embed -> conv3x3+ReLU -> (conv1x1 ∘ bilinear upsample)
# ---------------------------------------------------------------------------

def keypoint_fused_kernel(p_ref, ew_ref, eb_ref, s_ref, w3_ref, b3_ref,
                          w1_ref, kt_ref, bsel_ref, b1_ref, o_ref):
    # p_ref   : (M, K)     bf16  patchified pixels, M = Bblk*Hf*Wf
    # ew_ref  : (K, Cf)    bf16  patch-embed weight (backbone stand-in)
    # eb_ref  : (1, Cf)    f32   patch-embed bias
    # s_ref   : (9, M, M)  bf16  batched 0/1 shift matrices, s=(dy+1)*3+(dx+1)
    # w3_ref  : (9, Cf, C) bf16  conv3x3 taps (PyTorch (C,Cf,3,3) -> transpose(2,3,1,0))
    # b3_ref  : (1, C)     f32   conv3x3 bias
    # w1_ref  : (C, O)     bf16  1x1 conv weight replicated over the O lanes
    # kt_ref  : (M, O)     bf16  kron(A_h, A_w)^T tiled Bblk times along rows
    # bsel_ref: (Bblk, M)  bf16  0/1 per-image row-sum selector kron(I_B, 1^T)
    # b1_ref  : (1, O)     f32   1x1 conv bias broadcast over output pixels
    # o_ref   : (Bblk, O)  f32   heatmaps, O = Hh*Ww (lane dense)
    M = p_ref.shape[0]
    C = w3_ref.shape[2]

    # -- stand-in backbone: patch embedding, one bf16 MXU matmul --------------
    feats = jnp.dot(p_ref[...], ew_ref[...], preferred_element_type=jnp.float32)
    feats = (feats + eb_ref[...]).astype(jnp.bfloat16)                 # (M, Cf)

    # -- conv3x3 (padding=1) as 9 accumulating MXU dots -----------------------
    # Zero padding is baked into the shift matrices; shifted rows are exact
    # copies of feats rows (or zeros), so there is no scratch / halo / reshape.
    acc = jnp.zeros((M, C), dtype=jnp.float32)
    for s in range(9):
        shifted = jnp.dot(s_ref[s], feats,
                          preferred_element_type=jnp.float32).astype(jnp.bfloat16)
        acc = acc + jnp.dot(shifted, w3_ref[s],
                            preferred_element_type=jnp.float32)
    y = jnp.maximum(acc + b3_ref[...], 0.0).astype(jnp.bfloat16)       # (M, C)

    # -- 1x1 conv (commuted ahead of the linear upsample), MXU contraction ----
    # w1 is replicated over the O lanes, so z[m, :] is the per-pixel scalar
    # already broadcast lane-dense (no (M,1) column / reshape / lane reduce).
    z = jnp.dot(y, w1_ref[...], preferred_element_type=jnp.float32)    # (M, O)

    # -- bilinear upsample: heat[b, o] = sum_p z[b*P+p] * kronT[p, o] ---------
    wz = z.astype(jnp.bfloat16) * kt_ref[...]                          # (M, O)
    heat = jnp.dot(bsel_ref[...], wz,
                   preferred_element_type=jnp.float32)                 # (Bblk, O)
    o_ref[...] = heat + b1_ref[...]


def fused_forward(patches2d, embed_w, embed_b, shift_mats, conv3_w, conv3_b,
                  conv1_w_rep, kron_t_tiled, block_sel, conv1_b_row,
                  *, batch_block):
    """patches2d: (N*Hf*Wf, K) bf16.  Returns (N, Hh*Ww) f32 heatmap rows."""
    NP, K = patches2d.shape
    _, Cf = embed_w.shape
    C = conv3_w.shape[2]
    M, O = kron_t_tiled.shape
    Bblk = batch_block
    pix = M // Bblk
    N = NP // pix
    n_steps = N // Bblk

    return pl.pallas_call(
        keypoint_fused_kernel,
        out_shape=jax.ShapeDtypeStruct((N, O), jnp.float32),
        grid=(n_steps,),
        in_specs=[
            pl.BlockSpec((M, K), lambda n: (n, 0)),          # patches (per step)
            pl.BlockSpec((K, Cf), lambda n: (0, 0)),         # embed_w
            pl.BlockSpec((1, Cf), lambda n: (0, 0)),         # embed_b
            pl.BlockSpec((9, M, M), lambda n: (0, 0, 0)),    # shift matrices
            pl.BlockSpec((9, Cf, C), lambda n: (0, 0, 0)),   # conv3 taps
            pl.BlockSpec((1, C), lambda n: (0, 0)),          # conv3 bias
            pl.BlockSpec((C, O), lambda n: (0, 0)),          # conv1 weight (replicated)
            pl.BlockSpec((M, O), lambda n: (0, 0)),          # kron(A_h, A_w)^T tiled
            pl.BlockSpec((Bblk, M), lambda n: (0, 0)),       # block-row-sum selector
            pl.BlockSpec((1, O), lambda n: (0, 0)),          # conv1 bias row
        ],
        out_specs=pl.BlockSpec((Bblk, O), lambda n: (n, 0)),
        compiler_params=pltpu.CompilerParams(
            dimension_semantics=("parallel",)),
    )(patches2d, embed_w, embed_b, shift_mats, conv3_w, conv3_b,
      conv1_w_rep, kron_t_tiled, block_sel, conv1_b_row)


# ---------------------------------------------------------------------------
# Host-side helpers (pure glue: patchify, interp / shift / selector matrices)
# ---------------------------------------------------------------------------

def bilinear_matrix(out_size, in_size):
    """nn.Upsample(mode='bilinear', align_corners=False) interp matrix (numpy)."""
    i = np.arange(out_size, dtype=np.float64)
    src = (i + 0.5) * (in_size / out_size) - 0.5
    src = np.maximum(src, 0.0)
    i0 = np.minimum(np.floor(src).astype(np.int64), in_size - 1)
    i1 = np.minimum(i0 + 1, in_size - 1)
    frac = src - i0
    A = np.zeros((out_size, in_size), np.float64)
    A[np.arange(out_size), i0] += 1.0 - frac
    A[np.arange(out_size), i1] += frac
    return A.astype(np.float32)


def build_shift_mats(Hf, Wf, Bblk):
    """S[s] with (S[s] @ feats)[p] = feats[p shifted by (dy,dx)] (zero padded),
    batched as kron(I_Bblk, S_s).  s = (dy+1)*3 + (dx+1), dy/dx in {-1,0,1}."""
    P = Hf * Wf
    out = np.zeros((9, Bblk * P, Bblk * P), np.float32)
    s = 0
    for dy in (-1, 0, 1):
        for dx in (-1, 0, 1):
            S = np.zeros((P, P), np.float32)
            for h in range(Hf):
                for w in range(Wf):
                    hs, ws = h + dy, w + dx
                    if 0 <= hs < Hf and 0 <= ws < Wf:
                        S[h * Wf + w, hs * Wf + ws] = 1.0
            out[s] = np.kron(np.eye(Bblk, dtype=np.float32), S)
            s += 1
    return out


def extract_patches(img_nchw, P):
    N, C, H, W = img_nchw.shape
    Hf, Wf = H // P, W // P
    x = img_nchw.reshape(N, C, Hf, P, Wf, P)
    x = x.transpose(0, 2, 4, 1, 3, 5)          # N, Hf, Wf, C, P, P
    return x.reshape(N, Hf * Wf, C * P * P)


# ---------------------------------------------------------------------------
# Model
# ---------------------------------------------------------------------------

class KeypointModelPallas:
    def __init__(self, heatmap_size=(16, 32), num_features=128, patch=8,
                 head_hidden=256, batch_block=8, key=jax.random.PRNGKey(42)):
        self.heatmap_size = heatmap_size
        self.patch = patch
        self.num_features = num_features
        self.head_hidden = head_hidden
        self.batch_block = batch_block
        k0, k1, k2, k3 = jax.random.split(key, 4)
        K = 3 * patch * patch
        # Stand-in feature extractor (patchify + linear embed), bf16 MXU operands.
        self.embed_w = (jax.random.normal(k0, (K, num_features), jnp.float32)
                        * 0.02).astype(jnp.bfloat16)
        self.embed_b = jnp.zeros((1, num_features), jnp.float32)
        # Head conv3x3 stored as 9 taps, each (Cf, C).  Real PyTorch Conv2d
        # weights (C, Cf, 3, 3) map via w.transpose(2, 3, 1, 0).reshape(9, Cf, C).
        self.conv3_w = (jax.random.normal(k1, (9, num_features, head_hidden),
                                          jnp.float32) * 0.02).astype(jnp.bfloat16)
        self.conv3_b = jax.random.normal(k2, (1, head_hidden), jnp.float32) * 0.01
        self.conv1_w = jax.random.normal(k3, (head_hidden,), jnp.float32) * 0.02
        self.conv1_b = jnp.zeros((1,), jnp.float32)

    def __call__(self, image_nchw):
        N, Cin, H, W = image_nchw.shape
        P = self.patch
        Hf, Wf = H // P, W // P
        Hh, Ww = self.heatmap_size
        pix, O = Hf * Wf, Hh * Ww

        # Per-step image block (keeps >= 2 parallel grid steps for v7x when N >= 2*Bblk).
        Bblk = min(self.batch_block, N)
        while N % Bblk:
            Bblk -= 1

        # Host-side constants (shapes are static, baked as compile-time constants).
        kron_t = np.kron(bilinear_matrix(Hh, Hf), bilinear_matrix(Ww, Wf)).T  # (pix, O)
        kron_t_tiled = jnp.asarray(np.tile(kron_t, (Bblk, 1)), jnp.bfloat16)  # (M, O)
        block_sel = jnp.asarray(
            np.kron(np.eye(Bblk, dtype=np.float32), np.ones((1, pix), np.float32)),
            jnp.bfloat16)                                                     # (Bblk, M)
        shift_mats = jnp.asarray(build_shift_mats(Hf, Wf, Bblk), jnp.bfloat16)

        patches = extract_patches(image_nchw, P).reshape(N * pix, Cin * P * P)
        patches = patches.astype(jnp.bfloat16)
        conv1_w_rep = jnp.broadcast_to(
            self.conv1_w.astype(jnp.bfloat16)[:, None], (self.head_hidden, O))
        conv1_b_row = jnp.broadcast_to(
            self.conv1_b.reshape(1, 1), (1, O)).astype(jnp.float32)

        heat = fused_forward(patches, self.embed_w, self.embed_b, shift_mats,
                             self.conv3_w, self.conv3_b, conv1_w_rep,
                             kron_t_tiled, block_sel, conv1_b_row,
                             batch_block=Bblk)                          # (N, O)
        return heat.reshape(N, 1, Hh, Ww)


# ---------------------------------------------------------------------------
# Pure-JAX reference (same stand-in backbone / weights) for a tolerance check
# ---------------------------------------------------------------------------

def reference_forward(model, image_nchw):
    N, Cin, H, W = image_nchw.shape
    P = model.patch
    Hf, Wf = H // P, W // P
    Hh, Ww = model.heatmap_size
    patches = extract_patches(image_nchw, P).astype(jnp.bfloat16).astype(jnp.float32)
    feats = patches @ model.embed_w.astype(jnp.float32) + model.embed_b     # (N,pix,Cf)
    feats = feats.reshape(N, Hf, Wf, -1)
    fpad = jnp.pad(feats, ((0, 0), (1, 1), (1, 1), (0, 0)))
    acc = jnp.zeros((N, Hf, Wf, model.head_hidden), jnp.float32)
    s = 0
    for dy in range(3):
        for dx in range(3):
            win = fpad[:, dy:dy + Hf, dx:dx + Wf, :]
            acc = acc + jnp.einsum('nhwc,cd->nhwd', win,
                                   model.conv3_w[s].astype(jnp.float32))
            s += 1
    y = jnp.maximum(acc + model.conv3_b.reshape(1, 1, 1, -1), 0.0)
    w1 = model.conv1_w.astype(jnp.bfloat16).astype(jnp.float32)
    z = jnp.einsum('nhwc,c->nhw', y, w1)                                    # (N,Hf,Wf)
    A_h = jnp.asarray(bilinear_matrix(Hh, Hf))
    A_w = jnp.asarray(bilinear_matrix(Ww, Wf))
    heat = jnp.einsum('oh,nhw,pw->nop', A_h, z, A_w) + model.conv1_b[0]
    return heat[:, None, :, :]


if __name__ == "__main__":
    # Small shapes: image (16, 3, 32, 32) -> stand-in features (16, 128, 4, 4)
    # -> heatmap (16, 1, 16, 32).  Bblk = 8 images/step, grid = (2,) parallel.
    key = jax.random.PRNGKey(0)
    image = jax.random.normal(key, (16, 3, 32, 32), jnp.float32)

    model = KeypointModelPallas(heatmap_size=(16, 32), num_features=128,
                                patch=8, head_hidden=256, batch_block=8)
    forward = jax.jit(lambda img: model(img))
    heatmap = jax.block_until_ready(forward(image))

    assert heatmap.shape == (16, 1, 16, 32), heatmap.shape
    assert heatmap.dtype == jnp.float32
    assert bool(jnp.all(jnp.isfinite(heatmap)))

    ref = jax.block_until_ready(reference_forward(model, image))
    np.testing.assert_allclose(np.asarray(heatmap), np.asarray(ref),
                               rtol=0.1, atol=1e-2)
    print("KERNEL_OK")
</pallas_src>

<mosaic_0001>
module attributes {stable_mosaic.version = 11 : i64} {
  func.func @keypoint_fused_kernel(%arg0: i32, %arg1: memref<128x192xbf16, #tpu.memory_space<vmem>>, %arg2: memref<192x128xbf16, #tpu.memory_space<vmem>>, %arg3: memref<1x128xf32, #tpu.memory_space<vmem>>, %arg4: memref<9x128x128xbf16, #tpu.memory_space<vmem>>, %arg5: memref<9x128x256xbf16, #tpu.memory_space<vmem>>, %arg6: memref<1x256xf32, #tpu.memory_space<vmem>>, %arg7: memref<256x512xbf16, #tpu.memory_space<vmem>>, %arg8: memref<128x512xbf16, #tpu.memory_space<vmem>>, %arg9: memref<8x128xbf16, #tpu.memory_space<vmem>>, %arg10: memref<1x512xf32, #tpu.memory_space<vmem>>, %arg11: memref<8x512xf32, #tpu.memory_space<vmem>>) attributes {dimension_semantics = [#tpu.dimension_semantics<parallel>], iteration_bounds = array<i64: 2>, scalar_prefetch = 0 : i64, scratch_operands = 0 : i64, tpu.core_type = #tpu.core_type<tc>, window_params = [{transform_indices = @transform_0, window_bounds = array<i64: 128, 192>}, {pipeline_mode = #tpu.pipeline_mode<synchronous>, transform_indices = @transform_1, window_bounds = array<i64: 192, 128>}, {pipeline_mode = #tpu.pipeline_mode<synchronous>, transform_indices = @transform_2, window_bounds = array<i64: 1, 128>}, {pipeline_mode = #tpu.pipeline_mode<synchronous>, transform_indices = @transform_3, window_bounds = array<i64: 9, 128, 128>}, {pipeline_mode = #tpu.pipeline_mode<synchronous>, transform_indices = @transform_4, window_bounds = array<i64: 9, 128, 256>}, {pipeline_mode = #tpu.pipeline_mode<synchronous>, transform_indices = @transform_5, window_bounds = array<i64: 1, 256>}, {pipeline_mode = #tpu.pipeline_mode<synchronous>, transform_indices = @transform_6, window_bounds = array<i64: 256, 512>}, {pipeline_mode = #tpu.pipeline_mode<synchronous>, transform_indices = @transform_7, window_bounds = array<i64: 128, 512>}, {pipeline_mode = #tpu.pipeline_mode<synchronous>, transform_indices = @transform_8, window_bounds = array<i64: 8, 128>}, {pipeline_mode = #tpu.pipeline_mode<synchronous>, transform_indices = @transform_9, window_bounds = array<i64: 1, 512>}, {transform_indices = @transform_10, window_bounds = array<i64: 8, 512>}]} {
    %c0 = arith.constant 0 : index
    %c0_0 = arith.constant 0 : index
    %0 = vector.load %arg1[%c0, %c0_0] : memref<128x192xbf16, #tpu.memory_space<vmem>>, vector<128x192xbf16>
    %c0_1 = arith.constant 0 : index
    %c0_2 = arith.constant 0 : index
    %1 = vector.load %arg2[%c0_1, %c0_2] : memref<192x128xbf16, #tpu.memory_space<vmem>>, vector<192x128xbf16>
    %cst = arith.constant dense<0.000000e+00> : vector<128x128xf32>
    %2 = tpu.matmul %0, %1, %cst {dimension_numbers = #tpu.dot_dimension_numbers<[1], [0], [0], [1], [0, 0, 1, 1], [], []>} : vector<128x192xbf16>, vector<192x128xbf16>, vector<128x128xf32> -> vector<128x128xf32>
    %c0_3 = arith.constant 0 : index
    %c0_4 = arith.constant 0 : index
    %3 = vector.load %arg3[%c0_3, %c0_4] : memref<1x128xf32, #tpu.memory_space<vmem>>, vector<1x128xf32>
    %4 = vector.broadcast %3 : vector<1x128xf32> to vector<128x128xf32>
    %5 = arith.addf %2, %4 : vector<128x128xf32>
    %6 = arith.truncf %5 : vector<128x128xf32> to vector<128x128xbf16>
    %cst_5 = arith.constant 0.000000e+00 : f32
    %7 = vector.broadcast %cst_5 : f32 to vector<128x256xf32>
    %c0_6 = arith.constant 0 : index
    %c0_7 = arith.constant 0 : index
    %c0_8 = arith.constant 0 : index
    %8 = vector.load %arg4[%c0_6, %c0_7, %c0_8] : memref<9x128x128xbf16, #tpu.memory_space<vmem>>, vector<1x128x128xbf16>
    %9 = vector.shape_cast %8 : vector<1x128x128xbf16> to vector<128x128xbf16>
    %cst_9 = arith.constant dense<0.000000e+00> : vector<128x128xf32>
    %10 = tpu.matmul %9, %6, %cst_9 {dimension_numbers = #tpu.dot_dimension_numbers<[1], [0], [0], [1], [0, 0, 1, 1], [], []>} : vector<128x128xbf16>, vector<128x128xbf16>, vector<128x128xf32> -> vector<128x128xf32>
    %11 = arith.truncf %10 : vector<128x128xf32> to vector<128x128xbf16>
    %c0_10 = arith.constant 0 : index
    %c0_11 = arith.constant 0 : index
    %c0_12 = arith.constant 0 : index
    %12 = vector.load %arg5[%c0_10, %c0_11, %c0_12] : memref<9x128x256xbf16, #tpu.memory_space<vmem>>, vector<1x128x256xbf16>
    %13 = vector.shape_cast %12 : vector<1x128x256xbf16> to vector<128x256xbf16>
    %cst_13 = arith.constant dense<0.000000e+00> : vector<128x256xf32>
    %14 = tpu.matmul %11, %13, %cst_13 {dimension_numbers = #tpu.dot_dimension_numbers<[1], [0], [0], [1], [0, 0, 1, 1], [], []>} : vector<128x128xbf16>, vector<128x256xbf16>, vector<128x256xf32> -> vector<128x256xf32>
    %15 = arith.addf %7, %14 : vector<128x256xf32>
    %c1 = arith.constant 1 : index
    %c0_14 = arith.constant 0 : index
    %c0_15 = arith.constant 0 : index
    %16 = vector.load %arg4[%c1, %c0_14, %c0_15] : memref<9x128x128xbf16, #tpu.memory_space<vmem>>, vector<1x128x128xbf16>
    %17 = vector.shape_cast %16 : vector<1x128x128xbf16> to vector<128x128xbf16>
    %cst_16 = arith.constant dense<0.000000e+00> : vector<128x128xf32>
    %18 = tpu.matmul %17, %6, %cst_16 {dimension_numbers = #tpu.dot_dimension_numbers<[1], [0], [0], [1], [0, 0, 1, 1], [], []>} : vector<128x128xbf16>, vector<128x128xbf16>, vector<128x128xf32> -> vector<128x128xf32>
    %19 = arith.truncf %18 : vector<128x128xf32> to vector<128x128xbf16>
    %c1_17 = arith.constant 1 : index
    %c0_18 = arith.constant 0 : index
    %c0_19 = arith.constant 0 : index
    %20 = vector.load %arg5[%c1_17, %c0_18, %c0_19] : memref<9x128x256xbf16, #tpu.memory_space<vmem>>, vector<1x128x256xbf16>
    %21 = vector.shape_cast %20 : vector<1x128x256xbf16> to vector<128x256xbf16>
    %cst_20 = arith.constant dense<0.000000e+00> : vector<128x256xf32>
    %22 = tpu.matmul %19, %21, %cst_20 {dimension_numbers = #tpu.dot_dimension_numbers<[1], [0], [0], [1], [0, 0, 1, 1], [], []>} : vector<128x128xbf16>, vector<128x256xbf16>, vector<128x256xf32> -> vector<128x256xf32>
    %23 = arith.addf %15, %22 : vector<128x256xf32>
    %c2 = arith.constant 2 : index
    %c0_21 = arith.constant 0 : index
    %c0_22 = arith.constant 0 : index
    %24 = vector.load %arg4[%c2, %c0_21, %c0_22] : memref<9x128x128xbf16, #tpu.memory_space<vmem>>, vector<1x128x128xbf16>
    %25 = vector.shape_cast %24 : vector<1x128x128xbf16> to vector<128x128xbf16>
    %cst_23 = arith.constant dense<0.000000e+00> : vector<128x128xf32>
    %26 = tpu.matmul %25, %6, %cst_23 {dimension_numbers = #tpu.dot_dimension_numbers<[1], [0], [0], [1], [0, 0, 1, 1], [], []>} : vector<128x128xbf16>, vector<128x128xbf16>, vector<128x128xf32> -> vector<128x128xf32>
    %27 = arith.truncf %26 : vector<128x128xf32> to vector<128x128xbf16>
    %c2_24 = arith.constant 2 : index
    %c0_25 = arith.constant 0 : index
    %c0_26 = arith.constant 0 : index
    %28 = vector.load %arg5[%c2_24, %c0_25, %c0_26] : memref<9x128x256xbf16, #tpu.memory_space<vmem>>, vector<1x128x256xbf16>
    %29 = vector.shape_cast %28 : vector<1x128x256xbf16> to vector<128x256xbf16>
    %cst_27 = arith.constant dense<0.000000e+00> : vector<128x256xf32>
    %30 = tpu.matmul %27, %29, %cst_27 {dimension_numbers = #tpu.dot_dimension_numbers<[1], [0], [0], [1], [0, 0, 1, 1], [], []>} : vector<128x128xbf16>, vector<128x256xbf16>, vector<128x256xf32> -> vector<128x256xf32>
    %31 = arith.addf %23, %30 : vector<128x256xf32>
    %c3 = arith.constant 3 : index
    %c0_28 = arith.constant 0 : index
    %c0_29 = arith.constant 0 : index
    %32 = vector.load %arg4[%c3, %c0_28, %c0_29] : memref<9x128x128xbf16, #tpu.memory_space<vmem>>, vector<1x128x128xbf16>
    %33 = vector.shape_cast %32 : vector<1x128x128xbf16> to vector<128x128xbf16>
    %cst_30 = arith.constant dense<0.000000e+00> : vector<128x128xf32>
    %34 = tpu.matmul %33, %6, %cst_30 {dimension_numbers = #tpu.dot_dimension_numbers<[1], [0], [0], [1], [0, 0, 1, 1], [], []>} : vector<128x128xbf16>, vector<128x128xbf16>, vector<128x128xf32> -> vector<128x128xf32>
    %35 = arith.truncf %34 : vector<128x128xf32> to vector<128x128xbf16>
    %c3_31 = arith.constant 3 : index
    %c0_32 = arith.constant 0 : index
    %c0_33 = arith.constant 0 : index
    %36 = vector.load %arg5[%c3_31, %c0_32, %c0_33] : memref<9x128x256xbf16, #tpu.memory_space<vmem>>, vector<1x128x256xbf16>
    %37 = vector.shape_cast %36 : vector<1x128x256xbf16> to vector<128x256xbf16>
    %cst_34 = arith.constant dense<0.000000e+00> : vector<128x256xf32>
    %38 = tpu.matmul %35, %37, %cst_34 {dimension_numbers = #tpu.dot_dimension_numbers<[1], [0], [0], [1], [0, 0, 1, 1], [], []>} : vector<128x128xbf16>, vector<128x256xbf16>, vector<128x256xf32> -> vector<128x256xf32>
    %39 = arith.addf %31, %38 : vector<128x256xf32>
    %c4 = arith.constant 4 : index
    %c0_35 = arith.constant 0 : index
    %c0_36 = arith.constant 0 : index
    %40 = vector.load %arg4[%c4, %c0_35, %c0_36] : memref<9x128x128xbf16, #tpu.memory_space<vmem>>, vector<1x128x128xbf16>
    %41 = vector.shape_cast %40 : vector<1x128x128xbf16> to vector<128x128xbf16>
    %cst_37 = arith.constant dense<0.000000e+00> : vector<128x128xf32>
    %42 = tpu.matmul %41, %6, %cst_37 {dimension_numbers = #tpu.dot_dimension_numbers<[1], [0], [0], [1], [0, 0, 1, 1], [], []>} : vector<128x128xbf16>, vector<128x128xbf16>, vector<128x128xf32> -> vector<128x128xf32>
    %43 = arith.truncf %42 : vector<128x128xf32> to vector<128x128xbf16>
    %c4_38 = arith.constant 4 : index
    %c0_39 = arith.constant 0 : index
    %c0_40 = arith.constant 0 : index
    %44 = vector.load %arg5[%c4_38, %c0_39, %c0_40] : memref<9x128x256xbf16, #tpu.memory_space<vmem>>, vector<1x128x256xbf16>
    %45 = vector.shape_cast %44 : vector<1x128x256xbf16> to vector<128x256xbf16>
    %cst_41 = arith.constant dense<0.000000e+00> : vector<128x256xf32>
    %46 = tpu.matmul %43, %45, %cst_41 {dimension_numbers = #tpu.dot_dimension_numbers<[1], [0], [0], [1], [0, 0, 1, 1], [], []>} : vector<128x128xbf16>, vector<128x256xbf16>, vector<128x256xf32> -> vector<128x256xf32>
    %47 = arith.addf %39, %46 : vector<128x256xf32>
    %c5 = arith.constant 5 : index
    %c0_42 = arith.constant 0 : index
    %c0_43 = arith.constant 0 : index
    %48 = vector.load %arg4[%c5, %c0_42, %c0_43] : memref<9x128x128xbf16, #tpu.memory_space<vmem>>, vector<1x128x128xbf16>
    %49 = vector.shape_cast %48 : vector<1x128x128xbf16> to vector<128x128xbf16>
    %cst_44 = arith.constant dense<0.000000e+00> : vector<128x128xf32>
    %50 = tpu.matmul %49, %6, %cst_44 {dimension_numbers = #tpu.dot_dimension_numbers<[1], [0], [0], [1], [0, 0, 1, 1], [], []>} : vector<128x128xbf16>, vector<128x128xbf16>, vector<128x128xf32> -> vector<128x128xf32>
    %51 = arith.truncf %50 : vector<128x128xf32> to vector<128x128xbf16>
    %c5_45 = arith.constant 5 : index
    %c0_46 = arith.constant 0 : index
    %c0_47 = arith.constant 0 : index
    %52 = vector.load %arg5[%c5_45, %c0_46, %c0_47] : memref<9x128x256xbf16, #tpu.memory_space<vmem>>, vector<1x128x256xbf16>
    %53 = vector.shape_cast %52 : vector<1x128x256xbf16> to vector<128x256xbf16>
    %cst_48 = arith.constant dense<0.000000e+00> : vector<128x256xf32>
    %54 = tpu.matmul %51, %53, %cst_48 {dimension_numbers = #tpu.dot_dimension_numbers<[1], [0], [0], [1], [0, 0, 1, 1], [], []>} : vector<128x128xbf16>, vector<128x256xbf16>, vector<128x256xf32> -> vector<128x256xf32>
    %55 = arith.addf %47, %54 : vector<128x256xf32>
    %c6 = arith.constant 6 : index
    %c0_49 = arith.constant 0 : index
    %c0_50 = arith.constant 0 : index
    %56 = vector.load %arg4[%c6, %c0_49, %c0_50] : memref<9x128x128xbf16, #tpu.memory_space<vmem>>, vector<1x128x128xbf16>
    %57 = vector.shape_cast %56 : vector<1x128x128xbf16> to vector<128x128xbf16>
    %cst_51 = arith.constant dense<0.000000e+00> : vector<128x128xf32>
    %58 = tpu.matmul %57, %6, %cst_51 {dimension_numbers = #tpu.dot_dimension_numbers<[1], [0], [0], [1], [0, 0, 1, 1], [], []>} : vector<128x128xbf16>, vector<128x128xbf16>, vector<128x128xf32> -> vector<128x128xf32>
    %59 = arith.truncf %58 : vector<128x128xf32> to vector<128x128xbf16>
    %c6_52 = arith.constant 6 : index
    %c0_53 = arith.constant 0 : index
    %c0_54 = arith.constant 0 : index
    %60 = vector.load %arg5[%c6_52, %c0_53, %c0_54] : memref<9x128x256xbf16, #tpu.memory_space<vmem>>, vector<1x128x256xbf16>
    %61 = vector.shape_cast %60 : vector<1x128x256xbf16> to vector<128x256xbf16>
    %cst_55 = arith.constant dense<0.000000e+00> : vector<128x256xf32>
    %62 = tpu.matmul %59, %61, %cst_55 {dimension_numbers = #tpu.dot_dimension_numbers<[1], [0], [0], [1], [0, 0, 1, 1], [], []>} : vector<128x128xbf16>, vector<128x256xbf16>, vector<128x256xf32> -> vector<128x256xf32>
    %63 = arith.addf %55, %62 : vector<128x256xf32>
    %c7 = arith.constant 7 : index
    %c0_56 = arith.constant 0 : index
    %c0_57 = arith.constant 0 : index
    %64 = vector.load %arg4[%c7, %c0_56, %c0_57] : memref<9x128x128xbf16, #tpu.memory_space<vmem>>, vector<1x128x128xbf16>
    %65 = vector.shape_cast %64 : vector<1x128x128xbf16> to vector<128x128xbf16>
    %cst_58 = arith.constant dense<0.000000e+00> : vector<128x128xf32>
    %66 = tpu.matmul %65, %6, %cst_58 {dimension_numbers = #tpu.dot_dimension_numbers<[1], [0], [0], [1], [0, 0, 1, 1], [], []>} : vector<128x128xbf16>, vector<128x128xbf16>, vector<128x128xf32> -> vector<128x128xf32>
    %67 = arith.truncf %66 : vector<128x128xf32> to vector<128x128xbf16>
    %c7_59 = arith.constant 7 : index
    %c0_60 = arith.constant 0 : index
    %c0_61 = arith.constant 0 : index
    %68 = vector.load %arg5[%c7_59, %c0_60, %c0_61] : memref<9x128x256xbf16, #tpu.memory_space<vmem>>, vector<1x128x256xbf16>
    %69 = vector.shape_cast %68 : vector<1x128x256xbf16> to vector<128x256xbf16>
    %cst_62 = arith.constant dense<0.000000e+00> : vector<128x256xf32>
    %70 = tpu.matmul %67, %69, %cst_62 {dimension_numbers = #tpu.dot_dimension_numbers<[1], [0], [0], [1], [0, 0, 1, 1], [], []>} : vector<128x128xbf16>, vector<128x256xbf16>, vector<128x256xf32> -> vector<128x256xf32>
    %71 = arith.addf %63, %70 : vector<128x256xf32>
    %c8 = arith.constant 8 : index
    %c0_63 = arith.constant 0 : index
    %c0_64 = arith.constant 0 : index
    %72 = vector.load %arg4[%c8, %c0_63, %c0_64] : memref<9x128x128xbf16, #tpu.memory_space<vmem>>, vector<1x128x128xbf16>
    %73 = vector.shape_cast %72 : vector<1x128x128xbf16> to vector<128x128xbf16>
    %cst_65 = arith.constant dense<0.000000e+00> : vector<128x128xf32>
    %74 = tpu.matmul %73, %6, %cst_65 {dimension_numbers = #tpu.dot_dimension_numbers<[1], [0], [0], [1], [0, 0, 1, 1], [], []>} : vector<128x128xbf16>, vector<128x128xbf16>, vector<128x128xf32> -> vector<128x128xf32>
    %75 = arith.truncf %74 : vector<128x128xf32> to vector<128x128xbf16>
    %c8_66 = arith.constant 8 : index
    %c0_67 = arith.constant 0 : index
    %c0_68 = arith.constant 0 : index
    %76 = vector.load %arg5[%c8_66, %c0_67, %c0_68] : memref<9x128x256xbf16, #tpu.memory_space<vmem>>, vector<1x128x256xbf16>
    %77 = vector.shape_cast %76 : vector<1x128x256xbf16> to vector<128x256xbf16>
    %cst_69 = arith.constant dense<0.000000e+00> : vector<128x256xf32>
    %78 = tpu.matmul %75, %77, %cst_69 {dimension_numbers = #tpu.dot_dimension_numbers<[1], [0], [0], [1], [0, 0, 1, 1], [], []>} : vector<128x128xbf16>, vector<128x256xbf16>, vector<128x256xf32> -> vector<128x256xf32>
    %79 = arith.addf %71, %78 : vector<128x256xf32>
    %c0_70 = arith.constant 0 : index
    %c0_71 = arith.constant 0 : index
    %80 = vector.load %arg6[%c0_70, %c0_71] : memref<1x256xf32, #tpu.memory_space<vmem>>, vector<1x256xf32>
    %81 = vector.broadcast %80 : vector<1x256xf32> to vector<128x256xf32>
    %82 = arith.addf %79, %81 : vector<128x256xf32>
    %cst_72 = arith.constant 0.000000e+00 : f32
    %83 = vector.broadcast %cst_72 : f32 to vector<128x256xf32>
    %84 = arith.maximumf %82, %83 : vector<128x256xf32>
    %85 = arith.truncf %84 : vector<128x256xf32> to vector<128x256xbf16>
    %c0_73 = arith.constant 0 : index
    %c0_74 = arith.constant 0 : index
    %86 = vector.load %arg7[%c0_73, %c0_74] : memref<256x512xbf16, #tpu.memory_space<vmem>>, vector<256x512xbf16>
    %cst_75 = arith.constant dense<0.000000e+00> : vector<128x512xf32>
    %87 = tpu.matmul %85, %86, %cst_75 {dimension_numbers = #tpu.dot_dimension_numbers<[1], [0], [0], [1], [0, 0, 1, 1], [], []>} : vector<128x256xbf16>, vector<256x512xbf16>, vector<128x512xf32> -> vector<128x512xf32>
    %88 = arith.truncf %87 : vector<128x512xf32> to vector<128x512xbf16>
    %c0_76 = arith.constant 0 : index
    %c0_77 = arith.constant 0 : index
    %89 = vector.load %arg8[%c0_76, %c0_77] : memref<128x512xbf16, #tpu.memory_space<vmem>>, vector<128x512xbf16>
    %90 = arith.mulf %88, %89 : vector<128x512xbf16>
    %c0_78 = arith.constant 0 : index
    %c0_79 = arith.constant 0 : index
    %91 = vector.load %arg9[%c0_78, %c0_79] : memref<8x128xbf16, #tpu.memory_space<vmem>>, vector<8x128xbf16>
    %cst_80 = arith.constant dense<0.000000e+00> : vector<8x512xf32>
    %92 = tpu.matmul %91, %90, %cst_80 {dimension_numbers = #tpu.dot_dimension_numbers<[1], [0], [0], [1], [0, 0, 1, 1], [], []>} : vector<8x128xbf16>, vector<128x512xbf16>, vector<8x512xf32> -> vector<8x512xf32>
    %c0_81 = arith.constant 0 : index
    %c0_82 = arith.constant 0 : index
    %93 = vector.load %arg10[%c0_81, %c0_82] : memref<1x512xf32, #tpu.memory_space<vmem>>, vector<1x512xf32>
    %94 = vector.broadcast %93 : vector<1x512xf32> to vector<8x512xf32>
    %95 = arith.addf %92, %94 : vector<8x512xf32>
    %c0_83 = arith.constant 0 : index
    %c0_84 = arith.constant 0 : index
    %96 = vector.load %arg11[%c0_83, %c0_84] : memref<8x512xf32, #tpu.memory_space<vmem>>, vector<8x512xf32>
    tpu.vector_store %arg11[%c0_83, %c0_84], %95 {strides = array<i32>} : memref<8x512xf32, #tpu.memory_space<vmem>>, vector<8x512xf32>,
    return
  }
  func.func @transform_0(%arg0: i32) -> (i32, i32) {
    %c0_i32 = arith.constant 0 : i32
    %c0_i32_0 = arith.constant 0 : i32
    return %arg0, %c0_i32 : i32, i32
  }
  func.func @transform_1(%arg0: i32) -> (i32, i32) {
    %c0_i32 = arith.constant 0 : i32
    %c0_i32_0 = arith.constant 0 : i32
    %c0_i32_1 = arith.constant 0 : i32
    return %c0_i32, %c0_i32_0 : i32, i32
  }
  func.func @transform_2(%arg0: i32) -> (i32, i32) {
    %c0_i32 = arith.constant 0 : i32
    %c0_i32_0 = arith.constant 0 : i32
    %c0_i32_1 = arith.constant 0 : i32
    return %c0_i32, %c0_i32_0 : i32, i32
  }
  func.func @transform_3(%arg0: i32) -> (i32, i32, i32) {
    %c0_i32 = arith.constant 0 : i32
    %c0_i32_0 = arith.constant 0 : i32
    %c0_i32_1 = arith.constant 0 : i32
    %c0_i32_2 = arith.constant 0 : i32
    return %c0_i32, %c0_i32_0, %c0_i32_1 : i32, i32, i32
  }
  func.func @transform_4(%arg0: i32) -> (i32, i32, i32) {
    %c0_i32 = arith.constant 0 : i32
    %c0_i32_0 = arith.constant 0 : i32
    %c0_i32_1 = arith.constant 0 : i32
    %c0_i32_2 = arith.constant 0 : i32
    return %c0_i32, %c0_i32_0, %c0_i32_1 : i32, i32, i32
  }
  func.func @transform_5(%arg0: i32) -> (i32, i32) {
    %c0_i32 = arith.constant 0 : i32
    %c0_i32_0 = arith.constant 0 : i32
    %c0_i32_1 = arith.constant 0 : i32
    return %c0_i32, %c0_i32_0 : i32, i32
  }
  func.func @transform_6(%arg0: i32) -> (i32, i32) {
    %c0_i32 = arith.constant 0 : i32
    %c0_i32_0 = arith.constant 0 : i32
    %c0_i32_1 = arith.constant 0 : i32
    return %c0_i32, %c0_i32_0 : i32, i32
  }
  func.func @transform_7(%arg0: i32) -> (i32, i32) {
    %c0_i32 = arith.constant 0 : i32
    %c0_i32_0 = arith.constant 0 : i32
    %c0_i32_1 = arith.constant 0 : i32
    return %c0_i32, %c0_i32_0 : i32, i32
  }
  func.func @transform_8(%arg0: i32) -> (i32, i32) {
    %c0_i32 = arith.constant 0 : i32
    %c0_i32_0 = arith.constant 0 : i32
    %c0_i32_1 = arith.constant 0 : i32
    return %c0_i32, %c0_i32_0 : i32, i32
  }
  func.func @transform_9(%arg0: i32) -> (i32, i32) {
    %c0_i32 = arith.constant 0 : i32
    %c0_i32_0 = arith.constant 0 : i32
    %c0_i32_1 = arith.constant 0 : i32
    return %c0_i32, %c0_i32_0 : i32, i32
  }
  func.func @transform_10(%arg0: i32) -> (i32, i32) {
    %c0_i32 = arith.constant 0 : i32
    %c0_i32_0 = arith.constant 0 : i32
    return %arg0, %c0_i32 : i32, i32
  }
}

</mosaic_0001>

<llo_original>
// kernel: _lambda_.1
$region0: #{_lambda_.1}
  #allocation0 [shape = 'u32[]', space=smem, size = 0x4, offset = 0x4, fixed_abs, tag = 'smem constant byte address 0x4 - core index']
  #allocation1 [shape = 'u32[144,128]{1,0:T(1,128)}', space=vmem, size = 0x12000, scoped, tag = 'internal scratch']
  %s0 = inlined_call_operand.vmem [shape: bf16[256,192], index: 0, kind: input, shape index: {}]
  %s1 = inlined_call_operand.vmem [shape: bf16[192,128], index: 1, kind: input, shape index: {}]
  %s2 = inlined_call_operand.vmem [shape: f32[1,128], index: 2, kind: input, shape index: {}]
  %s3 = inlined_call_operand.vmem [shape: bf16[9,128,128], index: 3, kind: input, shape index: {}]
  %s4 = inlined_call_operand.vmem [shape: bf16[9,128,256], index: 4, kind: input, shape index: {}]
  %s5 = inlined_call_operand.vmem [shape: f32[1,256], index: 5, kind: input, shape index: {}]
  %s6 = inlined_call_operand.vmem [shape: bf16[256,512], index: 6, kind: input, shape index: {}]
  %s7 = inlined_call_operand.vmem [shape: bf16[128,512], index: 7, kind: input, shape index: {}]
  %s8 = inlined_call_operand.vmem [shape: bf16[8,128], index: 8, kind: input, shape index: {}]
  %s9 = inlined_call_operand.vmem [shape: f32[1,512], index: 9, kind: input, shape index: {}]
  %s10 = inlined_call_operand.vmem [shape: f32[16,512], index: 10, kind: output, shape index: {}]
  %s11 = sld [smem:[#allocation0]]
  $region73: #{_lambda_.1} parent=0
    _
  %s13 = ssub.s32 1, %s11
  %s14 = scalar_select 0, %s13, %s11
  loop: start=0, step=1, limit=4
  $region2: #{_lambda_.1} parent=0 // loop_pre_header
    _
  $region3: #{_lambda_.1} parent=0 // loop_header
    %s16 = sphi 0, %s20
    %p17 = scmp.ge.s32.totalorder %s16, 4
    %s26 = sphi 0, %s28
    %s29 = sphi 0, %s26
    %s30 = sphi 0, %s29
    %s46 = sphi 0, %s30
    %s50 = sphi 0, %s50
    %s52 = sphi 0, %s50
    %s53 = sphi 0, %s52
    %s67 = sphi 0, %s53
    %s71 = sphi 0, %s71
    %s73 = sphi 0, %s71
    %s74 = sphi 0, %s73
    %s88 = sphi 0, %s74
    %s92 = sphi 0, %s92
    %s94 = sphi 0, %s92
    %s95 = sphi 0, %s94
    %s109 = sphi 0, %s95
    %s113 = sphi 0, %s113
    %s115 = sphi 0, %s113
    %s116 = sphi 0, %s115
    %s130 = sphi 0, %s116
    %s134 = sphi 0, %s134
    %s136 = sphi 0, %s134
    %s137 = sphi 0, %s136
    %s151 = sphi 0, %s137
    %s155 = sphi 0, %s155
    %s157 = sphi 0, %s155
    %s158 = sphi 0, %s157
    %s172 = sphi 0, %s158
    %s176 = sphi 0, %s176
    %s178 = sphi 0, %s176
    %s179 = sphi 0, %s178
    %s193 = sphi 0, %s179
    %s197 = sphi 0, %s197
    %s199 = sphi 0, %s197
    %s200 = sphi 0, %s199
    %s214 = sphi 0, %s200
    %s218 = sphi 0, %s218
    %s220 = sphi 0, %s218
    %s221 = sphi 0, %s220
    %s235 = sphi 0, %s221
    %s241 = sphi 0, %s243
    %s244 = sphi 0, %s241
    %s245 = sphi 0, %s244
    %s261 = sphi 0, %s245
  $region4: #{_lambda_.1} parent=0 // loop_header_branch
    %19 = sbr.rel (%p17) target = $region8
  $region5: #{_lambda_.1} parent=0 // loop_body
    %s21 = ssub.s32 %s16, 1
    %s22 = ssub.s32 %s16, 2
    %s23 = sadd.s32 %s16, 1
    %s24 = ssub.s32 %s16, %s23
    %p25 = scmp.eq.s32.totalorder %s24, 0
    %s27 = sadd.s32 %s26, 1
    %s28 = scalar_select %p25, %s26, %s27
    %p31 = pneg %p25
    %p32 = scmp.eq.s32.totalorder %s16, 1
    %p33 = por %p31, %p32
    %p34 = scmp.ne.s32.totalorder %s26, %s29
    %p35 = scmp.eq.s32.totalorder %s16, 0
    %p36 = por %p34, %p35
    %p37 = scmp.ne.s32.totalorder %s26, %s29
    %p38 = scmp.eq.s32.totalorder %s21, 1
    %p39 = por %p37, %p38
    %p40 = scmp.ne.s32.totalorder %s29, %s30
    %p41 = scmp.eq.s32.totalorder %s21, 0
    %p42 = por %p40, %p41
    %p43 = scmp.ne.s32.totalorder %s29, %s30
    %p44 = scmp.eq.s32.totalorder %s22, 1
    %p45 = por %p43, %p44
    %p47 = scmp.ne.s32.totalorder %s30, %s46
    %p48 = scmp.eq.s32.totalorder %s22, 0
    %p49 = por %p47, %p48
    %s51 = sadd.s32 %s50, 1
    %p54 = scmp.eq.s32.totalorder %s16, 1
    %p55 = scmp.ne.s32.totalorder %s50, %s52
    %p56 = scmp.eq.s32.totalorder %s16, 0
    %p57 = por %p55, %p56
    %p58 = scmp.ne.s32.totalorder %s50, %s52
    %p59 = scmp.eq.s32.totalorder %s21, 1
    %p60 = por %p58, %p59
    %p61 = scmp.ne.s32.totalorder %s52, %s53
    %p62 = scmp.eq.s32.totalorder %s21, 0
    %p63 = por %p61, %p62
    %p64 = scmp.ne.s32.totalorder %s52, %s53
    %p65 = scmp.eq.s32.totalorder %s22, 1
    %p66 = por %p64, %p65
    %p68 = scmp.ne.s32.totalorder %s53, %s67
    %p69 = scmp.eq.s32.totalorder %s22, 0
    %p70 = por %p68, %p69
    %s72 = sadd.s32 %s71, 1
    %p75 = scmp.eq.s32.totalorder %s16, 1
    %p76 = scmp.ne.s32.totalorder %s71, %s73
    %p77 = scmp.eq.s32.totalorder %s16, 0
    %p78 = por %p76, %p77
    %p79 = scmp.ne.s32.totalorder %s71, %s73
    %p80 = scmp.eq.s32.totalorder %s21, 1
    %p81 = por %p79, %p80
    %p82 = scmp.ne.s32.totalorder %s73, %s74
    %p83 = scmp.eq.s32.totalorder %s21, 0
    %p84 = por %p82, %p83
    %p85 = scmp.ne.s32.totalorder %s73, %s74
    %p86 = scmp.eq.s32.totalorder %s22, 1
    %p87 = por %p85, %p86
    %p89 = scmp.ne.s32.totalorder %s74, %s88
    %p90 = scmp.eq.s32.totalorder %s22, 0
    %p91 = por %p89, %p90
    %s93 = sadd.s32 %s92, 1
    %p96 = scmp.eq.s32.totalorder %s16, 1
    %p97 = scmp.ne.s32.totalorder %s92, %s94
    %p98 = scmp.eq.s32.totalorder %s16, 0
    %p99 = por %p97, %p98
    %p100 = scmp.ne.s32.totalorder %s92, %s94
    %p101 = scmp.eq.s32.totalorder %s21, 1
    %p102 = por %p100, %p101
    %p103 = scmp.ne.s32.totalorder %s94, %s95
    %p104 = scmp.eq.s32.totalorder %s21, 0
    %p105 = por %p103, %p104
    %p106 = scmp.ne.s32.totalorder %s94, %s95
    %p107 = scmp.eq.s32.totalorder %s22, 1
    %p108 = por %p106, %p107
    %p110 = scmp.ne.s32.totalorder %s95, %s109
    %p111 = scmp.eq.s32.totalorder %s22, 0
    %p112 = por %p110, %p111
    %s114 = sadd.s32 %s113, 1
    %p117 = scmp.eq.s32.totalorder %s16, 1
    %p118 = scmp.ne.s32.totalorder %s113, %s115
    %p119 = scmp.eq.s32.totalorder %s16, 0
    %p120 = por %p118, %p119
    %p121 = scmp.ne.s32.totalorder %s113, %s115
    %p122 = scmp.eq.s32.totalorder %s21, 1
    %p123 = por %p121, %p122
    %p124 = scmp.ne.s32.totalorder %s115, %s116
    %p125 = scmp.eq.s32.totalorder %s21, 0
    %p126 = por %p124, %p125
    %p127 = scmp.ne.s32.totalorder %s115, %s116
    %p128 = scmp.eq.s32.totalorder %s22, 1
    %p129 = por %p127, %p128
    %p131 = scmp.ne.s32.totalorder %s116, %s130
    %p132 = scmp.eq.s32.totalorder %s22, 0
    %p133 = por %p131, %p132
    %s135 = sadd.s32 %s134, 1
    %p138 = scmp.eq.s32.totalorder %s16, 1
    %p139 = scmp.ne.s32.totalorder %s134, %s136
    %p140 = scmp.eq.s32.totalorder %s16, 0
    %p141 = por %p139, %p140
    %p142 = scmp.ne.s32.totalorder %s134, %s136
    %p143 = scmp.eq.s32.totalorder %s21, 1
    %p144 = por %p142, %p143
    %p145 = scmp.ne.s32.totalorder %s136, %s137
    %p146 = scmp.eq.s32.totalorder %s21, 0
    %p147 = por %p145, %p146
    %p148 = scmp.ne.s32.totalorder %s136, %s137
    %p149 = scmp.eq.s32.totalorder %s22, 1
    %p150 = por %p148, %p149
    %p152 = scmp.ne.s32.totalorder %s137, %s151
    %p153 = scmp.eq.s32.totalorder %s22, 0
    %p154 = por %p152, %p153
    %s156 = sadd.s32 %s155, 1
    %p159 = scmp.eq.s32.totalorder %s16, 1
    %p160 = scmp.ne.s32.totalorder %s155, %s157
    %p161 = scmp.eq.s32.totalorder %s16, 0
    %p162 = por %p160, %p161
    %p163 = scmp.ne.s32.totalorder %s155, %s157
    %p164 = scmp.eq.s32.totalorder %s21, 1
    %p165 = por %p163, %p164
    %p166 = scmp.ne.s32.totalorder %s157, %s158
    %p167 = scmp.eq.s32.totalorder %s21, 0
    %p168 = por %p166, %p167
    %p169 = scmp.ne.s32.totalorder %s157, %s158
    %p170 = scmp.eq.s32.totalorder %s22, 1
    %p171 = por %p169, %p170
    %p173 = scmp.ne.s32.totalorder %s158, %s172
    %p174 = scmp.eq.s32.totalorder %s22, 0
    %p175 = por %p173, %p174
    %s177 = sadd.s32 %s176, 1
    %p180 = scmp.eq.s32.totalorder %s16, 1
    %p181 = scmp.ne.s32.totalorder %s176, %s178
    %p182 = scmp.eq.s32.totalorder %s16, 0
    %p183 = por %p181, %p182
    %p184 = scmp.ne.s32.totalorder %s176, %s178
    %p185 = scmp.eq.s32.totalorder %s21, 1
    %p186 = por %p184, %p185
    %p187 = scmp.ne.s32.totalorder %s178, %s179
    %p188 = scmp.eq.s32.totalorder %s21, 0
    %p189 = por %p187, %p188
    %p190 = scmp.ne.s32.totalorder %s178, %s179
    %p191 = scmp.eq.s32.totalorder %s22, 1
    %p192 = por %p190, %p191
    %p194 = scmp.ne.s32.totalorder %s179, %s193
    %p195 = scmp.eq.s32.totalorder %s22, 0
    %p196 = por %p194, %p195
    %s198 = sadd.s32 %s197, 1
    %p201 = scmp.eq.s32.totalorder %s16, 1
    %p202 = scmp.ne.s32.totalorder %s197, %s199
    %p203 = scmp.eq.s32.totalorder %s16, 0
    %p204 = por %p202, %p203
    %p205 = scmp.ne.s32.totalorder %s197, %s199
    %p206 = scmp.eq.s32.totalorder %s21, 1
    %p207 = por %p205, %p206
    %p208 = scmp.ne.s32.totalorder %s199, %s200
    %p209 = scmp.eq.s32.totalorder %s21, 0
    %p210 = por %p208, %p209
    %p211 = scmp.ne.s32.totalorder %s199, %s200
    %p212 = scmp.eq.s32.totalorder %s22, 1
    %p213 = por %p211, %p212
    %p215 = scmp.ne.s32.totalorder %s200, %s214
    %p216 = scmp.eq.s32.totalorder %s22, 0
    %p217 = por %p215, %p216
    %s219 = sadd.s32 %s218, 1
    %p222 = scmp.eq.s32.totalorder %s16, 1
    %p223 = scmp.ne.s32.totalorder %s218, %s220
    %p224 = scmp.eq.s32.totalorder %s16, 0
    %p225 = por %p223, %p224
    %p226 = scmp.ne.s32.totalorder %s218, %s220
    %p227 = scmp.eq.s32.totalorder %s21, 1
    %p228 = por %p226, %p227
    %p229 = scmp.ne.s32.totalorder %s220, %s221
    %p230 = scmp.eq.s32.totalorder %s21, 0
    %p231 = por %p229, %p230
    %p232 = scmp.ne.s32.totalorder %s220, %s221
    %p233 = scmp.eq.s32.totalorder %s22, 1
    %p234 = por %p232, %p233
    %p236 = scmp.ne.s32.totalorder %s221, %s235
    %p237 = scmp.eq.s32.totalorder %s22, 0
    %p238 = por %p236, %p237
    %s239 = ssub.s32 %s16, %s23
    %p240 = scmp.eq.s32.totalorder %s239, 0
    %s242 = sadd.s32 %s241, 1
    %s243 = scalar_select %p240, %s241, %s242
    %p246 = pneg %p240
    %p247 = scmp.eq.s32.totalorder %s16, 1
    %p248 = por %p246, %p247
    %p249 = scmp.ne.s32.totalorder %s241, %s244
    %p250 = scmp.eq.s32.totalorder %s16, 0
    %p251 = por %p249, %p250
    %p252 = scmp.ne.s32.totalorder %s241, %s244
    %p253 = scmp.eq.s32.totalorder %s21, 1
    %p254 = por %p252, %p253
    %p255 = scmp.ne.s32.totalorder %s244, %s245
    %p256 = scmp.eq.s32.totalorder %s21, 0
    %p257 = por %p255, %p256
    %p258 = scmp.ne.s32.totalorder %s244, %s245
    %p259 = scmp.eq.s32.totalorder %s22, 1
    %p260 = por %p258, %p259
    %p262 = scmp.ne.s32.totalorder %s245, %s261
    %p263 = scmp.eq.s32.totalorder %s22, 0
    %p264 = por %p262, %p263
    %p265 = scmp.le.s32.totalorder 1, %s16
    %p266 = scmp.lt.s32.totalorder %s16, 3
    %p267 = pnand %p265, %p266
    %p268 = pneg %p267
    // Predicated region
    $region9: #{_lambda_.1} parent=5 // pred_check
      _
    $region10: #{_lambda_.1} parent=5 // pred_check_branch
      %270 = sbr.rel (%p267) target = $region12
    $region11: #{_lambda_.1} parent=5 // pred_region
      %s271 = ssub.s32 %s16, 1
      // Predicated region
      $region13: #{_lambda_.1} parent=11 // pred_check
        %p272 = pneg %p63
      $region14: #{_lambda_.1} parent=11 // pred_check_branch
        %274 = sbr.rel (%p272) target = $region16
      $region15: #{_lambda_.1} parent=11 // pred_region
        _
      $region16: #{_lambda_.1} parent=11 // pred_fallthru
        _
      // Predicated region
      $region17: #{_lambda_.1} parent=11 // pred_check
        %p275 = pneg %p84
      $region18: #{_lambda_.1} parent=11 // pred_check_branch
        %277 = sbr.rel (%p275) target = $region20
      $region19: #{_lambda_.1} parent=11 // pred_region
        _
      $region20: #{_lambda_.1} parent=11 // pred_fallthru
        _
      // Predicated region
      $region21: #{_lambda_.1} parent=11 // pred_check
        %p278 = pneg %p105
      $region22: #{_lambda_.1} parent=11 // pred_check_branch
        %280 = sbr.rel (%p278) target = $region24
      $region23: #{_lambda_.1} parent=11 // pred_region
        _
      $region24: #{_lambda_.1} parent=11 // pred_fallthru
        _
      // Predicated region
      $region25: #{_lambda_.1} parent=11 // pred_check
        %p281 = pneg %p126
      $region26: #{_lambda_.1} parent=11 // pred_check_branch
        %283 = sbr.rel (%p281) target = $region28
      $region27: #{_lambda_.1} parent=11 // pred_region
        _
      $region28: #{_lambda_.1} parent=11 // pred_fallthru
        _
      // Predicated region
      $region29: #{_lambda_.1} parent=11 // pred_check
        %p284 = pneg %p147
      $region30: #{_lambda_.1} parent=11 // pred_check_branch
        %286 = sbr.rel (%p284) target = $region32
      $region31: #{_lambda_.1} parent=11 // pred_region
        _
      $region32: #{_lambda_.1} parent=11 // pred_fallthru
        _
      // Predicated region
      $region33: #{_lambda_.1} parent=11 // pred_check
        %p287 = pneg %p168
      $region34: #{_lambda_.1} parent=11 // pred_check_branch
        %289 = sbr.rel (%p287) target = $region36
      $region35: #{_lambda_.1} parent=11 // pred_region
        _
      $region36: #{_lambda_.1} parent=11 // pred_fallthru
        _
      // Predicated region
      $region37: #{_lambda_.1} parent=11 // pred_check
        %p290 = pneg %p189
      $region38: #{_lambda_.1} parent=11 // pred_check_branch
        %292 = sbr.rel (%p290) target = $region40
      $region39: #{_lambda_.1} parent=11 // pred_region
        _
      $region40: #{_lambda_.1} parent=11 // pred_fallthru
        _
      // Predicated region
      $region41: #{_lambda_.1} parent=11 // pred_check
        %p293 = pneg %p210
      $region42: #{_lambda_.1} parent=11 // pred_check_branch
        %295 = sbr.rel (%p293) target = $region44
      $region43: #{_lambda_.1} parent=11 // pred_region
        _
      $region44: #{_lambda_.1} parent=11 // pred_fallthru
        _
      // Predicated region
      $region45: #{_lambda_.1} parent=11 // pred_check
        %p296 = pneg %p231
      $region46: #{_lambda_.1} parent=11 // pred_check_branch
        %298 = sbr.rel (%p296) target = $region48
      $region47: #{_lambda_.1} parent=11 // pred_region
        _
      $region48: #{_lambda_.1} parent=11 // pred_fallthru
        _
    $region12: #{_lambda_.1} parent=5 // pred_fallthru
      _
    %p299 = scmp.lt.s32.totalorder %s16, 2
    // Predicated region
    $region49: #{_lambda_.1} parent=5 // pred_check
      %p300 = pneg %p299
    $region50: #{_lambda_.1} parent=5 // pred_check_branch
      %302 = sbr.rel (%p300) target = $region52
    $region51: #{_lambda_.1} parent=5 // pred_region
      // Predicated region
      $region53: #{_lambda_.1} parent=51 // pred_check
        %p303 = pneg %p36
      $region54: #{_lambda_.1} parent=51 // pred_check_branch
        %305 = sbr.rel (%p303) target = $region56
      $region55: #{_lambda_.1} parent=51 // pred_region
        %s306 = smul.u32 16, %s16
        %p307 = scmp.lt.s32.totalorder %s306, 31
        %s308 = scalar_select %p307, %s306, 31
        %s309 = smul.addr %s308, 2
        %s310 = smul.addr %s309, 4
        %s311 = scalar_lea.vmem %s0, %s310
        %s312 = smul.u32 16, %s16
      $region56: #{_lambda_.1} parent=51 // pred_fallthru
        _
    $region52: #{_lambda_.1} parent=5 // pred_fallthru
      _
    %p313 = scmp.le.s32.totalorder 1, %s16
    %p314 = scmp.lt.s32.totalorder %s16, 3
    %p315 = pnand %p313, %p314
    %p316 = pneg %p315
    // Predicated region
    $region57: #{_lambda_.1} parent=5 // pred_check
      _
    $region58: #{_lambda_.1} parent=5 // pred_check_branch
      %318 = sbr.rel (%p315) target = $region60
    $region59: #{_lambda_.1} parent=5 // pred_region
      %s319 = ssub.s32 %s16, 1
      %s320 = smul.u32 16, %s21
      %p321 = scmp.lt.s32.totalorder %s320, 31
      %s322 = scalar_select %p321, %s320, 31
      %s323 = smul.addr %s322, 2
      %s324 = smul.addr %s323, 4
      %s325 = scalar_lea.vmem %s0, %s324
      %p326 = pneg %p42
      %p327 = pneg %p39
      %p328 = pneg %p63
      %p329 = pneg %p60
      %p330 = pneg %p84
      %p331 = pneg %p81
      %p332 = pneg %p105
      %p333 = pneg %p102
      %p334 = pneg %p126
      %p335 = pneg %p123
      %p336 = pneg %p147
      %p337 = pneg %p144
      %p338 = pneg %p168
      %p339 = pneg %p165
      %p340 = pneg %p189
      %p341 = pneg %p186
      %p342 = pneg %p210
      %p343 = pneg %p207
      %p344 = pneg %p231
      %p345 = pneg %p228
      %p346 = pneg %p257
      %p347 = pneg %p254
      %p348 = scmp.lt.s32.totalorder %s21, 1
      %s349 = scalar_select %p348, %s21, 1
      %s350 = smul.addr %s349, 4
      %s351 = smul.addr %s350, 8
      %s352 = scalar_lea.vmem %s10, %s351
      %s353 = smul.u32 16, %s21
      %p354 = scmp.lt.s32.totalorder %s353, 31
      %s355 = scalar_select %p354, %s353, 31
      %s356 = smul.addr %s355, 2
      %s357 = smul.addr %s356, 4
      %s358 = scalar_lea.vmem %s0, %s357
      %s359 = smul.u32 16, %s21
      %p360 = scmp.lt.s32.totalorder %s21, 1
      %s361 = scalar_select %p360, %s21, 1
      %s362 = smul.addr %s361, 4
      %s363 = smul.addr %s362, 8
      %s364 = scalar_lea.vmem %s10, %s363
      %v366 = vld [vmem:[%s358] sm:$0xff]
      %v367 = vld [vmem:[%s358 + $0x8] sm:$0xff]
      %v368 = vld [vmem:[%s358 + $0x10] sm:$0xff]
      %v369 = vld [vmem:[%s358 + $0x18] sm:$0xff]
      %v370 = vld [vmem:[%s358 + $0x20] sm:$0xff]
      %v371 = vld [vmem:[%s358 + $0x28] sm:$0xff]
      %v372 = vld [vmem:[%s358 + $0x30] sm:$0xff]
      %v373 = vld [vmem:[%s358 + $0x38] sm:$0xff]
      %v374 = vld [vmem:[%s358 + $0x40] sm:$0xff]
      %v375 = vld [vmem:[%s358 + $0x48] sm:$0xff]
      %v376 = vld [vmem:[%s358 + $0x50] sm:$0xff]
      %v377 = vld [vmem:[%s358 + $0x58] sm:$0xff]
      %v378 = vld [vmem:[%s358 + $0x60] sm:$0xff]
      %v379 = vld [vmem:[%s358 + $0x68] sm:$0xff]
      %v380 = vld [vmem:[%s358 + $0x70] sm:$0xff]
      %v381 = vld [vmem:[%s358 + $0x78] sm:$0xff]
      %v382 = vld [vmem:[%s1] sm:$0xf]
      %v383 = vld [vmem:[%s1 + $0x4] sm:$0xf]
      %v384 = vld [vmem:[%s1 + $0x8] sm:$0xf]
      %v385 = vld [vmem:[%s1 + $0xc] sm:$0xf]
      %v386 = vld [vmem:[%s1 + $0x10] sm:$0xf]
      %v387 = vld [vmem:[%s1 + $0x14] sm:$0xf]
      %v388 = vld [vmem:[%s1 + $0x18] sm:$0xf]
      %v389 = vld [vmem:[%s1 + $0x1c] sm:$0xf]
      %v390 = vld [vmem:[%s1 + $0x20] sm:$0xf]
      %v391 = vld [vmem:[%s1 + $0x24] sm:$0xf]
      %v392 = vld [vmem:[%s1 + $0x28] sm:$0xf]
      %v393 = vld [vmem:[%s1 + $0x2c] sm:$0xf]
      %v394 = vld [vmem:[%s1 + $0x30] sm:$0xf]
      %v395 = vld [vmem:[%s1 + $0x34] sm:$0xf]
      %v396 = vld [vmem:[%s1 + $0x38] sm:$0xf]
      %v397 = vld [vmem:[%s1 + $0x3c] sm:$0xf]
      %v398 = vld [vmem:[%s1 + $0x40] sm:$0xf]
      %v399 = vld [vmem:[%s1 + $0x44] sm:$0xf]
      %v400 = vld [vmem:[%s1 + $0x48] sm:$0xf]
      %v401 = vld [vmem:[%s1 + $0x4c] sm:$0xf]
      %v402 = vld [vmem:[%s1 + $0x50] sm:$0xf]
      %v403 = vld [vmem:[%s1 + $0x54] sm:$0xf]
      %v404 = vld [vmem:[%s1 + $0x58] sm:$0xf]
      %v405 = vld [vmem:[%s1 + $0x5c] sm:$0xf]
      %v406 = vld [vmem:[%s2] sm:$0x1]
      %v408 = vlaneseq
      %v409 = vshrl.u32 %v408, 7
      %v410 = vsub.s32 0, %v409
      %v411 = vrot.slane %v406, %v410
      %v429 = vunpack.c.l.b16 %v366
      %v430 = vunpack.c.h.b16 %v366
      %v431 = vunpack.c.l.b16 %v367
      %v432 = vunpack.c.h.b16 %v367
      %v433 = vunpack.c.l.b16 %v368
      %v434 = vunpack.c.h.b16 %v368
      %v435 = vunpack.c.l.b16 %v369
      %v436 = vunpack.c.h.b16 %v369
      %v437 = vunpack.c.l.b16 %v370
      %v438 = vunpack.c.h.b16 %v370
      %v439 = vunpack.c.l.b16 %v371
      %v440 = vunpack.c.h.b16 %v371
      %v441 = vunpack.c.l.b16 %v372
      %v442 = vunpack.c.h.b16 %v372
      %v443 = vunpack.c.l.b16 %v373
      %v444 = vunpack.c.h.b16 %v373
      %v445 = vunpack.c.l.b16 %v374
      %v446 = vunpack.c.h.b16 %v374
      %v447 = vunpack.c.l.b16 %v375
      %v448 = vunpack.c.h.b16 %v375
      %v449 = vunpack.c.l.b16 %v376
      %v450 = vunpack.c.h.b16 %v376
      %v451 = vunpack.c.l.b16 %v377
      %v452 = vunpack.c.h.b16 %v377
      %v453 = vunpack.c.l.b16 %v378
      %v454 = vunpack.c.h.b16 %v378
      %v455 = vunpack.c.l.b16 %v379
      %v456 = vunpack.c.h.b16 %v379
      %v457 = vunpack.c.l.b16 %v380
      %v458 = vunpack.c.h.b16 %v380
      %v459 = vunpack.c.l.b16 %v381
      %v460 = vunpack.c.h.b16 %v381
      %v461 = vpack.c.b16 %v431, %v429
      %v462 = vpack.c.b16 %v432, %v430
      %v463 = vpack.c.b16 %v435, %v433
      %v464 = vpack.c.b16 %v436, %v434
      %v465 = vpack.c.b16 %v439, %v437
      %v466 = vpack.c.b16 %v440, %v438
      %v467 = vpack.c.b16 %v443, %v441
      %v468 = vpack.c.b16 %v444, %v442
      %v469 = vpack.c.b16 %v447, %v445
      %v470 = vpack.c.b16 %v448, %v446
      %v471 = vpack.c.b16 %v451, %v449
      %v472 = vpack.c.b16 %v452, %v450
      %v473 = vpack.c.b16 %v455, %v453
      %v474 = vpack.c.b16 %v456, %v454
      %v475 = vpack.c.b16 %v459, %v457
      %v476 = vpack.c.b16 %v460, %v458
      %v509 = vunpack.c.l.b16 %v382
      %v510 = vunpack.c.l.b16 %v383
      %v511 = vunpack.c.l.b16 %v384
      %v512 = vunpack.c.l.b16 %v385
      %v513 = vunpack.c.l.b16 %v386
      %v514 = vunpack.c.l.b16 %v387
      %v515 = vunpack.c.l.b16 %v388
      %v516 = vunpack.c.l.b16 %v389
      %v517 = vunpack.c.l.b16 %v390
      %v518 = vunpack.c.l.b16 %v391
      %v519 = vunpack.c.l.b16 %v392
      %v520 = vunpack.c.l.b16 %v393
      %v521 = vunpack.c.l.b16 %v394
      %v522 = vunpack.c.l.b16 %v395
      %v523 = vunpack.c.l.b16 %v396
      %v524 = vunpack.c.l.b16 %v397
      %v525 = vunpack.c.l.b16 %v398
      %v526 = vunpack.c.l.b16 %v399
      %v527 = vunpack.c.l.b16 %v400
      %v528 = vunpack.c.l.b16 %v401
      %v529 = vunpack.c.l.b16 %v402
      %v530 = vunpack.c.l.b16 %v403
      %v531 = vunpack.c.l.b16 %v404
      %v532 = vunpack.c.l.b16 %v405
      %v533 = vpack.c.b16 %v510, %v509
      %v534 = vpack.c.b16 %v512, %v511
      %v535 = vpack.c.b16 %v514, %v513
      %v536 = vpack.c.b16 %v516, %v515
      %v537 = vpack.c.b16 %v518, %v517
      %v538 = vpack.c.b16 %v520, %v519
      %v539 = vpack.c.b16 %v522, %v521
      %v540 = vpack.c.b16 %v524, %v523
      %v541 = vpack.c.b16 %v526, %v525
      %v542 = vpack.c.b16 %v528, %v527
      %v543 = vpack.c.b16 %v530, %v529
      %v544 = vpack.c.b16 %v532, %v531
      %vm557 = vcmask 523264
      %v559 = vsel %vm557, %v462, 0
      %v562 = vsel %vm557, %v464, 0
      %v565 = vsel %vm557, %v466, 0
      %v568 = vsel %vm557, %v468, 0
      %v571 = vsel %vm557, %v470, 0
      %v574 = vsel %vm557, %v472, 0
      %v577 = vsel %vm557, %v474, 0
      %v580 = vsel %vm557, %v476, 0
      %582 = vmatprep.subr.bf16.mxu0 0
      %583 = vmatpush1.bf16.msra.mxu0 %v533
      %584 = vmatprep.subr.bf16.mxu0 0
      %585 = vmatpush1.bf16.msra.mxu0 %v534
      %586 = vmatprep.subr.bf16.mxu0 0
      %587 = vmatpush1.bf16.msra.mxu0 %v535
      %588 = vmatprep.subr.bf16.mxu0 0
      %589 = vmatpush1.bf16.msra.mxu0 %v536
      %590 = vmatprep.subr.bf16.mxu0 0
      %591 = vmatpush1.bf16.msra.mxu0 %v537
      %592 = vmatprep.subr.bf16.mxu0 0
      %593 = vmatpush1.bf16.msra.mxu0 %v538
      %594 = vmatprep.subr.bf16.mxu0 0
      %595 = vmatpush1.bf16.msra.mxu0 %v539
      %596 = vmatprep.subr.bf16.mxu0 0
      %597 = vmatpush1.bf16.msra.mxu0 %v540
      %598 = vmatprep.subr.bf16.mxu0 0
      %599 = vmatpush1.bf16.msra.mxu0 %v541
      %600 = vmatprep.subr.bf16.mxu0 0
      %601 = vmatpush1.bf16.msra.mxu0 %v542
      %602 = vmatprep.subr.bf16.mxu0 0
      %603 = vmatpush1.bf16.msra.mxu0 %v543
      %604 = vmatprep.subr.bf16.mxu0 0
      %605 = vmatpush1.bf16.msra.mxu0 %v544
      %606 = vmatprep.subr.bf16.mxu0 0
      %607 = vmatpush1.bf16.msra.mxu0 0
      %608 = vmatprep.subr.bf16.mxu0 0
      %609 = vmatpush1.bf16.msra.mxu0 0
      %610 = vmatprep.subr.bf16.mxu0 0
      %611 = vmatpush1.bf16.msra.mxu0 0
      %612 = vmatprep.subr.bf16.mxu0 0
      %613 = vmatpush1.bf16.msra.mxu0 0
      %614 = vmatprep.mubr.bf16.mxu0 %v559
      %615 = vmatmul.mubr.bf16.gmra.mrb[0].mxu0 %v461
      %v616 = vpop.f32.mrb[0].mxu0
      %v617 = vadd.f32 %v411, %v616
      %v618 = vpop.f32.mrb[0].mxu0
      %v619 = vpop.f32.mrb[0].mxu0
      %v620 = vadd.f32 %v411, %v619
      %v621 = vpop.f32.mrb[0].mxu0
      %622 = vmatprep.mubr.bf16.mxu0 %v562
      %623 = vmatmul.mubr.bf16.gmra.mrb[0].mxu0 %v463
      %v624 = vpop.f32.mrb[0].mxu0
      %v625 = vadd.f32 %v411, %v624
      %v626 = vpop.f32.mrb[0].mxu0
      %v627 = vpop.f32.mrb[0].mxu0
      %v628 = vadd.f32 %v411, %v627
      %v629 = vpop.f32.mrb[0].mxu0
      %630 = vmatprep.mubr.bf16.mxu0 %v565
      %631 = vmatmul.mubr.bf16.gmra.mrb[0].mxu0 %v465
      %v632 = vpop.f32.mrb[0].mxu0
      %v633 = vadd.f32 %v411, %v632
      %v634 = vpop.f32.mrb[0].mxu0
      %v635 = vpop.f32.mrb[0].mxu0
      %v636 = vadd.f32 %v411, %v635
      %v637 = vpop.f32.mrb[0].mxu0
      %638 = vmatprep.mubr.bf16.mxu0 %v568
      %639 = vmatmul.mubr.bf16.gmra.mrb[0].mxu0 %v467
      %v640 = vpop.f32.mrb[0].mxu0
      %v641 = vadd.f32 %v411, %v640
      %v642 = vpop.f32.mrb[0].mxu0
      %v643 = vpop.f32.mrb[0].mxu0
      %v644 = vadd.f32 %v411, %v643
      %v645 = vpop.f32.mrb[0].mxu0
      %646 = vmatprep.mubr.bf16.mxu0 %v571
      %647 = vmatmul.mubr.bf16.gmra.mrb[0].mxu0 %v469
      %v648 = vpop.f32.mrb[0].mxu0
      %v649 = vadd.f32 %v411, %v648
      %v650 = vpop.f32.mrb[0].mxu0
      %v651 = vpop.f32.mrb[0].mxu0
      %v652 = vadd.f32 %v411, %v651
      %v653 = vpop.f32.mrb[0].mxu0
      %654 = vmatprep.mubr.bf16.mxu0 %v574
      %655 = vmatmul.mubr.bf16.gmra.mrb[0].mxu0 %v471
      %v656 = vpop.f32.mrb[0].mxu0
      %v657 = vadd.f32 %v411, %v656
      %v658 = vpop.f32.mrb[0].mxu0
      %v659 = vpop.f32.mrb[0].mxu0
      %v660 = vadd.f32 %v411, %v659
      %v661 = vpop.f32.mrb[0].mxu0
      %662 = vmatprep.mubr.bf16.mxu0 %v577
      %663 = vmatmul.mubr.bf16.gmra.mrb[0].mxu0 %v473
      %v664 = vpop.f32.mrb[0].mxu0
      %v665 = vadd.f32 %v411, %v664
      %v666 = vpop.f32.mrb[0].mxu0
      %v667 = vpop.f32.mrb[0].mxu0
      %v668 = vadd.f32 %v411, %v667
      %v669 = vpop.f32.mrb[0].mxu0
      %670 = vmatprep.mubr.bf16.mxu0 %v580
      %671 = vmatmul.mubr.bf16.gmra.mrb[0].mxu0 %v475
      %v672 = vpop.f32.mrb[0].mxu0
      %v673 = vadd.f32 %v411, %v672
      %v674 = vpop.f32.mrb[0].mxu0
      %v675 = vpop.f32.mrb[0].mxu0
      %v676 = vadd.f32 %v411, %v675
      %v677 = vpop.f32.mrb[0].mxu0
      %678 = vdwg.mxu0
      %v679 = vpack.c.bf16 %v620, %v617
      %v680 = vpack.c.bf16 %v628, %v625
      %v681 = vpack.c.bf16 %v636, %v633
      %v682 = vpack.c.bf16 %v644, %v641
      %v683 = vpack.c.bf16 %v652, %v649
      %v684 = vpack.c.bf16 %v660, %v657
      %v685 = vpack.c.bf16 %v668, %v665
      %v686 = vpack.c.bf16 %v676, %v673
      %v687 = vld [vmem:[%s3] sm:$0xf]
      %v688 = vld [vmem:[%s3 + $0x4] sm:$0xf]
      %v689 = vld [vmem:[%s3 + $0x8] sm:$0xf]
      %v690 = vld [vmem:[%s3 + $0xc] sm:$0xf]
      %v691 = vld [vmem:[%s3 + $0x10] sm:$0xf]
      %v692 = vld [vmem:[%s3 + $0x14] sm:$0xf]
      %v693 = vld [vmem:[%s3 + $0x18] sm:$0xf]
      %v694 = vld [vmem:[%s3 + $0x1c] sm:$0xf]
      %v695 = vld [vmem:[%s3 + $0x20] sm:$0xf]
      %v696 = vld [vmem:[%s3 + $0x24] sm:$0xf]
      %v697 = vld [vmem:[%s3 + $0x28] sm:$0xf]
      %v698 = vld [vmem:[%s3 + $0x2c] sm:$0xf]
      %v699 = vld [vmem:[%s3 + $0x30] sm:$0xf]
      %v700 = vld [vmem:[%s3 + $0x34] sm:$0xf]
      %v701 = vld [vmem:[%s3 + $0x38] sm:$0xf]
      %v702 = vld [vmem:[%s3 + $0x3c] sm:$0xf]
      %v719 = vunpack.c.l.b16 %v687
      %v720 = vunpack.c.l.b16 %v688
      %v721 = vunpack.c.l.b16 %v689
      %v722 = vunpack.c.l.b16 %v690
      %v723 = vunpack.c.l.b16 %v691
      %v724 = vunpack.c.l.b16 %v692
      %v725 = vunpack.c.l.b16 %v693
      %v726 = vunpack.c.l.b16 %v694
      %v727 = vunpack.c.l.b16 %v695
      %v728 = vunpack.c.l.b16 %v696
      %v729 = vunpack.c.l.b16 %v697
      %v730 = vunpack.c.l.b16 %v698
      %v731 = vunpack.c.l.b16 %v699
      %v732 = vunpack.c.l.b16 %v700
      %v733 = vunpack.c.l.b16 %v701
      %v734 = vunpack.c.l.b16 %v702
      %v735 = vpack.c.b16 %v720, %v719
      %v736 = vpack.c.b16 %v722, %v721
      %v737 = vpack.c.b16 %v724, %v723
      %v738 = vpack.c.b16 %v726, %v725
      %v739 = vpack.c.b16 %v728, %v727
      %v740 = vpack.c.b16 %v730, %v729
      %v741 = vpack.c.b16 %v732, %v731
      %v742 = vpack.c.b16 %v734, %v733
      %751 = vmatprep.subr.bf16.mxu0 0
      %752 = vmatpush1.bf16.msra.mxu0 %v679
      %753 = vmatprep.subr.bf16.mxu0 0
      %754 = vmatpush1.bf16.msra.mxu0 %v680
      %755 = vmatprep.subr.bf16.mxu0 0
      %756 = vmatpush1.bf16.msra.mxu0 %v681
      %757 = vmatprep.subr.bf16.mxu0 0
      %758 = vmatpush1.bf16.msra.mxu0 %v682
      %759 = vmatprep.subr.bf16.mxu0 0
      %760 = vmatpush1.bf16.msra.mxu0 %v683
      %761 = vmatprep.subr.bf16.mxu0 0
      %762 = vmatpush1.bf16.msra.mxu0 %v684
      %763 = vmatprep.subr.bf16.mxu0 0
      %764 = vmatpush1.bf16.msra.mxu0 %v685
      %765 = vmatprep.subr.bf16.mxu0 0
      %766 = vmatpush1.bf16.msra.mxu0 %v686
      %767 = vmatprep.subr.bf16.mxu0 0
      %768 = vmatpush1.bf16.msra.mxu0 0
      %769 = vmatprep.subr.bf16.mxu0 0
      %770 = vmatpush1.bf16.msra.mxu0 0
      %771 = vmatprep.subr.bf16.mxu0 0
      %772 = vmatpush1.bf16.msra.mxu0 0
      %773 = vmatprep.subr.bf16.mxu0 0
      %774 = vmatpush1.bf16.msra.mxu0 0
      %775 = vmatprep.subr.bf16.mxu0 0
      %776 = vmatpush1.bf16.msra.mxu0 0
      %777 = vmatprep.subr.bf16.mxu0 0
      %778 = vmatpush1.bf16.msra.mxu0 0
      %779 = vmatprep.subr.bf16.mxu0 0
      %780 = vmatpush1.bf16.msra.mxu0 0
      %781 = vmatprep.subr.bf16.mxu0 0
      %782 = vmatpush1.bf16.msra.mxu0 0
      %783 = vmatprep.mubr.bf16.mxu0 0
      %784 = vmatmul.mubr.bf16.gmra.mrb[0].mxu0 %v735
      %v785 = vpop.f32.mrb[0].mxu0
      %v786 = vadd.f32 0.0, %v785
      %v787 = vpop.f32.mrb[0].mxu0
      %v788 = vpop.f32.mrb[0].mxu0
      %v789 = vadd.f32 0.0, %v788
      %v790 = vpop.f32.mrb[0].mxu0
      %791 = vmatprep.mubr.bf16.mxu0 0
      %792 = vmatmul.mubr.bf16.gmra.mrb[0].mxu0 %v736
      %v793 = vpop.f32.mrb[0].mxu0
      %v794 = vadd.f32 0.0, %v793
      %v795 = vpop.f32.mrb[0].mxu0
      %v796 = vpop.f32.mrb[0].mxu0
      %v797 = vadd.f32 0.0, %v796
      %v798 = vpop.f32.mrb[0].mxu0
      %799 = vmatprep.mubr.bf16.mxu0 0
      %800 = vmatmul.mubr.bf16.gmra.mrb[0].mxu0 %v737
      %v801 = vpop.f32.mrb[0].mxu0
      %v802 = vadd.f32 0.0, %v801
      %v803 = vpop.f32.mrb[0].mxu0
      %v804 = vpop.f32.mrb[0].mxu0
      %v805 = vadd.f32 0.0, %v804
      %v806 = vpop.f32.mrb[0].mxu0
      %807 = vmatprep.mubr.bf16.mxu0 0
      %808 = vmatmul.mubr.bf16.gmra.mrb[0].mxu0 %v738
      %v809 = vpop.f32.mrb[0].mxu0
      %v810 = vadd.f32 0.0, %v809
      %v811 = vpop.f32.mrb[0].mxu0
      %v812 = vpop.f32.mrb[0].mxu0
      %v813 = vadd.f32 0.0, %v812
      %v814 = vpop.f32.mrb[0].mxu0
      %815 = vmatprep.mubr.bf16.mxu0 0
      %816 = vmatmul.mubr.bf16.gmra.mrb[0].mxu0 %v739
      %v817 = vpop.f32.mrb[0].mxu0
      %v818 = vadd.f32 0.0, %v817
      %v819 = vpop.f32.mrb[0].mxu0
      %v820 = vpop.f32.mrb[0].mxu0
      %v821 = vadd.f32 0.0, %v820
      %v822 = vpop.f32.mrb[0].mxu0
      %823 = vmatprep.mubr.bf16.mxu0 0
      %824 = vmatmul.mubr.bf16.gmra.mrb[0].mxu0 %v740
      %v825 = vpop.f32.mrb[0].mxu0
      %v826 = vadd.f32 0.0, %v825
      %v827 = vpop.f32.mrb[0].mxu0
      %v828 = vpop.f32.mrb[0].mxu0
      %v829 = vadd.f32 0.0, %v828
      %v830 = vpop.f32.mrb[0].mxu0
      %831 = vmatprep.mubr.bf16.mxu0 0
      %832 = vmatmul.mubr.bf16.gmra.mrb[0].mxu0 %v741
      %v833 = vpop.f32.mrb[0].mxu0
      %v834 = vadd.f32 0.0, %v833
      %v835 = vpop.f32.mrb[0].mxu0
      %v836 = vpop.f32.mrb[0].mxu0
      %v837 = vadd.f32 0.0, %v836
      %v838 = vpop.f32.mrb[0].mxu0
      %839 = vmatprep.mubr.bf16.mxu0 0
      %840 = vmatmul.mubr.bf16.gmra.mrb[0].mxu0 %v742
      %v841 = vpop.f32.mrb[0].mxu0
      %v842 = vadd.f32 0.0, %v841
      %v843 = vpop.f32.mrb[0].mxu0
      %v844 = vpop.f32.mrb[0].mxu0
      %v845 = vadd.f32 0.0, %v844
      %v846 = vpop.f32.mrb[0].mxu0
      %847 = vdwg.mxu0
      %v848 = vpack.c.bf16 %v789, %v786
      %v849 = vpack.c.bf16 %v797, %v794
      %v850 = vpack.c.bf16 %v805, %v802
      %v851 = vpack.c.bf16 %v813, %v810
      %v852 = vpack.c.bf16 %v821, %v818
      %v853 = vpack.c.bf16 %v829, %v826
      %v854 = vpack.c.bf16 %v837, %v834
      %v855 = vpack.c.bf16 %v845, %v842
      %v856 = vld [vmem:[%s4] sm:$0xff]
      %v857 = vld [vmem:[%s4 + $0x8] sm:$0xff]
      %v858 = vld [vmem:[%s4 + $0x10] sm:$0xff]
      %v859 = vld [vmem:[%s4 + $0x18] sm:$0xff]
      %v860 = vld [vmem:[%s4 + $0x20] sm:$0xff]
      %v861 = vld [vmem:[%s4 + $0x28] sm:$0xff]
      %v862 = vld [vmem:[%s4 + $0x30] sm:$0xff]
      %v863 = vld [vmem:[%s4 + $0x38] sm:$0xff]
      %v864 = vld [vmem:[%s4 + $0x40] sm:$0xff]
      %v865 = vld [vmem:[%s4 + $0x48] sm:$0xff]
      %v866 = vld [vmem:[%s4 + $0x50] sm:$0xff]
      %v867 = vld [vmem:[%s4 + $0x58] sm:$0xff]
      %v868 = vld [vmem:[%s4 + $0x60] sm:$0xff]
      %v869 = vld [vmem:[%s4 + $0x68] sm:$0xff]
      %v870 = vld [vmem:[%s4 + $0x70] sm:$0xff]
      %v871 = vld [vmem:[%s4 + $0x78] sm:$0xff]
      %s872 = scalar_lea.vmem %s3, 64
      %v873 = vld [vmem:[%s872] sm:$0xf]
      %v874 = vld [vmem:[%s872 + $0x4] sm:$0xf]
      %v875 = vld [vmem:[%s872 + $0x8] sm:$0xf]
      %v876 = vld [vmem:[%s872 + $0xc] sm:$0xf]
      %v877 = vld [vmem:[%s872 + $0x10] sm:$0xf]
      %v878 = vld [vmem:[%s872 + $0x14] sm:$0xf]
      %v879 = vld [vmem:[%s872 + $0x18] sm:$0xf]
      %v880 = vld [vmem:[%s872 + $0x1c] sm:$0xf]
      %v881 = vld [vmem:[%s872 + $0x20] sm:$0xf]
      %v882 = vld [vmem:[%s872 + $0x24] sm:$0xf]
      %v883 = vld [vmem:[%s872 + $0x28] sm:$0xf]
      %v884 = vld [vmem:[%s872 + $0x2c] sm:$0xf]
      %v885 = vld [vmem:[%s872 + $0x30] sm:$0xf]
      %v886 = vld [vmem:[%s872 + $0x34] sm:$0xf]
      %v887 = vld [vmem:[%s872 + $0x38] sm:$0xf]
      %v888 = vld [vmem:[%s872 + $0x3c] sm:$0xf]
      %v905 = vunpack.c.l.b16 %v873
      %v906 = vunpack.c.l.b16 %v874
      %v907 = vunpack.c.l.b16 %v875
      %v908 = vunpack.c.l.b16 %v876
      %v909 = vunpack.c.l.b16 %v877
      %v910 = vunpack.c.l.b16 %v878
      %v911 = vunpack.c.l.b16 %v879
      %v912 = vunpack.c.l.b16 %v880
      %v913 = vunpack.c.l.b16 %v881
      %v914 = vunpack.c.l.b16 %v882
      %v915 = vunpack.c.l.b16 %v883
      %v916 = vunpack.c.l.b16 %v884
      %v917 = vunpack.c.l.b16 %v885
      %v918 = vunpack.c.l.b16 %v886
      %v919 = vunpack.c.l.b16 %v887
      %v920 = vunpack.c.l.b16 %v888
      %v921 = vpack.c.b16 %v906, %v905
      %v922 = vpack.c.b16 %v908, %v907
      %v923 = vpack.c.b16 %v910, %v909
      %v924 = vpack.c.b16 %v912, %v911
      %v925 = vpack.c.b16 %v914, %v913
      %v926 = vpack.c.b16 %v916, %v915
      %v927 = vpack.c.b16 %v918, %v917
      %v928 = vpack.c.b16 %v920, %v919
      %937 = vmatprep.subr.bf16.mxu0 0
      %938 = vmatpush1.bf16.msra.mxu0 %v679
      %939 = vmatprep.subr.bf16.mxu0 0
      %940 = vmatpush1.bf16.msra.mxu0 %v680
      %941 = vmatprep.subr.bf16.mxu0 0
      %942 = vmatpush1.bf16.msra.mxu0 %v681
      %943 = vmatprep.subr.bf16.mxu0 0
      %944 = vmatpush1.bf16.msra.mxu0 %v682
      %945 = vmatprep.subr.bf16.mxu0 0
      %946 = vmatpush1.bf16.msra.mxu0 %v683
      %947 = vmatprep.subr.bf16.mxu0 0
      %948 = vmatpush1.bf16.msra.mxu0 %v684
      %949 = vmatprep.subr.bf16.mxu0 0
      %950 = vmatpush1.bf16.msra.mxu0 %v685
      %951 = vmatprep.subr.bf16.mxu0 0
      %952 = vmatpush1.bf16.msra.mxu0 %v686
      %953 = vmatprep.subr.bf16.mxu0 0
      %954 = vmatpush1.bf16.msra.mxu0 0
      %955 = vmatprep.subr.bf16.mxu0 0
      %956 = vmatpush1.bf16.msra.mxu0 0
      %957 = vmatprep.subr.bf16.mxu0 0
      %958 = vmatpush1.bf16.msra.mxu0 0
      %959 = vmatprep.subr.bf16.mxu0 0
      %960 = vmatpush1.bf16.msra.mxu0 0
      %961 = vmatprep.subr.bf16.mxu0 0
      %962 = vmatpush1.bf16.msra.mxu0 0
      %963 = vmatprep.subr.bf16.mxu0 0
      %964 = vmatpush1.bf16.msra.mxu0 0
      %965 = vmatprep.subr.bf16.mxu0 0
      %966 = vmatpush1.bf16.msra.mxu0 0
      %967 = vmatprep.subr.bf16.mxu0 0
      %968 = vmatpush1.bf16.msra.mxu0 0
      %969 = vmatprep.mubr.bf16.mxu0 0
      %970 = vmatmul.mubr.bf16.gmra.mrb[0].mxu0 %v921
      %v971 = vpop.f32.mrb[0].mxu0
      %v972 = vadd.f32 0.0, %v971
      %v973 = vpop.f32.mrb[0].mxu0
      %v974 = vpop.f32.mrb[0].mxu0
      %v975 = vadd.f32 0.0, %v974
      %v976 = vpop.f32.mrb[0].mxu0
      %977 = vmatprep.mubr.bf16.mxu0 0
      %978 = vmatmul.mubr.bf16.gmra.mrb[0].mxu0 %v922
      %v979 = vpop.f32.mrb[0].mxu0
      %v980 = vadd.f32 0.0, %v979
      %v981 = vpop.f32.mrb[0].mxu0
      %v982 = vpop.f32.mrb[0].mxu0
      %v983 = vadd.f32 0.0, %v982
      %v984 = vpop.f32.mrb[0].mxu0
      %985 = vmatprep.mubr.bf16.mxu0 0
      %986 = vmatmul.mubr.bf16.gmra.mrb[0].mxu0 %v923
      %v987 = vpop.f32.mrb[0].mxu0
      %v988 = vadd.f32 0.0, %v987
      %v989 = vpop.f32.mrb[0].mxu0
      %v990 = vpop.f32.mrb[0].mxu0
      %v991 = vadd.f32 0.0, %v990
      %v992 = vpop.f32.mrb[0].mxu0
      %993 = vmatprep.mubr.bf16.mxu0 0
      %994 = vmatmul.mubr.bf16.gmra.mrb[0].mxu0 %v924
      %v995 = vpop.f32.mrb[0].mxu0
      %v996 = vadd.f32 0.0, %v995
      %v997 = vpop.f32.mrb[0].mxu0
      %v998 = vpop.f32.mrb[0].mxu0
      %v999 = vadd.f32 0.0, %v998
      %v1000 = vpop.f32.mrb[0].mxu0
      %1001 = vmatprep.mubr.bf16.mxu0 0
      %1002 = vmatmul.mubr.bf16.gmra.mrb[0].mxu0 %v925
      %v1003 = vpop.f32.mrb[0].mxu0
      %v1004 = vadd.f32 0.0, %v1003
      %v1005 = vpop.f32.mrb[0].mxu0
      %v1006 = vpop.f32.mrb[0].mxu0
      %v1007 = vadd.f32 0.0, %v1006
      %v1008 = vpop.f32.mrb[0].mxu0
      %1009 = vmatprep.mubr.bf16.mxu0 0
      %1010 = vmatmul.mubr.bf16.gmra.mrb[0].mxu0 %v926
      %v1011 = vpop.f32.mrb[0].mxu0
      %v1012 = vadd.f32 0.0, %v1011
      %v1013 = vpop.f32.mrb[0].mxu0
      %v1014 = vpop.f32.mrb[0].mxu0
      %v1015 = vadd.f32 0.0, %v1014
      %v1016 = vpop.f32.mrb[0].mxu0
      %1017 = vmatprep.mubr.bf16.mxu0 0
      %1018 = vmatmul.mubr.bf16.gmra.mrb[0].mxu0 %v927
      %v1019 = vpop.f32.mrb[0].mxu0
      %v1020 = vadd.f32 0.0, %v1019
      %v1021 = vpop.f32.mrb[0].mxu0
      %v1022 = vpop.f32.mrb[0].mxu0
      %v1023 = vadd.f32 0.0, %v1022
      %v1024 = vpop.f32.mrb[0].mxu0
      %1025 = vmatprep.mubr.bf16.mxu0 0
      %1026 = vmatmul.mubr.bf16.gmra.mrb[0].mxu0 %v928
      %v1027 = vpop.f32.mrb[0].mxu0
      %v1028 = vadd.f32 0.0, %v1027
      %v1029 = vpop.f32.mrb[0].mxu0
      %v1030 = vpop.f32.mrb[0].mxu0
      %v1031 = vadd.f32 0.0, %v1030
      %v1032 = vpop.f32.mrb[0].mxu0
      %1033 = vdwg.mxu0
      %v1034 = vpack.c.bf16 %v975, %v972
      %v1035 = vpack.c.bf16 %v983, %v980
      %v1036 = vpack.c.bf16 %v991, %v988
      %v1037 = vpack.c.bf16 %v999, %v996
      %v1038 = vpack.c.bf16 %v1007, %v1004
      %v1039 = vpack.c.bf16 %v1015, %v1012
      %v1040 = vpack.c.bf16 %v1023, %v1020
      %v1041 = vpack.c.bf16 %v1031, %v1028
      %s1042 = scalar_lea.vmem %s4, 128
      %v1043 = vld [vmem:[%s1042] sm:$0xff]
      %v1044 = vld [vmem:[%s1042 + $0x8] sm:$0xff]
      %v1045 = vld [vmem:[%s1042 + $0x10] sm:$0xff]
      %v1046 = vld [vmem:[%s1042 + $0x18] sm:$0xff]
      %v1047 = vld [vmem:[%s1042 + $0x20] sm:$0xff]
      %v1048 = vld [vmem:[%s1042 + $0x28] sm:$0xff]
      %v1049 = vld [vmem:[%s1042 + $0x30] sm:$0xff]
      %v1050 = vld [vmem:[%s1042 + $0x38] sm:$0xff]
      %v1051 = vld [vmem:[%s1042 + $0x40] sm:$0xff]
      %v1052 = vld [vmem:[%s1042 + $0x48] sm:$0xff]
      %v1053 = vld [vmem:[%s1042 + $0x50] sm:$0xff]
      %v1054 = vld [vmem:[%s1042 + $0x58] sm:$0xff]
      %v1055 = vld [vmem:[%s1042 + $0x60] sm:$0xff]
      %v1056 = vld [vmem:[%s1042 + $0x68] sm:$0xff]
      %v1057 = vld [vmem:[%s1042 + $0x70] sm:$0xff]
      %v1058 = vld [vmem:[%s1042 + $0x78] sm:$0xff]
      %v1075 = vunpack.c.l.b16 %v1043
      %v1076 = vunpack.c.h.b16 %v1043
      %v1077 = vunpack.c.l.b16 %v1044
      %v1078 = vunpack.c.h.b16 %v1044
      %v1079 = vunpack.c.l.b16 %v1045
      %v1080 = vunpack.c.h.b16 %v1045
      %v1081 = vunpack.c.l.b16 %v1046
      %v1082 = vunpack.c.h.b16 %v1046
      %v1083 = vunpack.c.l.b16 %v1047
      %v1084 = vunpack.c.h.b16 %v1047
      %v1085 = vunpack.c.l.b16 %v1048
      %v1086 = vunpack.c.h.b16 %v1048
      %v1087 = vunpack.c.l.b16 %v1049
      %v1088 = vunpack.c.h.b16 %v1049
      %v1089 = vunpack.c.l.b16 %v1050
      %v1090 = vunpack.c.h.b16 %v1050
      %v1091 = vunpack.c.l.b16 %v1051
      %v1092 = vunpack.c.h.b16 %v1051
      %v1093 = vunpack.c.l.b16 %v1052
      %v1094 = vunpack.c.h.b16 %v1052
      %v1095 = vunpack.c.l.b16 %v1053
      %v1096 = vunpack.c.h.b16 %v1053
      %v1097 = vunpack.c.l.b16 %v1054
      %v1098 = vunpack.c.h.b16 %v1054
      %v1099 = vunpack.c.l.b16 %v1055
      %v1100 = vunpack.c.h.b16 %v1055
      %v1101 = vunpack.c.l.b16 %v1056
      %v1102 = vunpack.c.h.b16 %v1056
      %v1103 = vunpack.c.l.b16 %v1057
      %v1104 = vunpack.c.h.b16 %v1057
      %v1105 = vunpack.c.l.b16 %v1058
      %v1106 = vunpack.c.h.b16 %v1058
      %v1107 = vpack.c.b16 %v1077, %v1075
      %v1108 = vpack.c.b16 %v1078, %v1076
      %v1109 = vpack.c.b16 %v1081, %v1079
      %v1110 = vpack.c.b16 %v1082, %v1080
      %v1111 = vpack.c.b16 %v1085, %v1083
      %v1112 = vpack.c.b16 %v1086, %v1084
      %v1113 = vpack.c.b16 %v1089, %v1087
      %v1114 = vpack.c.b16 %v1090, %v1088
      %v1115 = vpack.c.b16 %v1093, %v1091
      %v1116 = vpack.c.b16 %v1094, %v1092
      %v1117 = vpack.c.b16 %v1097, %v1095
      %v1118 = vpack.c.b16 %v1098, %v1096
      %v1119 = vpack.c.b16 %v1101, %v1099
      %v1120 = vpack.c.b16 %v1102, %v1100
      %v1121 = vpack.c.b16 %v1105, %v1103
      %v1122 = vpack.c.b16 %v1106, %v1104
      %1139 = vmatprep.subr.bf16.mxu0 %v1108
      %1140 = vmatpush1.bf16.msra.mxu0 %v1107
      %1141 = vmatprep.subr.bf16.mxu0 %v1110
      %1142 = vmatpush1.bf16.msra.mxu0 %v1109
      %1143 = vmatprep.subr.bf16.mxu0 %v1112
      %1144 = vmatpush1.bf16.msra.mxu0 %v1111
      %1145 = vmatprep.subr.bf16.mxu0 %v1114
      %1146 = vmatpush1.bf16.msra.mxu0 %v1113
      %1147 = vmatprep.subr.bf16.mxu0 %v1116
      %1148 = vmatpush1.bf16.msra.mxu0 %v1115
      %1149 = vmatprep.subr.bf16.mxu0 %v1118
      %1150 = vmatpush1.bf16.msra.mxu0 %v1117
      %1151 = vmatprep.subr.bf16.mxu0 %v1120
      %1152 = vmatpush1.bf16.msra.mxu0 %v1119
      %1153 = vmatprep.subr.bf16.mxu0 %v1122
      %1154 = vmatpush1.bf16.msra.mxu0 %v1121
      %1155 = vmatprep.subr.bf16.mxu0 0
      %1156 = vmatpush1.bf16.msra.mxu0 0
      %1157 = vmatprep.subr.bf16.mxu0 0
      %1158 = vmatpush1.bf16.msra.mxu0 0
      %1159 = vmatprep.subr.bf16.mxu0 0
      %1160 = vmatpush1.bf16.msra.mxu0 0
      %1161 = vmatprep.subr.bf16.mxu0 0
      %1162 = vmatpush1.bf16.msra.mxu0 0
      %1163 = vmatprep.subr.bf16.mxu0 0
      %1164 = vmatpush1.bf16.msra.mxu0 0
      %1165 = vmatprep.subr.bf16.mxu0 0
      %1166 = vmatpush1.bf16.msra.mxu0 0
      %1167 = vmatprep.subr.bf16.mxu0 0
      %1168 = vmatpush1.bf16.msra.mxu0 0
      %1169 = vmatprep.subr.bf16.mxu0 0
      %1170 = vmatpush1.bf16.msra.mxu0 0
      %1171 = vmatprep.mubr.bf16.mxu0 0
      %1172 = vmatmul.mubr.bf16.gmra.mrb[0].mxu0 %v1034
      %v1173 = vpop.f32.mrb[0].mxu0
      %v1174 = vadd.f32 0.0, %v1173
      %v1175 = vpop.f32.mrb[0].mxu0
      %v1176 = vadd.f32 0.0, %v1175
      %v1177 = vpop.f32.mrb[0].mxu0
      %v1178 = vadd.f32 0.0, %v1177
      %v1179 = vpop.f32.mrb[0].mxu0
      %v1180 = vadd.f32 0.0, %v1179
      %1181 = vmatprep.mubr.bf16.mxu0 0
      %1182 = vmatmul.mubr.bf16.gmra.mrb[0].mxu0 %v1035
      %v1183 = vpop.f32.mrb[0].mxu0
      %v1184 = vadd.f32 0.0, %v1183
      %v1185 = vpop.f32.mrb[0].mxu0
      %v1186 = vadd.f32 0.0, %v1185
      %v1187 = vpop.f32.mrb[0].mxu0
      %v1188 = vadd.f32 0.0, %v1187
      %v1189 = vpop.f32.mrb[0].mxu0
      %v1190 = vadd.f32 0.0, %v1189
      %1191 = vmatprep.mubr.bf16.mxu0 0
      %1192 = vmatmul.mubr.bf16.gmra.mrb[0].mxu0 %v1036
      %v1193 = vpop.f32.mrb[0].mxu0
      %v1194 = vadd.f32 0.0, %v1193
      %v1195 = vpop.f32.mrb[0].mxu0
      %v1196 = vadd.f32 0.0, %v1195
      %v1197 = vpop.f32.mrb[0].mxu0
      %v1198 = vadd.f32 0.0, %v1197
      %v1199 = vpop.f32.mrb[0].mxu0
      %v1200 = vadd.f32 0.0, %v1199
      %1201 = vmatprep.mubr.bf16.mxu0 0
      %1202 = vmatmul.mubr.bf16.gmra.mrb[0].mxu0 %v1037
      %v1203 = vpop.f32.mrb[0].mxu0
      %v1204 = vadd.f32 0.0, %v1203
      %v1205 = vpop.f32.mrb[0].mxu0
      %v1206 = vadd.f32 0.0, %v1205
      %v1207 = vpop.f32.mrb[0].mxu0
      %v1208 = vadd.f32 0.0, %v1207
      %v1209 = vpop.f32.mrb[0].mxu0
      %v1210 = vadd.f32 0.0, %v1209
      %1211 = vmatprep.mubr.bf16.mxu0 0
      %1212 = vmatmul.mubr.bf16.gmra.mrb[0].mxu0 %v1038
      %v1213 = vpop.f32.mrb[0].mxu0
      %v1214 = vadd.f32 0.0, %v1213
      %v1215 = vpop.f32.mrb[0].mxu0
      %v1216 = vadd.f32 0.0, %v1215
      %v1217 = vpop.f32.mrb[0].mxu0
      %v1218 = vadd.f32 0.0, %v1217
      %v1219 = vpop.f32.mrb[0].mxu0
      %v1220 = vadd.f32 0.0, %v1219
      %1221 = vmatprep.mubr.bf16.mxu0 0
      %1222 = vmatmul.mubr.bf16.gmra.mrb[0].mxu0 %v1039
      %v1223 = vpop.f32.mrb[0].mxu0
      %v1224 = vadd.f32 0.0, %v1223
      %v1225 = vpop.f32.mrb[0].mxu0
      %v1226 = vadd.f32 0.0, %v1225
      %v1227 = vpop.f32.mrb[0].mxu0
      %v1228 = vadd.f32 0.0, %v1227
      %v1229 = vpop.f32.mrb[0].mxu0
      %v1230 = vadd.f32 0.0, %v1229
      %1231 = vmatprep.mubr.bf16.mxu0 0
      %1232 = vmatmul.mubr.bf16.gmra.mrb[0].mxu0 %v1040
      %v1233 = vpop.f32.mrb[0].mxu0
      %v1234 = vadd.f32 0.0, %v1233
      %v1235 = vpop.f32.mrb[0].mxu0
      %v1236 = vadd.f32 0.0, %v1235
      %v1237 = vpop.f32.mrb[0].mxu0
      %v1238 = vadd.f32 0.0, %v1237
      %v1239 = vpop.f32.mrb[0].mxu0
      %v1240 = vadd.f32 0.0, %v1239
      %1241 = vmatprep.mubr.bf16.mxu0 0
      %1242 = vmatmul.mubr.bf16.gmra.mrb[0].mxu0 %v1041
      %v1243 = vpop.f32.mrb[0].mxu0
      %v1244 = vadd.f32 0.0, %v1243
      %v1245 = vpop.f32.mrb[0].mxu0
      %v1246 = vadd.f32 0.0, %v1245
      %v1247 = vpop.f32.mrb[0].mxu0
      %v1248 = vadd.f32 0.0, %v1247
      %v1249 = vpop.f32.mrb[0].mxu0
      %v1250 = vadd.f32 0.0, %v1249
      %1251 = vdwg.mxu0
      %v1268 = vunpack.c.l.b16 %v856
      %v1269 = vunpack.c.h.b16 %v856
      %v1270 = vunpack.c.l.b16 %v857
      %v1271 = vunpack.c.h.b16 %v857
      %v1272 = vunpack.c.l.b16 %v858
      %v1273 = vunpack.c.h.b16 %v858
      %v1274 = vunpack.c.l.b16 %v859
      %v1275 = vunpack.c.h.b16 %v859
      %v1276 = vunpack.c.l.b16 %v860
      %v1277 = vunpack.c.h.b16 %v860
      %v1278 = vunpack.c.l.b16 %v861
      %v1279 = vunpack.c.h.b16 %v861
      %v1280 = vunpack.c.l.b16 %v862
      %v1281 = vunpack.c.h.b16 %v862
      %v1282 = vunpack.c.l.b16 %v863
      %v1283 = vunpack.c.h.b16 %v863
      %v1284 = vunpack.c.l.b16 %v864
      %v1285 = vunpack.c.h.b16 %v864
      %v1286 = vunpack.c.l.b16 %v865
      %v1287 = vunpack.c.h.b16 %v865
      %v1288 = vunpack.c.l.b16 %v866
      %v1289 = vunpack.c.h.b16 %v866
      %v1290 = vunpack.c.l.b16 %v867
      %v1291 = vunpack.c.h.b16 %v867
      %v1292 = vunpack.c.l.b16 %v868
      %v1293 = vunpack.c.h.b16 %v868
      %v1294 = vunpack.c.l.b16 %v869
      %v1295 = vunpack.c.h.b16 %v869
      %v1296 = vunpack.c.l.b16 %v870
      %v1297 = vunpack.c.h.b16 %v870
      %v1298 = vunpack.c.l.b16 %v871
      %v1299 = vunpack.c.h.b16 %v871
      %v1300 = vpack.c.b16 %v1270, %v1268
      %v1301 = vpack.c.b16 %v1271, %v1269
      %v1302 = vpack.c.b16 %v1274, %v1272
      %v1303 = vpack.c.b16 %v1275, %v1273
      %v1304 = vpack.c.b16 %v1278, %v1276
      %v1305 = vpack.c.b16 %v1279, %v1277
      %v1306 = vpack.c.b16 %v1282, %v1280
      %v1307 = vpack.c.b16 %v1283, %v1281
      %v1308 = vpack.c.b16 %v1286, %v1284
      %v1309 = vpack.c.b16 %v1287, %v1285
      %v1310 = vpack.c.b16 %v1290, %v1288
      %v1311 = vpack.c.b16 %v1291, %v1289
      %v1312 = vpack.c.b16 %v1294, %v1292
      %v1313 = vpack.c.b16 %v1295, %v1293
      %v1314 = vpack.c.b16 %v1298, %v1296
      %v1315 = vpack.c.b16 %v1299, %v1297
      %1332 = vmatprep.subr.bf16.mxu0 %v1301
      %1333 = vmatpush1.bf16.msra.mxu0 %v1300
      %1334 = vmatprep.subr.bf16.mxu0 %v1303
      %1335 = vmatpush1.bf16.msra.mxu0 %v1302
      %1336 = vmatprep.subr.bf16.mxu0 %v1305
      %1337 = vmatpush1.bf16.msra.mxu0 %v1304
      %1338 = vmatprep.subr.bf16.mxu0 %v1307
      %1339 = vmatpush1.bf16.msra.mxu0 %v1306
      %1340 = vmatprep.subr.bf16.mxu0 %v1309
      %1341 = vmatpush1.bf16.msra.mxu0 %v1308
      %1342 = vmatprep.subr.bf16.mxu0 %v1311
      %1343 = vmatpush1.bf16.msra.mxu0 %v1310
      %1344 = vmatprep.subr.bf16.mxu0 %v1313
      %1345 = vmatpush1.bf16.msra.mxu0 %v1312
      %1346 = vmatprep.subr.bf16.mxu0 %v1315
      %1347 = vmatpush1.bf16.msra.mxu0 %v1314
      %1348 = vmatprep.subr.bf16.mxu0 0
      %1349 = vmatpush1.bf16.msra.mxu0 0
      %1350 = vmatprep.subr.bf16.mxu0 0
      %1351 = vmatpush1.bf16.msra.mxu0 0
      %1352 = vmatprep.subr.bf16.mxu0 0
      %1353 = vmatpush1.bf16.msra.mxu0 0
      %1354 = vmatprep.subr.bf16.mxu0 0
      %1355 = vmatpush1.bf16.msra.mxu0 0
      %1356 = vmatprep.subr.bf16.mxu0 0
      %1357 = vmatpush1.bf16.msra.mxu0 0
      %1358 = vmatprep.subr.bf16.mxu0 0
      %1359 = vmatpush1.bf16.msra.mxu0 0
      %1360 = vmatprep.subr.bf16.mxu0 0
      %1361 = vmatpush1.bf16.msra.mxu0 0
      %1362 = vmatprep.subr.bf16.mxu0 0
      %1363 = vmatpush1.bf16.msra.mxu0 0
      %1364 = vmatprep.mubr.bf16.mxu0 0
      %1365 = vmatmul.mubr.bf16.gmra.mrb[0].mxu0 %v848
      %v1366 = vpop.f32.mrb[0].mxu0
      %v1367 = vadd.f32 %v1174, %v1366
      %v1368 = vpop.f32.mrb[0].mxu0
      %v1369 = vadd.f32 %v1176, %v1368
      %v1370 = vpop.f32.mrb[0].mxu0
      %v1371 = vadd.f32 %v1178, %v1370
      %v1372 = vpop.f32.mrb[0].mxu0
      %v1373 = vadd.f32 %v1180, %v1372
      %1374 = vmatprep.mubr.bf16.mxu0 0
      %1375 = vmatmul.mubr.bf16.gmra.mrb[0].mxu0 %v849
      %v1376 = vpop.f32.mrb[0].mxu0
      %v1377 = vadd.f32 %v1184, %v1376
      %v1378 = vpop.f32.mrb[0].mxu0
      %v1379 = vadd.f32 %v1186, %v1378
      %v1380 = vpop.f32.mrb[0].mxu0
      %v1381 = vadd.f32 %v1188, %v1380
      %v1382 = vpop.f32.mrb[0].mxu0
      %v1383 = vadd.f32 %v1190, %v1382
      %1384 = vmatprep.mubr.bf16.mxu0 0
      %1385 = vmatmul.mubr.bf16.gmra.mrb[0].mxu0 %v850
      %v1386 = vpop.f32.mrb[0].mxu0
      %v1387 = vadd.f32 %v1194, %v1386
      %v1388 = vpop.f32.mrb[0].mxu0
      %v1389 = vadd.f32 %v1196, %v1388
      %v1390 = vpop.f32.mrb[0].mxu0
      %v1391 = vadd.f32 %v1198, %v1390
      %v1392 = vpop.f32.mrb[0].mxu0
      %v1393 = vadd.f32 %v1200, %v1392
      %1394 = vmatprep.mubr.bf16.mxu0 0
      %1395 = vmatmul.mubr.bf16.gmra.mrb[0].mxu0 %v851
      %v1396 = vpop.f32.mrb[0].mxu0
      %v1397 = vadd.f32 %v1204, %v1396
      %v1398 = vpop.f32.mrb[0].mxu0
      %v1399 = vadd.f32 %v1206, %v1398
      %v1400 = vpop.f32.mrb[0].mxu0
      %v1401 = vadd.f32 %v1208, %v1400
      %v1402 = vpop.f32.mrb[0].mxu0
      %v1403 = vadd.f32 %v1210, %v1402
      %1404 = vmatprep.mubr.bf16.mxu0 0
      %1405 = vmatmul.mubr.bf16.gmra.mrb[0].mxu0 %v852
      %v1406 = vpop.f32.mrb[0].mxu0
      %v1407 = vadd.f32 %v1214, %v1406
      %v1408 = vpop.f32.mrb[0].mxu0
      %v1409 = vadd.f32 %v1216, %v1408
      %v1410 = vpop.f32.mrb[0].mxu0
      %v1411 = vadd.f32 %v1218, %v1410
      %v1412 = vpop.f32.mrb[0].mxu0
      %v1413 = vadd.f32 %v1220, %v1412
      %1414 = vmatprep.mubr.bf16.mxu0 0
      %1415 = vmatmul.mubr.bf16.gmra.mrb[0].mxu0 %v853
      %v1416 = vpop.f32.mrb[0].mxu0
      %v1417 = vadd.f32 %v1224, %v1416
      %v1418 = vpop.f32.mrb[0].mxu0
      %v1419 = vadd.f32 %v1226, %v1418
      %v1420 = vpop.f32.mrb[0].mxu0
      %v1421 = vadd.f32 %v1228, %v1420
      %v1422 = vpop.f32.mrb[0].mxu0
      %v1423 = vadd.f32 %v1230, %v1422
      %1424 = vmatprep.mubr.bf16.mxu0 0
      %1425 = vmatmul.mubr.bf16.gmra.mrb[0].mxu0 %v854
      %v1426 = vpop.f32.mrb[0].mxu0
      %v1427 = vadd.f32 %v1234, %v1426
      %v1428 = vpop.f32.mrb[0].mxu0
      %v1429 = vadd.f32 %v1236, %v1428
      %v1430 = vpop.f32.mrb[0].mxu0
      %v1431 = vadd.f32 %v1238, %v1430
      %v1432 = vpop.f32.mrb[0].mxu0
      %v1433 = vadd.f32 %v1240, %v1432
      %1434 = vmatprep.mubr.bf16.mxu0 0
      %1435 = vmatmul.mubr.bf16.gmra.mrb[0].mxu0 %v855
      %v1436 = vpop.f32.mrb[0].mxu0
      %v1437 = vadd.f32 %v1244, %v1436
      %v1438 = vpop.f32.mrb[0].mxu0
      %v1439 = vadd.f32 %v1246, %v1438
      %v1440 = vpop.f32.mrb[0].mxu0
      %v1441 = vadd.f32 %v1248, %v1440
      %v1442 = vpop.f32.mrb[0].mxu0
      %v1443 = vadd.f32 %v1250, %v1442
      %1444 = vdwg.mxu0
      %s1445 = scalar_lea.vmem %s3, 128
      %v1446 = vld [vmem:[%s1445] sm:$0xf]
      %v1447 = vld [vmem:[%s1445 + $0x4] sm:$0xf]
      %v1448 = vld [vmem:[%s1445 + $0x8] sm:$0xf]
      %v1449 = vld [vmem:[%s1445 + $0xc] sm:$0xf]
      %v1450 = vld [vmem:[%s1445 + $0x10] sm:$0xf]
      %v1451 = vld [vmem:[%s1445 + $0x14] sm:$0xf]
      %v1452 = vld [vmem:[%s1445 + $0x18] sm:$0xf]
      %v1453 = vld [vmem:[%s1445 + $0x1c] sm:$0xf]
      %v1454 = vld [vmem:[%s1445 + $0x20] sm:$0xf]
      %v1455 = vld [vmem:[%s1445 + $0x24] sm:$0xf]
      %v1456 = vld [vmem:[%s1445 + $0x28] sm:$0xf]
      %v1457 = vld [vmem:[%s1445 + $0x2c] sm:$0xf]
      %v1458 = vld [vmem:[%s1445 + $0x30] sm:$0xf]
      %v1459 = vld [vmem:[%s1445 + $0x34] sm:$0xf]
      %v1460 = vld [vmem:[%s1445 + $0x38] sm:$0xf]
      %v1461 = vld [vmem:[%s1445 + $0x3c] sm:$0xf]
      %v1478 = vunpack.c.l.b16 %v1446
      %v1479 = vunpack.c.l.b16 %v1447
      %v1480 = vunpack.c.l.b16 %v1448
      %v1481 = vunpack.c.l.b16 %v1449
      %v1482 = vunpack.c.l.b16 %v1450
      %v1483 = vunpack.c.l.b16 %v1451
      %v1484 = vunpack.c.l.b16 %v1452
      %v1485 = vunpack.c.l.b16 %v1453
      %v1486 = vunpack.c.l.b16 %v1454
      %v1487 = vunpack.c.l.b16 %v1455
      %v1488 = vunpack.c.l.b16 %v1456
      %v1489 = vunpack.c.l.b16 %v1457
      %v1490 = vunpack.c.l.b16 %v1458
      %v1491 = vunpack.c.l.b16 %v1459
      %v1492 = vunpack.c.l.b16 %v1460
      %v1493 = vunpack.c.l.b16 %v1461
      %v1494 = vpack.c.b16 %v1479, %v1478
      %v1495 = vpack.c.b16 %v1481, %v1480
      %v1496 = vpack.c.b16 %v1483, %v1482
      %v1497 = vpack.c.b16 %v1485, %v1484
      %v1498 = vpack.c.b16 %v1487, %v1486
      %v1499 = vpack.c.b16 %v1489, %v1488
      %v1500 = vpack.c.b16 %v1491, %v1490
      %v1501 = vpack.c.b16 %v1493, %v1492
      %1510 = vmatprep.subr.bf16.mxu0 0
      %1511 = vmatpush1.bf16.msra.mxu0 %v679
      %1512 = vmatprep.subr.bf16.mxu0 0
      %1513 = vmatpush1.bf16.msra.mxu0 %v680
      %1514 = vmatprep.subr.bf16.mxu0 0
      %1515 = vmatpush1.bf16.msra.mxu0 %v681
      %1516 = vmatprep.subr.bf16.mxu0 0
      %1517 = vmatpush1.bf16.msra.mxu0 %v682
      %1518 = vmatprep.subr.bf16.mxu0 0
      %1519 = vmatpush1.bf16.msra.mxu0 %v683
      %1520 = vmatprep.subr.bf16.mxu0 0
      %1521 = vmatpush1.bf16.msra.mxu0 %v684
      %1522 = vmatprep.subr.bf16.mxu0 0
      %1523 = vmatpush1.bf16.msra.mxu0 %v685
      %1524 = vmatprep.subr.bf16.mxu0 0
      %1525 = vmatpush1.bf16.msra.mxu0 %v686
      %1526 = vmatprep.subr.bf16.mxu0 0
      %1527 = vmatpush1.bf16.msra.mxu0 0
      %1528 = vmatprep.subr.bf16.mxu0 0
      %1529 = vmatpush1.bf16.msra.mxu0 0
      %1530 = vmatprep.subr.bf16.mxu0 0
      %1531 = vmatpush1.bf16.msra.mxu0 0
      %1532 = vmatprep.subr.bf16.mxu0 0
      %1533 = vmatpush1.bf16.msra.mxu0 0
      %1534 = vmatprep.subr.bf16.mxu0 0
      %1535 = vmatpush1.bf16.msra.mxu0 0
      %1536 = vmatprep.subr.bf16.mxu0 0
      %1537 = vmatpush1.bf16.msra.mxu0 0
      %1538 = vmatprep.subr.bf16.mxu0 0
      %1539 = vmatpush1.bf16.msra.mxu0 0
      %1540 = vmatprep.subr.bf16.mxu0 0
      %1541 = vmatpush1.bf16.msra.mxu0 0
      %1542 = vmatprep.mubr.bf16.mxu0 0
      %1543 = vmatmul.mubr.bf16.gmra.mrb[0].mxu0 %v1494
      %v1544 = vpop.f32.mrb[0].mxu0
      %v1545 = vadd.f32 0.0, %v1544
      %v1546 = vpop.f32.mrb[0].mxu0
      %v1547 = vpop.f32.mrb[0].mxu0
      %v1548 = vadd.f32 0.0, %v1547
      %v1549 = vpop.f32.mrb[0].mxu0
      %1550 = vmatprep.mubr.bf16.mxu0 0
      %1551 = vmatmul.mubr.bf16.gmra.mrb[0].mxu0 %v1495
      %v1552 = vpop.f32.mrb[0].mxu0
      %v1553 = vadd.f32 0.0, %v1552
      %v1554 = vpop.f32.mrb[0].mxu0
      %v1555 = vpop.f32.mrb[0].mxu0
      %v1556 = vadd.f32 0.0, %v1555
      %v1557 = vpop.f32.mrb[0].mxu0
      %1558 = vmatprep.mubr.bf16.mxu0 0
      %1559 = vmatmul.mubr.bf16.gmra.mrb[0].mxu0 %v1496
      %v1560 = vpop.f32.mrb[0].mxu0
      %v1561 = vadd.f32 0.0, %v1560
      %v1562 = vpop.f32.mrb[0].mxu0
      %v1563 = vpop.f32.mrb[0].mxu0
      %v1564 = vadd.f32 0.0, %v1563
      %v1565 = vpop.f32.mrb[0].mxu0
      %1566 = vmatprep.mubr.bf16.mxu0 0
      %1567 = vmatmul.mubr.bf16.gmra.mrb[0].mxu0 %v1497
      %v1568 = vpop.f32.mrb[0].mxu0
      %v1569 = vadd.f32 0.0, %v1568
      %v1570 = vpop.f32.mrb[0].mxu0
      %v1571 = vpop.f32.mrb[0].mxu0
      %v1572 = vadd.f32 0.0, %v1571
      %v1573 = vpop.f32.mrb[0].mxu0
      %1574 = vmatprep.mubr.bf16.mxu0 0
      %1575 = vmatmul.mubr.bf16.gmra.mrb[0].mxu0 %v1498
      %v1576 = vpop.f32.mrb[0].mxu0
      %v1577 = vadd.f32 0.0, %v1576
      %v1578 = vpop.f32.mrb[0].mxu0
      %v1579 = vpop.f32.mrb[0].mxu0
      %v1580 = vadd.f32 0.0, %v1579
      %v1581 = vpop.f32.mrb[0].mxu0
      %1582 = vmatprep.mubr.bf16.mxu0 0
      %1583 = vmatmul.mubr.bf16.gmra.mrb[0].mxu0 %v1499
      %v1584 = vpop.f32.mrb[0].mxu0
      %v1585 = vadd.f32 0.0, %v1584
      %v1586 = vpop.f32.mrb[0].mxu0
      %v1587 = vpop.f32.mrb[0].mxu0
      %v1588 = vadd.f32 0.0, %v1587
      %v1589 = vpop.f32.mrb[0].mxu0
      %1590 = vmatprep.mubr.bf16.mxu0 0
      %1591 = vmatmul.mubr.bf16.gmra.mrb[0].mxu0 %v1500
      %v1592 = vpop.f32.mrb[0].mxu0
      %v1593 = vadd.f32 0.0, %v1592
      %v1594 = vpop.f32.mrb[0].mxu0
      %v1595 = vpop.f32.mrb[0].mxu0
      %v1596 = vadd.f32 0.0, %v1595
      %v1597 = vpop.f32.mrb[0].mxu0
      %1598 = vmatprep.mubr.bf16.mxu0 0
      %1599 = vmatmul.mubr.bf16.gmra.mrb[0].mxu0 %v1501
      %v1600 = vpop.f32.mrb[0].mxu0
      %v1601 = vadd.f32 0.0, %v1600
      %v1602 = vpop.f32.mrb[0].mxu0
      %v1603 = vpop.f32.mrb[0].mxu0
      %v1604 = vadd.f32 0.0, %v1603
      %v1605 = vpop.f32.mrb[0].mxu0
      %1606 = vdwg.mxu0
      %v1607 = vpack.c.bf16 %v1548, %v1545
      %v1608 = vpack.c.bf16 %v1556, %v1553
      %v1609 = vpack.c.bf16 %v1564, %v1561
      %v1610 = vpack.c.bf16 %v1572, %v1569
      %v1611 = vpack.c.bf16 %v1580, %v1577
      %v1612 = vpack.c.bf16 %v1588, %v1585
      %v1613 = vpack.c.bf16 %v1596, %v1593
      %v1614 = vpack.c.bf16 %v1604, %v1601
      %s1615 = scalar_lea.vmem %s4, 256
      %v1616 = vld [vmem:[%s1615] sm:$0xff]
      %v1617 = vld [vmem:[%s1615 + $0x8] sm:$0xff]
      %v1618 = vld [vmem:[%s1615 + $0x10] sm:$0xff]
      %v1619 = vld [vmem:[%s1615 + $0x18] sm:$0xff]
      %v1620 = vld [vmem:[%s1615 + $0x20] sm:$0xff]
      %v1621 = vld [vmem:[%s1615 + $0x28] sm:$0xff]
      %v1622 = vld [vmem:[%s1615 + $0x30] sm:$0xff]
      %v1623 = vld [vmem:[%s1615 + $0x38] sm:$0xff]
      %v1624 = vld [vmem:[%s1615 + $0x40] sm:$0xff]
      %v1625 = vld [vmem:[%s1615 + $0x48] sm:$0xff]
      %v1626 = vld [vmem:[%s1615 + $0x50] sm:$0xff]
      %v1627 = vld [vmem:[%s1615 + $0x58] sm:$0xff]
      %v1628 = vld [vmem:[%s1615 + $0x60] sm:$0xff]
      %v1629 = vld [vmem:[%s1615 + $0x68] sm:$0xff]
      %v1630 = vld [vmem:[%s1615 + $0x70] sm:$0xff]
      %v1631 = vld [vmem:[%s1615 + $0x78] sm:$0xff]
      %v1648 = vunpack.c.l.b16 %v1616
      %v1649 = vunpack.c.h.b16 %v1616
      %v1650 = vunpack.c.l.b16 %v1617
      %v1651 = vunpack.c.h.b16 %v1617
      %v1652 = vunpack.c.l.b16 %v1618
      %v1653 = vunpack.c.h.b16 %v1618
      %v1654 = vunpack.c.l.b16 %v1619
      %v1655 = vunpack.c.h.b16 %v1619
      %v1656 = vunpack.c.l.b16 %v1620
      %v1657 = vunpack.c.h.b16 %v1620
      %v1658 = vunpack.c.l.b16 %v1621
      %v1659 = vunpack.c.h.b16 %v1621
      %v1660 = vunpack.c.l.b16 %v1622
      %v1661 = vunpack.c.h.b16 %v1622
      %v1662 = vunpack.c.l.b16 %v1623
      %v1663 = vunpack.c.h.b16 %v1623
      %v1664 = vunpack.c.l.b16 %v1624
      %v1665 = vunpack.c.h.b16 %v1624
      %v1666 = vunpack.c.l.b16 %v1625
      %v1667 = vunpack.c.h.b16 %v1625
      %v1668 = vunpack.c.l.b16 %v1626
      %v1669 = vunpack.c.h.b16 %v1626
      %v1670 = vunpack.c.l.b16 %v1627
      %v1671 = vunpack.c.h.b16 %v1627
      %v1672 = vunpack.c.l.b16 %v1628
      %v1673 = vunpack.c.h.b16 %v1628
      %v1674 = vunpack.c.l.b16 %v1629
      %v1675 = vunpack.c.h.b16 %v1629
      %v1676 = vunpack.c.l.b16 %v1630
      %v1677 = vunpack.c.h.b16 %v1630
      %v1678 = vunpack.c.l.b16 %v1631
      %v1679 = vunpack.c.h.b16 %v1631
      %v1680 = vpack.c.b16 %v1650, %v1648
      %v1681 = vpack.c.b16 %v1651, %v1649
      %v1682 = vpack.c.b16 %v1654, %v1652
      %v1683 = vpack.c.b16 %v1655, %v1653
      %v1684 = vpack.c.b16 %v1658, %v1656
      %v1685 = vpack.c.b16 %v1659, %v1657
      %v1686 = vpack.c.b16 %v1662, %v1660
      %v1687 = vpack.c.b16 %v1663, %v1661
      %v1688 = vpack.c.b16 %v1666, %v1664
      %v1689 = vpack.c.b16 %v1667, %v1665
      %v1690 = vpack.c.b16 %v1670, %v1668
      %v1691 = vpack.c.b16 %v1671, %v1669
      %v1692 = vpack.c.b16 %v1674, %v1672
      %v1693 = vpack.c.b16 %v1675, %v1673
      %v1694 = vpack.c.b16 %v1678, %v1676
      %v1695 = vpack.c.b16 %v1679, %v1677
      %1712 = vmatprep.subr.bf16.mxu0 %v1681
      %1713 = vmatpush1.bf16.msra.mxu0 %v1680
      %1714 = vmatprep.subr.bf16.mxu0 %v1683
      %1715 = vmatpush1.bf16.msra.mxu0 %v1682
      %1716 = vmatprep.subr.bf16.mxu0 %v1685
      %1717 = vmatpush1.bf16.msra.mxu0 %v1684
      %1718 = vmatprep.subr.bf16.mxu0 %v1687
      %1719 = vmatpush1.bf16.msra.mxu0 %v1686
      %1720 = vmatprep.subr.bf16.mxu0 %v1689
      %1721 = vmatpush1.bf16.msra.mxu0 %v1688
      %1722 = vmatprep.subr.bf16.mxu0 %v1691
      %1723 = vmatpush1.bf16.msra.mxu0 %v1690
      %1724 = vmatprep.subr.bf16.mxu0 %v1693
      %1725 = vmatpush1.bf16.msra.mxu0 %v1692
      %1726 = vmatprep.subr.bf16.mxu0 %v1695
      %1727 = vmatpush1.bf16.msra.mxu0 %v1694
      %1728 = vmatprep.subr.bf16.mxu0 0
      %1729 = vmatpush1.bf16.msra.mxu0 0
      %1730 = vmatprep.subr.bf16.mxu0 0
      %1731 = vmatpush1.bf16.msra.mxu0 0
      %1732 = vmatprep.subr.bf16.mxu0 0
      %1733 = vmatpush1.bf16.msra.mxu0 0
      %1734 = vmatprep.subr.bf16.mxu0 0
      %1735 = vmatpush1.bf16.msra.mxu0 0
      %1736 = vmatprep.subr.bf16.mxu0 0
      %1737 = vmatpush1.bf16.msra.mxu0 0
      %1738 = vmatprep.subr.bf16.mxu0 0
      %1739 = vmatpush1.bf16.msra.mxu0 0
      %1740 = vmatprep.subr.bf16.mxu0 0
      %1741 = vmatpush1.bf16.msra.mxu0 0
      %1742 = vmatprep.subr.bf16.mxu0 0
      %1743 = vmatpush1.bf16.msra.mxu0 0
      %1744 = vmatprep.mubr.bf16.mxu0 0
      %1745 = vmatmul.mubr.bf16.gmra.mrb[0].mxu0 %v1607
      %v1746 = vpop.f32.mrb[0].mxu0
      %v1747 = vadd.f32 0.0, %v1746
      %v1748 = vpop.f32.mrb[0].mxu0
      %v1749 = vadd.f32 0.0, %v1748
      %v1750 = vpop.f32.mrb[0].mxu0
      %v1751 = vadd.f32 0.0, %v1750
      %v1752 = vpop.f32.mrb[0].mxu0
      %v1753 = vadd.f32 0.0, %v1752
      %1754 = vmatprep.mubr.bf16.mxu0 0
      %1755 = vmatmul.mubr.bf16.gmra.mrb[0].mxu0 %v1608
      %v1756 = vpop.f32.mrb[0].mxu0
      %v1757 = vadd.f32 0.0, %v1756
      %v1758 = vpop.f32.mrb[0].mxu0
      %v1759 = vadd.f32 0.0, %v1758
      %v1760 = vpop.f32.mrb[0].mxu0
      %v1761 = vadd.f32 0.0, %v1760
      %v1762 = vpop.f32.mrb[0].mxu0
      %v1763 = vadd.f32 0.0, %v1762
      %1764 = vmatprep.mubr.bf16.mxu0 0
      %1765 = vmatmul.mubr.bf16.gmra.mrb[0].mxu0 %v1609
      %v1766 = vpop.f32.mrb[0].mxu0
      %v1767 = vadd.f32 0.0, %v1766
      %v1768 = vpop.f32.mrb[0].mxu0
      %v1769 = vadd.f32 0.0, %v1768
      %v1770 = vpop.f32.mrb[0].mxu0
      %v1771 = vadd.f32 0.0, %v1770
      %v1772 = vpop.f32.mrb[0].mxu0
      %v1773 = vadd.f32 0.0, %v1772
      %1774 = vmatprep.mubr.bf16.mxu0 0
      %1775 = vmatmul.mubr.bf16.gmra.mrb[0].mxu0 %v1610
      %v1776 = vpop.f32.mrb[0].mxu0
      %v1777 = vadd.f32 0.0, %v1776
      %v1778 = vpop.f32.mrb[0].mxu0
      %v1779 = vadd.f32 0.0, %v1778
      %v1780 = vpop.f32.mrb[0].mxu0
      %v1781 = vadd.f32 0.0, %v1780
      %v1782 = vpop.f32.mrb[0].mxu0
      %v1783 = vadd.f32 0.0, %v1782
      %1784 = vmatprep.mubr.bf16.mxu0 0
      %1785 = vmatmul.mubr.bf16.gmra.mrb[0].mxu0 %v1611
      %v1786 = vpop.f32.mrb[0].mxu0
      %v1787 = vadd.f32 0.0, %v1786
      %v1788 = vpop.f32.mrb[0].mxu0
      %v1789 = vadd.f32 0.0, %v1788
      %v1790 = vpop.f32.mrb[0].mxu0
      %v1791 = vadd.f32 0.0, %v1790
      %v1792 = vpop.f32.mrb[0].mxu0
      %v1793 = vadd.f32 0.0, %v1792
      %1794 = vmatprep.mubr.bf16.mxu0 0
      %1795 = vmatmul.mubr.bf16.gmra.mrb[0].mxu0 %v1612
      %v1796 = vpop.f32.mrb[0].mxu0
      %v1797 = vadd.f32 0.0, %v1796
      %v1798 = vpop.f32.mrb[0].mxu0
      %v1799 = vadd.f32 0.0, %v1798
      %v1800 = vpop.f32.mrb[0].mxu0
      %v1801 = vadd.f32 0.0, %v1800
      %v1802 = vpop.f32.mrb[0].mxu0
      %v1803 = vadd.f32 0.0, %v1802
      %1804 = vmatprep.mubr.bf16.mxu0 0
      %1805 = vmatmul.mubr.bf16.gmra.mrb[0].mxu0 %v1613
      %v1806 = vpop.f32.mrb[0].mxu0
      %v1807 = vadd.f32 0.0, %v1806
      %v1808 = vpop.f32.mrb[0].mxu0
      %v1809 = vadd.f32 0.0, %v1808
      %v1810 = vpop.f32.mrb[0].mxu0
      %v1811 = vadd.f32 0.0, %v1810
      %v1812 = vpop.f32.mrb[0].mxu0
      %v1813 = vadd.f32 0.0, %v1812
      %1814 = vmatprep.mubr.bf16.mxu0 0
      %1815 = vmatmul.mubr.bf16.gmra.mrb[0].mxu0 %v1614
      %v1816 = vpop.f32.mrb[0].mxu0
      %v1817 = vadd.f32 0.0, %v1816
      %v1818 = vpop.f32.mrb[0].mxu0
      %v1819 = vadd.f32 0.0, %v1818
      %v1820 = vpop.f32.mrb[0].mxu0
      %v1821 = vadd.f32 0.0, %v1820
      %v1822 = vpop.f32.mrb[0].mxu0
      %v1823 = vadd.f32 0.0, %v1822
      %1824 = vdwg.mxu0
      %v1825 = vadd.f32 %v1367, %v1747
      %v1826 = vadd.f32 %v1369, %v1749
      %v1827 = vadd.f32 %v1371, %v1751
      %v1828 = vadd.f32 %v1373, %v1753
      %v1829 = vadd.f32 %v1377, %v1757
      %v1830 = vadd.f32 %v1379, %v1759
      %v1831 = vadd.f32 %v1381, %v1761
      %v1832 = vadd.f32 %v1383, %v1763
      %v1833 = vadd.f32 %v1387, %v1767
      %v1834 = vadd.f32 %v1389, %v1769
      %v1835 = vadd.f32 %v1391, %v1771
      %v1836 = vadd.f32 %v1393, %v1773
      %v1837 = vadd.f32 %v1397, %v1777
      %v1838 = vadd.f32 %v1399, %v1779
      %v1839 = vadd.f32 %v1401, %v1781
      %v1840 = vadd.f32 %v1403, %v1783
      %v1841 = vadd.f32 %v1407, %v1787
      %v1842 = vadd.f32 %v1409, %v1789
      %v1843 = vadd.f32 %v1411, %v1791
      %v1844 = vadd.f32 %v1413, %v1793
      %v1845 = vadd.f32 %v1417, %v1797
      %v1846 = vadd.f32 %v1419, %v1799
      %v1847 = vadd.f32 %v1421, %v1801
      %v1848 = vadd.f32 %v1423, %v1803
      %v1849 = vadd.f32 %v1427, %v1807
      %v1850 = vadd.f32 %v1429, %v1809
      %v1851 = vadd.f32 %v1431, %v1811
      %v1852 = vadd.f32 %v1433, %v1813
      %v1853 = vadd.f32 %v1437, %v1817
      %v1854 = vadd.f32 %v1439, %v1819
      %v1855 = vadd.f32 %v1441, %v1821
      %v1856 = vadd.f32 %v1443, %v1823
      %s1857 = scalar_lea.vmem %s3, 192
      %v1858 = vld [vmem:[%s1857] sm:$0xf]
      %v1859 = vld [vmem:[%s1857 + $0x4] sm:$0xf]
      %v1860 = vld [vmem:[%s1857 + $0x8] sm:$0xf]
      %v1861 = vld [vmem:[%s1857 + $0xc] sm:$0xf]
      %v1862 = vld [vmem:[%s1857 + $0x10] sm:$0xf]
      %v1863 = vld [vmem:[%s1857 + $0x14] sm:$0xf]
      %v1864 = vld [vmem:[%s1857 + $0x18] sm:$0xf]
      %v1865 = vld [vmem:[%s1857 + $0x1c] sm:$0xf]
      %v1866 = vld [vmem:[%s1857 + $0x20] sm:$0xf]
      %v1867 = vld [vmem:[%s1857 + $0x24] sm:$0xf]
      %v1868 = vld [vmem:[%s1857 + $0x28] sm:$0xf]
      %v1869 = vld [vmem:[%s1857 + $0x2c] sm:$0xf]
      %v1870 = vld [vmem:[%s1857 + $0x30] sm:$0xf]
      %v1871 = vld [vmem:[%s1857 + $0x34] sm:$0xf]
      %v1872 = vld [vmem:[%s1857 + $0x38] sm:$0xf]
      %v1873 = vld [vmem:[%s1857 + $0x3c] sm:$0xf]
      %v1890 = vunpack.c.l.b16 %v1858
      %v1891 = vunpack.c.l.b16 %v1859
      %v1892 = vunpack.c.l.b16 %v1860
      %v1893 = vunpack.c.l.b16 %v1861
      %v1894 = vunpack.c.l.b16 %v1862
      %v1895 = vunpack.c.l.b16 %v1863
      %v1896 = vunpack.c.l.b16 %v1864
      %v1897 = vunpack.c.l.b16 %v1865
      %v1898 = vunpack.c.l.b16 %v1866
      %v1899 = vunpack.c.l.b16 %v1867
      %v1900 = vunpack.c.l.b16 %v1868
      %v1901 = vunpack.c.l.b16 %v1869
      %v1902 = vunpack.c.l.b16 %v1870
      %v1903 = vunpack.c.l.b16 %v1871
      %v1904 = vunpack.c.l.b16 %v1872
      %v1905 = vunpack.c.l.b16 %v1873
      %v1906 = vpack.c.b16 %v1891, %v1890
      %v1907 = vpack.c.b16 %v1893, %v1892
      %v1908 = vpack.c.b16 %v1895, %v1894
      %v1909 = vpack.c.b16 %v1897, %v1896
      %v1910 = vpack.c.b16 %v1899, %v1898
      %v1911 = vpack.c.b16 %v1901, %v1900
      %v1912 = vpack.c.b16 %v1903, %v1902
      %v1913 = vpack.c.b16 %v1905, %v1904
      %1922 = vmatprep.subr.bf16.mxu0 0
      %1923 = vmatpush1.bf16.msra.mxu0 %v679
      %1924 = vmatprep.subr.bf16.mxu0 0
      %1925 = vmatpush1.bf16.msra.mxu0 %v680
      %1926 = vmatprep.subr.bf16.mxu0 0
      %1927 = vmatpush1.bf16.msra.mxu0 %v681
      %1928 = vmatprep.subr.bf16.mxu0 0
      %1929 = vmatpush1.bf16.msra.mxu0 %v682
      %1930 = vmatprep.subr.bf16.mxu0 0
      %1931 = vmatpush1.bf16.msra.mxu0 %v683
      %1932 = vmatprep.subr.bf16.mxu0 0
      %1933 = vmatpush1.bf16.msra.mxu0 %v684
      %1934 = vmatprep.subr.bf16.mxu0 0
      %1935 = vmatpush1.bf16.msra.mxu0 %v685
      %1936 = vmatprep.subr.bf16.mxu0 0
      %1937 = vmatpush1.bf16.msra.mxu0 %v686
      %1938 = vmatprep.subr.bf16.mxu0 0
      %1939 = vmatpush1.bf16.msra.mxu0 0
      %1940 = vmatprep.subr.bf16.mxu0 0
      %1941 = vmatpush1.bf16.msra.mxu0 0
      %1942 = vmatprep.subr.bf16.mxu0 0
      %1943 = vmatpush1.bf16.msra.mxu0 0
      %1944 = vmatprep.subr.bf16.mxu0 0
      %1945 = vmatpush1.bf16.msra.mxu0 0
      %1946 = vmatprep.subr.bf16.mxu0 0
      %1947 = vmatpush1.bf16.msra.mxu0 0
      %1948 = vmatprep.subr.bf16.mxu0 0
      %1949 = vmatpush1.bf16.msra.mxu0 0
      %1950 = vmatprep.subr.bf16.mxu0 0
      %1951 = vmatpush1.bf16.msra.mxu0 0
      %1952 = vmatprep.subr.bf16.mxu0 0
      %1953 = vmatpush1.bf16.msra.mxu0 0
      %1954 = vmatprep.mubr.bf16.mxu0 0
      %1955 = vmatmul.mubr.bf16.gmra.mrb[0].mxu0 %v1906
      %v1956 = vpop.f32.mrb[0].mxu0
      %v1957 = vadd.f32 0.0, %v1956
      %v1958 = vpop.f32.mrb[0].mxu0
      %v1959 = vpop.f32.mrb[0].mxu0
      %v1960 = vadd.f32 0.0, %v1959
      %v1961 = vpop.f32.mrb[0].mxu0
      %1962 = vmatprep.mubr.bf16.mxu0 0
      %1963 = vmatmul.mubr.bf16.gmra.mrb[0].mxu0 %v1907
      %v1964 = vpop.f32.mrb[0].mxu0
      %v1965 = vadd.f32 0.0, %v1964
      %v1966 = vpop.f32.mrb[0].mxu0
      %v1967 = vpop.f32.mrb[0].mxu0
      %v1968 = vadd.f32 0.0, %v1967
      %v1969 = vpop.f32.mrb[0].mxu0
      %1970 = vmatprep.mubr.bf16.mxu0 0
      %1971 = vmatmul.mubr.bf16.gmra.mrb[0].mxu0 %v1908
      %v1972 = vpop.f32.mrb[0].mxu0
      %v1973 = vadd.f32 0.0, %v1972
      %v1974 = vpop.f32.mrb[0].mxu0
      %v1975 = vpop.f32.mrb[0].mxu0
      %v1976 = vadd.f32 0.0, %v1975
      %v1977 = vpop.f32.mrb[0].mxu0
      %1978 = vmatprep.mubr.bf16.mxu0 0
      %1979 = vmatmul.mubr.bf16.gmra.mrb[0].mxu0 %v1909
      %v1980 = vpop.f32.mrb[0].mxu0
      %v1981 = vadd.f32 0.0, %v1980
      %v1982 = vpop.f32.mrb[0].mxu0
      %v1983 = vpop.f32.mrb[0].mxu0
      %v1984 = vadd.f32 0.0, %v1983
      %v1985 = vpop.f32.mrb[0].mxu0
      %1986 = vmatprep.mubr.bf16.mxu0 0
      %1987 = vmatmul.mubr.bf16.gmra.mrb[0].mxu0 %v1910
      %v1988 = vpop.f32.mrb[0].mxu0
      %v1989 = vadd.f32 0.0, %v1988
      %v1990 = vpop.f32.mrb[0].mxu0
      %v1991 = vpop.f32.mrb[0].mxu0
      %v1992 = vadd.f32 0.0, %v1991
      %v1993 = vpop.f32.mrb[0].mxu0
      %1994 = vmatprep.mubr.bf16.mxu0 0
      %1995 = vmatmul.mubr.bf16.gmra.mrb[0].mxu0 %v1911
      %v1996 = vpop.f32.mrb[0].mxu0
      %v1997 = vadd.f32 0.0, %v1996
      %v1998 = vpop.f32.mrb[0].mxu0
      %v1999 = vpop.f32.mrb[0].mxu0
      %v2000 = vadd.f32 0.0, %v1999
      %v2001 = vpop.f32.mrb[0].mxu0
      %2002 = vmatprep.mubr.bf16.mxu0 0
      %2003 = vmatmul.mubr.bf16.gmra.mrb[0].mxu0 %v1912
      %v2004 = vpop.f32.mrb[0].mxu0
      %v2005 = vadd.f32 0.0, %v2004
      %v2006 = vpop.f32.mrb[0].mxu0
      %v2007 = vpop.f32.mrb[0].mxu0
      %v2008 = vadd.f32 0.0, %v2007
      %v2009 = vpop.f32.mrb[0].mxu0
      %2010 = vmatprep.mubr.bf16.mxu0 0
      %2011 = vmatmul.mubr.bf16.gmra.mrb[0].mxu0 %v1913
      %v2012 = vpop.f32.mrb[0].mxu0
      %v2013 = vadd.f32 0.0, %v2012
      %v2014 = vpop.f32.mrb[0].mxu0
      %v2015 = vpop.f32.mrb[0].mxu0
      %v2016 = vadd.f32 0.0, %v2015
      %v2017 = vpop.f32.mrb[0].mxu0
      %2018 = vdwg.mxu0
      %v2019 = vpack.c.bf16 %v1960, %v1957
      %v2020 = vpack.c.bf16 %v1968, %v1965
      %v2021 = vpack.c.bf16 %v1976, %v1973
      %v2022 = vpack.c.bf16 %v1984, %v1981
      %v2023 = vpack.c.bf16 %v1992, %v1989
      %v2024 = vpack.c.bf16 %v2000, %v1997
      %v2025 = vpack.c.bf16 %v2008, %v2005
      %v2026 = vpack.c.bf16 %v2016, %v2013
      %s2027 = scalar_lea.vmem %s4, 384
      %v2028 = vld [vmem:[%s2027] sm:$0xff]
      %v2029 = vld [vmem:[%s2027 + $0x8] sm:$0xff]
      %v2030 = vld [vmem:[%s2027 + $0x10] sm:$0xff]
      %v2031 = vld [vmem:[%s2027 + $0x18] sm:$0xff]
      %v2032 = vld [vmem:[%s2027 + $0x20] sm:$0xff]
      %v2033 = vld [vmem:[%s2027 + $0x28] sm:$0xff]
      %v2034 = vld [vmem:[%s2027 + $0x30] sm:$0xff]
      %v2035 = vld [vmem:[%s2027 + $0x38] sm:$0xff]
      %v2036 = vld [vmem:[%s2027 + $0x40] sm:$0xff]
      %v2037 = vld [vmem:[%s2027 + $0x48] sm:$0xff]
      %v2038 = vld [vmem:[%s2027 + $0x50] sm:$0xff]
      %v2039 = vld [vmem:[%s2027 + $0x58] sm:$0xff]
      %v2040 = vld [vmem:[%s2027 + $0x60] sm:$0xff]
      %v2041 = vld [vmem:[%s2027 + $0x68] sm:$0xff]
      %v2042 = vld [vmem:[%s2027 + $0x70] sm:$0xff]
      %v2043 = vld [vmem:[%s2027 + $0x78] sm:$0xff]
      %v2060 = vunpack.c.l.b16 %v2028
      %v2061 = vunpack.c.h.b16 %v2028
      %v2062 = vunpack.c.l.b16 %v2029
      %v2063 = vunpack.c.h.b16 %v2029
      %v2064 = vunpack.c.l.b16 %v2030
      %v2065 = vunpack.c.h.b16 %v2030
      %v2066 = vunpack.c.l.b16 %v2031
      %v2067 = vunpack.c.h.b16 %v2031
      %v2068 = vunpack.c.l.b16 %v2032
      %v2069 = vunpack.c.h.b16 %v2032
      %v2070 = vunpack.c.l.b16 %v2033
      %v2071 = vunpack.c.h.b16 %v2033
      %v2072 = vunpack.c.l.b16 %v2034
      %v2073 = vunpack.c.h.b16 %v2034
      %v2074 = vunpack.c.l.b16 %v2035
      %v2075 = vunpack.c.h.b16 %v2035
      %v2076 = vunpack.c.l.b16 %v2036
      %v2077 = vunpack.c.h.b16 %v2036
      %v2078 = vunpack.c.l.b16 %v2037
      %v2079 = vunpack.c.h.b16 %v2037
      %v2080 = vunpack.c.l.b16 %v2038
      %v2081 = vunpack.c.h.b16 %v2038
      %v2082 = vunpack.c.l.b16 %v2039
      %v2083 = vunpack.c.h.b16 %v2039
      %v2084 = vunpack.c.l.b16 %v2040
      %v2085 = vunpack.c.h.b16 %v2040
      %v2086 = vunpack.c.l.b16 %v2041
      %v2087 = vunpack.c.h.b16 %v2041
      %v2088 = vunpack.c.l.b16 %v2042
      %v2089 = vunpack.c.h.b16 %v2042
      %v2090 = vunpack.c.l.b16 %v2043
      %v2091 = vunpack.c.h.b16 %v2043
      %v2092 = vpack.c.b16 %v2062, %v2060
      %v2093 = vpack.c.b16 %v2063, %v2061
      %v2094 = vpack.c.b16 %v2066, %v2064
      %v2095 = vpack.c.b16 %v2067, %v2065
      %v2096 = vpack.c.b16 %v2070, %v2068
      %v2097 = vpack.c.b16 %v2071, %v2069
      %v2098 = vpack.c.b16 %v2074, %v2072
      %v2099 = vpack.c.b16 %v2075, %v2073
      %v2100 = vpack.c.b16 %v2078, %v2076
      %v2101 = vpack.c.b16 %v2079, %v2077
      %v2102 = vpack.c.b16 %v2082, %v2080
      %v2103 = vpack.c.b16 %v2083, %v2081
      %v2104 = vpack.c.b16 %v2086, %v2084
      %v2105 = vpack.c.b16 %v2087, %v2085
      %v2106 = vpack.c.b16 %v2090, %v2088
      %v2107 = vpack.c.b16 %v2091, %v2089
      %2124 = vmatprep.subr.bf16.mxu0 %v2093
      %2125 = vmatpush1.bf16.msra.mxu0 %v2092
      %2126 = vmatprep.subr.bf16.mxu0 %v2095
      %2127 = vmatpush1.bf16.msra.mxu0 %v2094
      %2128 = vmatprep.subr.bf16.mxu0 %v2097
      %2129 = vmatpush1.bf16.msra.mxu0 %v2096
      %2130 = vmatprep.subr.bf16.mxu0 %v2099
      %2131 = vmatpush1.bf16.msra.mxu0 %v2098
      %2132 = vmatprep.subr.bf16.mxu0 %v2101
      %2133 = vmatpush1.bf16.msra.mxu0 %v2100
      %2134 = vmatprep.subr.bf16.mxu0 %v2103
      %2135 = vmatpush1.bf16.msra.mxu0 %v2102
      %2136 = vmatprep.subr.bf16.mxu0 %v2105
      %2137 = vmatpush1.bf16.msra.mxu0 %v2104
      %2138 = vmatprep.subr.bf16.mxu0 %v2107
      %2139 = vmatpush1.bf16.msra.mxu0 %v2106
      %2140 = vmatprep.subr.bf16.mxu0 0
      %2141 = vmatpush1.bf16.msra.mxu0 0
      %2142 = vmatprep.subr.bf16.mxu0 0
      %2143 = vmatpush1.bf16.msra.mxu0 0
      %2144 = vmatprep.subr.bf16.mxu0 0
      %2145 = vmatpush1.bf16.msra.mxu0 0
      %2146 = vmatprep.subr.bf16.mxu0 0
      %2147 = vmatpush1.bf16.msra.mxu0 0
      %2148 = vmatprep.subr.bf16.mxu0 0
      %2149 = vmatpush1.bf16.msra.mxu0 0
      %2150 = vmatprep.subr.bf16.mxu0 0
      %2151 = vmatpush1.bf16.msra.mxu0 0
      %2152 = vmatprep.subr.bf16.mxu0 0
      %2153 = vmatpush1.bf16.msra.mxu0 0
      %2154 = vmatprep.subr.bf16.mxu0 0
      %2155 = vmatpush1.bf16.msra.mxu0 0
      %2156 = vmatprep.mubr.bf16.mxu0 0
      %2157 = vmatmul.mubr.bf16.gmra.mrb[0].mxu0 %v2019
      %v2158 = vpop.f32.mrb[0].mxu0
      %v2159 = vadd.f32 0.0, %v2158
      %v2160 = vpop.f32.mrb[0].mxu0
      %v2161 = vadd.f32 0.0, %v2160
      %v2162 = vpop.f32.mrb[0].mxu0
      %v2163 = vadd.f32 0.0, %v2162
      %v2164 = vpop.f32.mrb[0].mxu0
      %v2165 = vadd.f32 0.0, %v2164
      %2166 = vmatprep.mubr.bf16.mxu0 0
      %2167 = vmatmul.mubr.bf16.gmra.mrb[0].mxu0 %v2020
      %v2168 = vpop.f32.mrb[0].mxu0
      %v2169 = vadd.f32 0.0, %v2168
      %v2170 = vpop.f32.mrb[0].mxu0
      %v2171 = vadd.f32 0.0, %v2170
      %v2172 = vpop.f32.mrb[0].mxu0
      %v2173 = vadd.f32 0.0, %v2172
      %v2174 = vpop.f32.mrb[0].mxu0
      %v2175 = vadd.f32 0.0, %v2174
      %2176 = vmatprep.mubr.bf16.mxu0 0
      %2177 = vmatmul.mubr.bf16.gmra.mrb[0].mxu0 %v2021
      %v2178 = vpop.f32.mrb[0].mxu0
      %v2179 = vadd.f32 0.0, %v2178
      %v2180 = vpop.f32.mrb[0].mxu0
      %v2181 = vadd.f32 0.0, %v2180
      %v2182 = vpop.f32.mrb[0].mxu0
      %v2183 = vadd.f32 0.0, %v2182
      %v2184 = vpop.f32.mrb[0].mxu0
      %v2185 = vadd.f32 0.0, %v2184
      %2186 = vmatprep.mubr.bf16.mxu0 0
      %2187 = vmatmul.mubr.bf16.gmra.mrb[0].mxu0 %v2022
      %v2188 = vpop.f32.mrb[0].mxu0
      %v2189 = vadd.f32 0.0, %v2188
      %v2190 = vpop.f32.mrb[0].mxu0
      %v2191 = vadd.f32 0.0, %v2190
      %v2192 = vpop.f32.mrb[0].mxu0
      %v2193 = vadd.f32 0.0, %v2192
      %v2194 = vpop.f32.mrb[0].mxu0
      %v2195 = vadd.f32 0.0, %v2194
      %2196 = vmatprep.mubr.bf16.mxu0 0
      %2197 = vmatmul.mubr.bf16.gmra.mrb[0].mxu0 %v2023
      %v2198 = vpop.f32.mrb[0].mxu0
      %v2199 = vadd.f32 0.0, %v2198
      %v2200 = vpop.f32.mrb[0].mxu0
      %v2201 = vadd.f32 0.0, %v2200
      %v2202 = vpop.f32.mrb[0].mxu0
      %v2203 = vadd.f32 0.0, %v2202
      %v2204 = vpop.f32.mrb[0].mxu0
      %v2205 = vadd.f32 0.0, %v2204
      %2206 = vmatprep.mubr.bf16.mxu0 0
      %2207 = vmatmul.mubr.bf16.gmra.mrb[0].mxu0 %v2024
      %v2208 = vpop.f32.mrb[0].mxu0
      %v2209 = vadd.f32 0.0, %v2208
      %v2210 = vpop.f32.mrb[0].mxu0
      %v2211 = vadd.f32 0.0, %v2210
      %v2212 = vpop.f32.mrb[0].mxu0
      %v2213 = vadd.f32 0.0, %v2212
      %v2214 = vpop.f32.mrb[0].mxu0
      %v2215 = vadd.f32 0.0, %v2214
      %2216 = vmatprep.mubr.bf16.mxu0 0
      %2217 = vmatmul.mubr.bf16.gmra.mrb[0].mxu0 %v2025
      %v2218 = vpop.f32.mrb[0].mxu0
      %v2219 = vadd.f32 0.0, %v2218
      %v2220 = vpop.f32.mrb[0].mxu0
      %v2221 = vadd.f32 0.0, %v2220
      %v2222 = vpop.f32.mrb[0].mxu0
      %v2223 = vadd.f32 0.0, %v2222
      %v2224 = vpop.f32.mrb[0].mxu0
      %v2225 = vadd.f32 0.0, %v2224
      %2226 = vmatprep.mubr.bf16.mxu0 0
      %2227 = vmatmul.mubr.bf16.gmra.mrb[0].mxu0 %v2026
      %v2228 = vpop.f32.mrb[0].mxu0
      %v2229 = vadd.f32 0.0, %v2228
      %v2230 = vpop.f32.mrb[0].mxu0
      %v2231 = vadd.f32 0.0, %v2230
      %v2232 = vpop.f32.mrb[0].mxu0
      %v2233 = vadd.f32 0.0, %v2232
      %v2234 = vpop.f32.mrb[0].mxu0
      %v2235 = vadd.f32 0.0, %v2234
      %2236 = vdwg.mxu0
      %v2237 = vadd.f32 %v1825, %v2159
      %v2238 = vadd.f32 %v1826, %v2161
      %v2239 = vadd.f32 %v1827, %v2163
      %v2240 = vadd.f32 %v1828, %v2165
      %v2241 = vadd.f32 %v1829, %v2169
      %v2242 = vadd.f32 %v1830, %v2171
      %v2243 = vadd.f32 %v1831, %v2173
      %v2244 = vadd.f32 %v1832, %v2175
      %v2245 = vadd.f32 %v1833, %v2179
      %v2246 = vadd.f32 %v1834, %v2181
      %v2247 = vadd.f32 %v1835, %v2183
      %v2248 = vadd.f32 %v1836, %v2185
      %v2249 = vadd.f32 %v1837, %v2189
      %v2250 = vadd.f32 %v1838, %v2191
      %v2251 = vadd.f32 %v1839, %v2193
      %v2252 = vadd.f32 %v1840, %v2195
      %v2253 = vadd.f32 %v1841, %v2199
      %v2254 = vadd.f32 %v1842, %v2201
      %v2255 = vadd.f32 %v1843, %v2203
      %v2256 = vadd.f32 %v1844, %v2205
      %v2257 = vadd.f32 %v1845, %v2209
      %v2258 = vadd.f32 %v1846, %v2211
      %v2259 = vadd.f32 %v1847, %v2213
      %v2260 = vadd.f32 %v1848, %v2215
      %v2261 = vadd.f32 %v1849, %v2219
      %v2262 = vadd.f32 %v1850, %v2221
      %v2263 = vadd.f32 %v1851, %v2223
      %v2264 = vadd.f32 %v1852, %v2225
      %v2265 = vadd.f32 %v1853, %v2229
      %v2266 = vadd.f32 %v1854, %v2231
      %v2267 = vadd.f32 %v1855, %v2233
      %v2268 = vadd.f32 %v1856, %v2235
      %s2269 = scalar_lea.vmem %s3, 256
      %v2270 = vld [vmem:[%s2269] sm:$0xf]
      %v2271 = vld [vmem:[%s2269 + $0x4] sm:$0xf]
      %v2272 = vld [vmem:[%s2269 + $0x8] sm:$0xf]
      %v2273 = vld [vmem:[%s2269 + $0xc] sm:$0xf]
      %v2274 = vld [vmem:[%s2269 + $0x10] sm:$0xf]
      %v2275 = vld [vmem:[%s2269 + $0x14] sm:$0xf]
      %v2276 = vld [vmem:[%s2269 + $0x18] sm:$0xf]
      %v2277 = vld [vmem:[%s2269 + $0x1c] sm:$0xf]
      %v2278 = vld [vmem:[%s2269 + $0x20] sm:$0xf]
      %v2279 = vld [vmem:[%s2269 + $0x24] sm:$0xf]
      %v2280 = vld [vmem:[%s2269 + $0x28] sm:$0xf]
      %v2281 = vld [vmem:[%s2269 + $0x2c] sm:$0xf]
      %v2282 = vld [vmem:[%s2269 + $0x30] sm:$0xf]
      %v2283 = vld [vmem:[%s2269 + $0x34] sm:$0xf]
      %v2284 = vld [vmem:[%s2269 + $0x38] sm:$0xf]
      %v2285 = vld [vmem:[%s2269 + $0x3c] sm:$0xf]
      %v2302 = vunpack.c.l.b16 %v2270
      %v2303 = vunpack.c.l.b16 %v2271
      %v2304 = vunpack.c.l.b16 %v2272
      %v2305 = vunpack.c.l.b16 %v2273
      %v2306 = vunpack.c.l.b16 %v2274
      %v2307 = vunpack.c.l.b16 %v2275
      %v2308 = vunpack.c.l.b16 %v2276
      %v2309 = vunpack.c.l.b16 %v2277
      %v2310 = vunpack.c.l.b16 %v2278
      %v2311 = vunpack.c.l.b16 %v2279
      %v2312 = vunpack.c.l.b16 %v2280
      %v2313 = vunpack.c.l.b16 %v2281
      %v2314 = vunpack.c.l.b16 %v2282
      %v2315 = vunpack.c.l.b16 %v2283
      %v2316 = vunpack.c.l.b16 %v2284
      %v2317 = vunpack.c.l.b16 %v2285
      %v2318 = vpack.c.b16 %v2303, %v2302
      %v2319 = vpack.c.b16 %v2305, %v2304
      %v2320 = vpack.c.b16 %v2307, %v2306
      %v2321 = vpack.c.b16 %v2309, %v2308
      %v2322 = vpack.c.b16 %v2311, %v2310
      %v2323 = vpack.c.b16 %v2313, %v2312
      %v2324 = vpack.c.b16 %v2315, %v2314
      %v2325 = vpack.c.b16 %v2317, %v2316
      %2334 = vmatprep.subr.bf16.mxu0 0
      %2335 = vmatpush1.bf16.msra.mxu0 %v679
      %2336 = vmatprep.subr.bf16.mxu0 0
      %2337 = vmatpush1.bf16.msra.mxu0 %v680
      %2338 = vmatprep.subr.bf16.mxu0 0
      %2339 = vmatpush1.bf16.msra.mxu0 %v681
      %2340 = vmatprep.subr.bf16.mxu0 0
      %2341 = vmatpush1.bf16.msra.mxu0 %v682
      %2342 = vmatprep.subr.bf16.mxu0 0
      %2343 = vmatpush1.bf16.msra.mxu0 %v683
      %2344 = vmatprep.subr.bf16.mxu0 0
      %2345 = vmatpush1.bf16.msra.mxu0 %v684
      %2346 = vmatprep.subr.bf16.mxu0 0
      %2347 = vmatpush1.bf16.msra.mxu0 %v685
      %2348 = vmatprep.subr.bf16.mxu0 0
      %2349 = vmatpush1.bf16.msra.mxu0 %v686
      %2350 = vmatprep.subr.bf16.mxu0 0
      %2351 = vmatpush1.bf16.msra.mxu0 0
      %2352 = vmatprep.subr.bf16.mxu0 0
      %2353 = vmatpush1.bf16.msra.mxu0 0
      %2354 = vmatprep.subr.bf16.mxu0 0
      %2355 = vmatpush1.bf16.msra.mxu0 0
      %2356 = vmatprep.subr.bf16.mxu0 0
      %2357 = vmatpush1.bf16.msra.mxu0 0
      %2358 = vmatprep.subr.bf16.mxu0 0
      %2359 = vmatpush1.bf16.msra.mxu0 0
      %2360 = vmatprep.subr.bf16.mxu0 0
      %2361 = vmatpush1.bf16.msra.mxu0 0
      %2362 = vmatprep.subr.bf16.mxu0 0
      %2363 = vmatpush1.bf16.msra.mxu0 0
      %2364 = vmatprep.subr.bf16.mxu0 0
      %2365 = vmatpush1.bf16.msra.mxu0 0
      %2366 = vmatprep.mubr.bf16.mxu0 0
      %2367 = vmatmul.mubr.bf16.gmra.mrb[0].mxu0 %v2318
      %v2368 = vpop.f32.mrb[0].mxu0
      %v2369 = vadd.f32 0.0, %v2368
      %v2370 = vpop.f32.mrb[0].mxu0
      %v2371 = vpop.f32.mrb[0].mxu0
      %v2372 = vadd.f32 0.0, %v2371
      %v2373 = vpop.f32.mrb[0].mxu0
      %2374 = vmatprep.mubr.bf16.mxu0 0
      %2375 = vmatmul.mubr.bf16.gmra.mrb[0].mxu0 %v2319
      %v2376 = vpop.f32.mrb[0].mxu0
      %v2377 = vadd.f32 0.0, %v2376
      %v2378 = vpop.f32.mrb[0].mxu0
      %v2379 = vpop.f32.mrb[0].mxu0
      %v2380 = vadd.f32 0.0, %v2379
      %v2381 = vpop.f32.mrb[0].mxu0
      %2382 = vmatprep.mubr.bf16.mxu0 0
      %2383 = vmatmul.mubr.bf16.gmra.mrb[0].mxu0 %v2320
      %v2384 = vpop.f32.mrb[0].mxu0
      %v2385 = vadd.f32 0.0, %v2384
      %v2386 = vpop.f32.mrb[0].mxu0
      %v2387 = vpop.f32.mrb[0].mxu0
      %v2388 = vadd.f32 0.0, %v2387
      %v2389 = vpop.f32.mrb[0].mxu0
      %2390 = vmatprep.mubr.bf16.mxu0 0
      %2391 = vmatmul.mubr.bf16.gmra.mrb[0].mxu0 %v2321
      %v2392 = vpop.f32.mrb[0].mxu0
      %v2393 = vadd.f32 0.0, %v2392
      %v2394 = vpop.f32.mrb[0].mxu0
      %v2395 = vpop.f32.mrb[0].mxu0
      %v2396 = vadd.f32 0.0, %v2395
      %v2397 = vpop.f32.mrb[0].mxu0
      %2398 = vmatprep.mubr.bf16.mxu0 0
      %2399 = vmatmul.mubr.bf16.gmra.mrb[0].mxu0 %v2322
      %v2400 = vpop.f32.mrb[0].mxu0
      %v2401 = vadd.f32 0.0, %v2400
      %v2402 = vpop.f32.mrb[0].mxu0
      %v2403 = vpop.f32.mrb[0].mxu0
      %v2404 = vadd.f32 0.0, %v2403
      %v2405 = vpop.f32.mrb[0].mxu0
      %2406 = vmatprep.mubr.bf16.mxu0 0
      %2407 = vmatmul.mubr.bf16.gmra.mrb[0].mxu0 %v2323
      %v2408 = vpop.f32.mrb[0].mxu0
      %v2409 = vadd.f32 0.0, %v2408
      %v2410 = vpop.f32.mrb[0].mxu0
      %v2411 = vpop.f32.mrb[0].mxu0
      %v2412 = vadd.f32 0.0, %v2411
      %v2413 = vpop.f32.mrb[0].mxu0
      %2414 = vmatprep.mubr.bf16.mxu0 0
      %2415 = vmatmul.mubr.bf16.gmra.mrb[0].mxu0 %v2324
      %v2416 = vpop.f32.mrb[0].mxu0
      %v2417 = vadd.f32 0.0, %v2416
      %v2418 = vpop.f32.mrb[0].mxu0
      %v2419 = vpop.f32.mrb[0].mxu0
      %v2420 = vadd.f32 0.0, %v2419
      %v2421 = vpop.f32.mrb[0].mxu0
      %2422 = vmatprep.mubr.bf16.mxu0 0
      %2423 = vmatmul.mubr.bf16.gmra.mrb[0].mxu0 %v2325
      %v2424 = vpop.f32.mrb[0].mxu0
      %v2425 = vadd.f32 0.0, %v2424
      %v2426 = vpop.f32.mrb[0].mxu0
      %v2427 = vpop.f32.mrb[0].mxu0
      %v2428 = vadd.f32 0.0, %v2427
      %v2429 = vpop.f32.mrb[0].mxu0
      %2430 = vdwg.mxu0
      %v2431 = vpack.c.bf16 %v2372, %v2369
      %v2432 = vpack.c.bf16 %v2380, %v2377
      %v2433 = vpack.c.bf16 %v2388, %v2385
      %v2434 = vpack.c.bf16 %v2396, %v2393
      %v2435 = vpack.c.bf16 %v2404, %v2401
      %v2436 = vpack.c.bf16 %v2412, %v2409
      %v2437 = vpack.c.bf16 %v2420, %v2417
      %v2438 = vpack.c.bf16 %v2428, %v2425
      %s2439 = scalar_lea.vmem %s4, 512
      %v2440 = vld [vmem:[%s2439] sm:$0xff]
      %v2441 = vld [vmem:[%s2439 + $0x8] sm:$0xff]
      %v2442 = vld [vmem:[%s2439 + $0x10] sm:$0xff]
      %v2443 = vld [vmem:[%s2439 + $0x18] sm:$0xff]
      %v2444 = vld [vmem:[%s2439 + $0x20] sm:$0xff]
      %v2445 = vld [vmem:[%s2439 + $0x28] sm:$0xff]
      %v2446 = vld [vmem:[%s2439 + $0x30] sm:$0xff]
      %v2447 = vld [vmem:[%s2439 + $0x38] sm:$0xff]
      %v2448 = vld [vmem:[%s2439 + $0x40] sm:$0xff]
      %v2449 = vld [vmem:[%s2439 + $0x48] sm:$0xff]
      %v2450 = vld [vmem:[%s2439 + $0x50] sm:$0xff]
      %v2451 = vld [vmem:[%s2439 + $0x58] sm:$0xff]
      %v2452 = vld [vmem:[%s2439 + $0x60] sm:$0xff]
      %v2453 = vld [vmem:[%s2439 + $0x68] sm:$0xff]
      %v2454 = vld [vmem:[%s2439 + $0x70] sm:$0xff]
      %v2455 = vld [vmem:[%s2439 + $0x78] sm:$0xff]
      %v2472 = vunpack.c.l.b16 %v2440
      %v2473 = vunpack.c.h.b16 %v2440
      %v2474 = vunpack.c.l.b16 %v2441
      %v2475 = vunpack.c.h.b16 %v2441
      %v2476 = vunpack.c.l.b16 %v2442
      %v2477 = vunpack.c.h.b16 %v2442
      %v2478 = vunpack.c.l.b16 %v2443
      %v2479 = vunpack.c.h.b16 %v2443
      %v2480 = vunpack.c.l.b16 %v2444
      %v2481 = vunpack.c.h.b16 %v2444
      %v2482 = vunpack.c.l.b16 %v2445
      %v2483 = vunpack.c.h.b16 %v2445
      %v2484 = vunpack.c.l.b16 %v2446
      %v2485 = vunpack.c.h.b16 %v2446
      %v2486 = vunpack.c.l.b16 %v2447
      %v2487 = vunpack.c.h.b16 %v2447
      %v2488 = vunpack.c.l.b16 %v2448
      %v2489 = vunpack.c.h.b16 %v2448
      %v2490 = vunpack.c.l.b16 %v2449
      %v2491 = vunpack.c.h.b16 %v2449
      %v2492 = vunpack.c.l.b16 %v2450
      %v2493 = vunpack.c.h.b16 %v2450
      %v2494 = vunpack.c.l.b16 %v2451
      %v2495 = vunpack.c.h.b16 %v2451
      %v2496 = vunpack.c.l.b16 %v2452
      %v2497 = vunpack.c.h.b16 %v2452
      %v2498 = vunpack.c.l.b16 %v2453
      %v2499 = vunpack.c.h.b16 %v2453
      %v2500 = vunpack.c.l.b16 %v2454
      %v2501 = vunpack.c.h.b16 %v2454
      %v2502 = vunpack.c.l.b16 %v2455
      %v2503 = vunpack.c.h.b16 %v2455
      %v2504 = vpack.c.b16 %v2474, %v2472
      %v2505 = vpack.c.b16 %v2475, %v2473
      %v2506 = vpack.c.b16 %v2478, %v2476
      %v2507 = vpack.c.b16 %v2479, %v2477
      %v2508 = vpack.c.b16 %v2482, %v2480
      %v2509 = vpack.c.b16 %v2483, %v2481
      %v2510 = vpack.c.b16 %v2486, %v2484
      %v2511 = vpack.c.b16 %v2487, %v2485
      %v2512 = vpack.c.b16 %v2490, %v2488
      %v2513 = vpack.c.b16 %v2491, %v2489
      %v2514 = vpack.c.b16 %v2494, %v2492
      %v2515 = vpack.c.b16 %v2495, %v2493
      %v2516 = vpack.c.b16 %v2498, %v2496
      %v2517 = vpack.c.b16 %v2499, %v2497
      %v2518 = vpack.c.b16 %v2502, %v2500
      %v2519 = vpack.c.b16 %v2503, %v2501
      %2536 = vmatprep.subr.bf16.mxu0 %v2505
      %2537 = vmatpush1.bf16.msra.mxu0 %v2504
      %2538 = vmatprep.subr.bf16.mxu0 %v2507
      %2539 = vmatpush1.bf16.msra.mxu0 %v2506
      %2540 = vmatprep.subr.bf16.mxu0 %v2509
      %2541 = vmatpush1.bf16.msra.mxu0 %v2508
      %2542 = vmatprep.subr.bf16.mxu0 %v2511
      %2543 = vmatpush1.bf16.msra.mxu0 %v2510
      %2544 = vmatprep.subr.bf16.mxu0 %v2513
      %2545 = vmatpush1.bf16.msra.mxu0 %v2512
      %2546 = vmatprep.subr.bf16.mxu0 %v2515
      %2547 = vmatpush1.bf16.msra.mxu0 %v2514
      %2548 = vmatprep.subr.bf16.mxu0 %v2517
      %2549 = vmatpush1.bf16.msra.mxu0 %v2516
      %2550 = vmatprep.subr.bf16.mxu0 %v2519
      %2551 = vmatpush1.bf16.msra.mxu0 %v2518
      %2552 = vmatprep.subr.bf16.mxu0 0
      %2553 = vmatpush1.bf16.msra.mxu0 0
      %2554 = vmatprep.subr.bf16.mxu0 0
      %2555 = vmatpush1.bf16.msra.mxu0 0
      %2556 = vmatprep.subr.bf16.mxu0 0
      %2557 = vmatpush1.bf16.msra.mxu0 0
      %2558 = vmatprep.subr.bf16.mxu0 0
      %2559 = vmatpush1.bf16.msra.mxu0 0
      %2560 = vmatprep.subr.bf16.mxu0 0
      %2561 = vmatpush1.bf16.msra.mxu0 0
      %2562 = vmatprep.subr.bf16.mxu0 0
      %2563 = vmatpush1.bf16.msra.mxu0 0
      %2564 = vmatprep.subr.bf16.mxu0 0
      %2565 = vmatpush1.bf16.msra.mxu0 0
      %2566 = vmatprep.subr.bf16.mxu0 0
      %2567 = vmatpush1.bf16.msra.mxu0 0
      %2568 = vmatprep.mubr.bf16.mxu0 0
      %2569 = vmatmul.mubr.bf16.gmra.mrb[0].mxu0 %v2431
      %v2570 = vpop.f32.mrb[0].mxu0
      %v2571 = vadd.f32 0.0, %v2570
      %v2572 = vpop.f32.mrb[0].mxu0
      %v2573 = vadd.f32 0.0, %v2572
      %v2574 = vpop.f32.mrb[0].mxu0
      %v2575 = vadd.f32 0.0, %v2574
      %v2576 = vpop.f32.mrb[0].mxu0
      %v2577 = vadd.f32 0.0, %v2576
      %2578 = vmatprep.mubr.bf16.mxu0 0
      %2579 = vmatmul.mubr.bf16.gmra.mrb[0].mxu0 %v2432
      %v2580 = vpop.f32.mrb[0].mxu0
      %v2581 = vadd.f32 0.0, %v2580
      %v2582 = vpop.f32.mrb[0].mxu0
      %v2583 = vadd.f32 0.0, %v2582
      %v2584 = vpop.f32.mrb[0].mxu0
      %v2585 = vadd.f32 0.0, %v2584
      %v2586 = vpop.f32.mrb[0].mxu0
      %v2587 = vadd.f32 0.0, %v2586
      %2588 = vmatprep.mubr.bf16.mxu0 0
      %2589 = vmatmul.mubr.bf16.gmra.mrb[0].mxu0 %v2433
      %v2590 = vpop.f32.mrb[0].mxu0
      %v2591 = vadd.f32 0.0, %v2590
      %v2592 = vpop.f32.mrb[0].mxu0
      %v2593 = vadd.f32 0.0, %v2592
      %v2594 = vpop.f32.mrb[0].mxu0
      %v2595 = vadd.f32 0.0, %v2594
      %v2596 = vpop.f32.mrb[0].mxu0
      %v2597 = vadd.f32 0.0, %v2596
      %2598 = vmatprep.mubr.bf16.mxu0 0
      %2599 = vmatmul.mubr.bf16.gmra.mrb[0].mxu0 %v2434
      %v2600 = vpop.f32.mrb[0].mxu0
      %v2601 = vadd.f32 0.0, %v2600
      %v2602 = vpop.f32.mrb[0].mxu0
      %v2603 = vadd.f32 0.0, %v2602
      %v2604 = vpop.f32.mrb[0].mxu0
      %v2605 = vadd.f32 0.0, %v2604
      %v2606 = vpop.f32.mrb[0].mxu0
      %v2607 = vadd.f32 0.0, %v2606
      %2608 = vmatprep.mubr.bf16.mxu0 0
      %2609 = vmatmul.mubr.bf16.gmra.mrb[0].mxu0 %v2435
      %v2610 = vpop.f32.mrb[0].mxu0
      %v2611 = vadd.f32 0.0, %v2610
      %v2612 = vpop.f32.mrb[0].mxu0
      %v2613 = vadd.f32 0.0, %v2612
      %v2614 = vpop.f32.mrb[0].mxu0
      %v2615 = vadd.f32 0.0, %v2614
      %v2616 = vpop.f32.mrb[0].mxu0
      %v2617 = vadd.f32 0.0, %v2616
      %2618 = vmatprep.mubr.bf16.mxu0 0
      %2619 = vmatmul.mubr.bf16.gmra.mrb[0].mxu0 %v2436
      %v2620 = vpop.f32.mrb[0].mxu0
      %v2621 = vadd.f32 0.0, %v2620
      %v2622 = vpop.f32.mrb[0].mxu0
      %v2623 = vadd.f32 0.0, %v2622
      %v2624 = vpop.f32.mrb[0].mxu0
      %v2625 = vadd.f32 0.0, %v2624
      %v2626 = vpop.f32.mrb[0].mxu0
      %v2627 = vadd.f32 0.0, %v2626
      %2628 = vmatprep.mubr.bf16.mxu0 0
      %2629 = vmatmul.mubr.bf16.gmra.mrb[0].mxu0 %v2437
      %v2630 = vpop.f32.mrb[0].mxu0
      %v2631 = vadd.f32 0.0, %v2630
      %v2632 = vpop.f32.mrb[0].mxu0
      %v2633 = vadd.f32 0.0, %v2632
      %v2634 = vpop.f32.mrb[0].mxu0
      %v2635 = vadd.f32 0.0, %v2634
      %v2636 = vpop.f32.mrb[0].mxu0
      %v2637 = vadd.f32 0.0, %v2636
      %2638 = vmatprep.mubr.bf16.mxu0 0
      %2639 = vmatmul.mubr.bf16.gmra.mrb[0].mxu0 %v2438
      %v2640 = vpop.f32.mrb[0].mxu0
      %v2641 = vadd.f32 0.0, %v2640
      %v2642 = vpop.f32.mrb[0].mxu0
      %v2643 = vadd.f32 0.0, %v2642
      %v2644 = vpop.f32.mrb[0].mxu0
      %v2645 = vadd.f32 0.0, %v2644
      %v2646 = vpop.f32.mrb[0].mxu0
      %v2647 = vadd.f32 0.0, %v2646
      %2648 = vdwg.mxu0
      %v2649 = vadd.f32 %v2237, %v2571
      %v2650 = vadd.f32 %v2238, %v2573
      %v2651 = vadd.f32 %v2239, %v2575
      %v2652 = vadd.f32 %v2240, %v2577
      %v2653 = vadd.f32 %v2241, %v2581
      %v2654 = vadd.f32 %v2242, %v2583
      %v2655 = vadd.f32 %v2243, %v2585
      %v2656 = vadd.f32 %v2244, %v2587
      %v2657 = vadd.f32 %v2245, %v2591
      %v2658 = vadd.f32 %v2246, %v2593
      %v2659 = vadd.f32 %v2247, %v2595
      %v2660 = vadd.f32 %v2248, %v2597
      %v2661 = vadd.f32 %v2249, %v2601
      %v2662 = vadd.f32 %v2250, %v2603
      %v2663 = vadd.f32 %v2251, %v2605
      %v2664 = vadd.f32 %v2252, %v2607
      %v2665 = vadd.f32 %v2253, %v2611
      %v2666 = vadd.f32 %v2254, %v2613
      %v2667 = vadd.f32 %v2255, %v2615
      %v2668 = vadd.f32 %v2256, %v2617
      %v2669 = vadd.f32 %v2257, %v2621
      %v2670 = vadd.f32 %v2258, %v2623
      %v2671 = vadd.f32 %v2259, %v2625
      %v2672 = vadd.f32 %v2260, %v2627
      %v2673 = vadd.f32 %v2261, %v2631
      %v2674 = vadd.f32 %v2262, %v2633
      %v2675 = vadd.f32 %v2263, %v2635
      %v2676 = vadd.f32 %v2264, %v2637
      %v2677 = vadd.f32 %v2265, %v2641
      %v2678 = vadd.f32 %v2266, %v2643
      %v2679 = vadd.f32 %v2267, %v2645
      %v2680 = vadd.f32 %v2268, %v2647
      %s2681 = scalar_lea.vmem %s3, 320
      %v2682 = vld [vmem:[%s2681] sm:$0xf]
      %v2683 = vld [vmem:[%s2681 + $0x4] sm:$0xf]
      %v2684 = vld [vmem:[%s2681 + $0x8] sm:$0xf]
      %v2685 = vld [vmem:[%s2681 + $0xc] sm:$0xf]
      %v2686 = vld [vmem:[%s2681 + $0x10] sm:$0xf]
      %v2687 = vld [vmem:[%s2681 + $0x14] sm:$0xf]
      %v2688 = vld [vmem:[%s2681 + $0x18] sm:$0xf]
      %v2689 = vld [vmem:[%s2681 + $0x1c] sm:$0xf]
      %v2690 = vld [vmem:[%s2681 + $0x20] sm:$0xf]
      %v2691 = vld [vmem:[%s2681 + $0x24] sm:$0xf]
      %v2692 = vld [vmem:[%s2681 + $0x28] sm:$0xf]
      %v2693 = vld [vmem:[%s2681 + $0x2c] sm:$0xf]
      %v2694 = vld [vmem:[%s2681 + $0x30] sm:$0xf]
      %v2695 = vld [vmem:[%s2681 + $0x34] sm:$0xf]
      %v2696 = vld [vmem:[%s2681 + $0x38] sm:$0xf]
      %v2697 = vld [vmem:[%s2681 + $0x3c] sm:$0xf]
      %v2714 = vunpack.c.l.b16 %v2682
      %v2715 = vunpack.c.l.b16 %v2683
      %v2716 = vunpack.c.l.b16 %v2684
      %v2717 = vunpack.c.l.b16 %v2685
      %v2718 = vunpack.c.l.b16 %v2686
      %v2719 = vunpack.c.l.b16 %v2687
      %v2720 = vunpack.c.l.b16 %v2688
      %v2721 = vunpack.c.l.b16 %v2689
      %v2722 = vunpack.c.l.b16 %v2690
      %v2723 = vunpack.c.l.b16 %v2691
      %v2724 = vunpack.c.l.b16 %v2692
      %v2725 = vunpack.c.l.b16 %v2693
      %v2726 = vunpack.c.l.b16 %v2694
      %v2727 = vunpack.c.l.b16 %v2695
      %v2728 = vunpack.c.l.b16 %v2696
      %v2729 = vunpack.c.l.b16 %v2697
      %v2730 = vpack.c.b16 %v2715, %v2714
      %v2731 = vpack.c.b16 %v2717, %v2716
      %v2732 = vpack.c.b16 %v2719, %v2718
      %v2733 = vpack.c.b16 %v2721, %v2720
      %v2734 = vpack.c.b16 %v2723, %v2722
      %v2735 = vpack.c.b16 %v2725, %v2724
      %v2736 = vpack.c.b16 %v2727, %v2726
      %v2737 = vpack.c.b16 %v2729, %v2728
      %2746 = vmatprep.subr.bf16.mxu0 0
      %2747 = vmatpush1.bf16.msra.mxu0 %v679
      %2748 = vmatprep.subr.bf16.mxu0 0
      %2749 = vmatpush1.bf16.msra.mxu0 %v680
      %2750 = vmatprep.subr.bf16.mxu0 0
      %2751 = vmatpush1.bf16.msra.mxu0 %v681
      %2752 = vmatprep.subr.bf16.mxu0 0
      %2753 = vmatpush1.bf16.msra.mxu0 %v682
      %2754 = vmatprep.subr.bf16.mxu0 0
      %2755 = vmatpush1.bf16.msra.mxu0 %v683
      %2756 = vmatprep.subr.bf16.mxu0 0
      %2757 = vmatpush1.bf16.msra.mxu0 %v684
      %2758 = vmatprep.subr.bf16.mxu0 0
      %2759 = vmatpush1.bf16.msra.mxu0 %v685
      %2760 = vmatprep.subr.bf16.mxu0 0
      %2761 = vmatpush1.bf16.msra.mxu0 %v686
      %2762 = vmatprep.subr.bf16.mxu0 0
      %2763 = vmatpush1.bf16.msra.mxu0 0
      %2764 = vmatprep.subr.bf16.mxu0 0
      %2765 = vmatpush1.bf16.msra.mxu0 0
      %2766 = vmatprep.subr.bf16.mxu0 0
      %2767 = vmatpush1.bf16.msra.mxu0 0
      %2768 = vmatprep.subr.bf16.mxu0 0
      %2769 = vmatpush1.bf16.msra.mxu0 0
      %2770 = vmatprep.subr.bf16.mxu0 0
      %2771 = vmatpush1.bf16.msra.mxu0 0
      %2772 = vmatprep.subr.bf16.mxu0 0
      %2773 = vmatpush1.bf16.msra.mxu0 0
      %2774 = vmatprep.subr.bf16.mxu0 0
      %2775 = vmatpush1.bf16.msra.mxu0 0
      %2776 = vmatprep.subr.bf16.mxu0 0
      %2777 = vmatpush1.bf16.msra.mxu0 0
      %2778 = vmatprep.mubr.bf16.mxu0 0
      %2779 = vmatmul.mubr.bf16.gmra.mrb[0].mxu0 %v2730
      %v2780 = vpop.f32.mrb[0].mxu0
      %v2781 = vadd.f32 0.0, %v2780
      %v2782 = vpop.f32.mrb[0].mxu0
      %v2783 = vpop.f32.mrb[0].mxu0
      %v2784 = vadd.f32 0.0, %v2783
      %v2785 = vpop.f32.mrb[0].mxu0
      %2786 = vmatprep.mubr.bf16.mxu0 0
      %2787 = vmatmul.mubr.bf16.gmra.mrb[0].mxu0 %v2731
      %v2788 = vpop.f32.mrb[0].mxu0
      %v2789 = vadd.f32 0.0, %v2788
      %v2790 = vpop.f32.mrb[0].mxu0
      %v2791 = vpop.f32.mrb[0].mxu0
      %v2792 = vadd.f32 0.0, %v2791
      %v2793 = vpop.f32.mrb[0].mxu0
      %2794 = vmatprep.mubr.bf16.mxu0 0
      %2795 = vmatmul.mubr.bf16.gmra.mrb[0].mxu0 %v2732
      %v2796 = vpop.f32.mrb[0].mxu0
      %v2797 = vadd.f32 0.0, %v2796
      %v2798 = vpop.f32.mrb[0].mxu0
      %v2799 = vpop.f32.mrb[0].mxu0
      %v2800 = vadd.f32 0.0, %v2799
      %v2801 = vpop.f32.mrb[0].mxu0
      %2802 = vmatprep.mubr.bf16.mxu0 0
      %2803 = vmatmul.mubr.bf16.gmra.mrb[0].mxu0 %v2733
      %v2804 = vpop.f32.mrb[0].mxu0
      %v2805 = vadd.f32 0.0, %v2804
      %v2806 = vpop.f32.mrb[0].mxu0
      %v2807 = vpop.f32.mrb[0].mxu0
      %v2808 = vadd.f32 0.0, %v2807
      %v2809 = vpop.f32.mrb[0].mxu0
      %2810 = vmatprep.mubr.bf16.mxu0 0
      %2811 = vmatmul.mubr.bf16.gmra.mrb[0].mxu0 %v2734
      %v2812 = vpop.f32.mrb[0].mxu0
      %v2813 = vadd.f32 0.0, %v2812
      %v2814 = vpop.f32.mrb[0].mxu0
      %v2815 = vpop.f32.mrb[0].mxu0
      %v2816 = vadd.f32 0.0, %v2815
      %v2817 = vpop.f32.mrb[0].mxu0
      %2818 = vmatprep.mubr.bf16.mxu0 0
      %2819 = vmatmul.mubr.bf16.gmra.mrb[0].mxu0 %v2735
      %v2820 = vpop.f32.mrb[0].mxu0
      %v2821 = vadd.f32 0.0, %v2820
      %v2822 = vpop.f32.mrb[0].mxu0
      %v2823 = vpop.f32.mrb[0].mxu0
      %v2824 = vadd.f32 0.0, %v2823
      %v2825 = vpop.f32.mrb[0].mxu0
      %2826 = vmatprep.mubr.bf16.mxu0 0
      %2827 = vmatmul.mubr.bf16.gmra.mrb[0].mxu0 %v2736
      %v2828 = vpop.f32.mrb[0].mxu0
      %v2829 = vadd.f32 0.0, %v2828
      %v2830 = vpop.f32.mrb[0].mxu0
      %v2831 = vpop.f32.mrb[0].mxu0
      %v2832 = vadd.f32 0.0, %v2831
      %v2833 = vpop.f32.mrb[0].mxu0
      %2834 = vmatprep.mubr.bf16.mxu0 0
      %2835 = vmatmul.mubr.bf16.gmra.mrb[0].mxu0 %v2737
      %v2836 = vpop.f32.mrb[0].mxu0
      %v2837 = vadd.f32 0.0, %v2836
      %v2838 = vpop.f32.mrb[0].mxu0
      %v2839 = vpop.f32.mrb[0].mxu0
      %v2840 = vadd.f32 0.0, %v2839
      %v2841 = vpop.f32.mrb[0].mxu0
      %2842 = vdwg.mxu0
      %v2843 = vpack.c.bf16 %v2784, %v2781
      %v2844 = vpack.c.bf16 %v2792, %v2789
      %v2845 = vpack.c.bf16 %v2800, %v2797
      %v2846 = vpack.c.bf16 %v2808, %v2805
      %v2847 = vpack.c.bf16 %v2816, %v2813
      %v2848 = vpack.c.bf16 %v2824, %v2821
      %v2849 = vpack.c.bf16 %v2832, %v2829
      %v2850 = vpack.c.bf16 %v2840, %v2837
      %s2851 = scalar_lea.vmem %s4, 640
      %v2852 = vld [vmem:[%s2851] sm:$0xff]
      %v2853 = vld [vmem:[%s2851 + $0x8] sm:$0xff]
      %v2854 = vld [vmem:[%s2851 + $0x10] sm:$0xff]
      %v2855 = vld [vmem:[%s2851 + $0x18] sm:$0xff]
      %v2856 = vld [vmem:[%s2851 + $0x20] sm:$0xff]
      %v2857 = vld [vmem:[%s2851 + $0x28] sm:$0xff]
      %v2858 = vld [vmem:[%s2851 + $0x30] sm:$0xff]
      %v2859 = vld [vmem:[%s2851 + $0x38] sm:$0xff]
      %v2860 = vld [vmem:[%s2851 + $0x40] sm:$0xff]
      %v2861 = vld [vmem:[%s2851 + $0x48] sm:$0xff]
      %v2862 = vld [vmem:[%s2851 + $0x50] sm:$0xff]
      %v2863 = vld [vmem:[%s2851 + $0x58] sm:$0xff]
      %v2864 = vld [vmem:[%s2851 + $0x60] sm:$0xff]
      %v2865 = vld [vmem:[%s2851 + $0x68] sm:$0xff]
      %v2866 = vld [vmem:[%s2851 + $0x70] sm:$0xff]
      %v2867 = vld [vmem:[%s2851 + $0x78] sm:$0xff]
      %v2884 = vunpack.c.l.b16 %v2852
      %v2885 = vunpack.c.h.b16 %v2852
      %v2886 = vunpack.c.l.b16 %v2853
      %v2887 = vunpack.c.h.b16 %v2853
      %v2888 = vunpack.c.l.b16 %v2854
      %v2889 = vunpack.c.h.b16 %v2854
      %v2890 = vunpack.c.l.b16 %v2855
      %v2891 = vunpack.c.h.b16 %v2855
      %v2892 = vunpack.c.l.b16 %v2856
      %v2893 = vunpack.c.h.b16 %v2856
      %v2894 = vunpack.c.l.b16 %v2857
      %v2895 = vunpack.c.h.b16 %v2857
      %v2896 = vunpack.c.l.b16 %v2858
      %v2897 = vunpack.c.h.b16 %v2858
      %v2898 = vunpack.c.l.b16 %v2859
      %v2899 = vunpack.c.h.b16 %v2859
      %v2900 = vunpack.c.l.b16 %v2860
      %v2901 = vunpack.c.h.b16 %v2860
      %v2902 = vunpack.c.l.b16 %v2861
      %v2903 = vunpack.c.h.b16 %v2861
      %v2904 = vunpack.c.l.b16 %v2862
      %v2905 = vunpack.c.h.b16 %v2862
      %v2906 = vunpack.c.l.b16 %v2863
      %v2907 = vunpack.c.h.b16 %v2863
      %v2908 = vunpack.c.l.b16 %v2864
      %v2909 = vunpack.c.h.b16 %v2864
      %v2910 = vunpack.c.l.b16 %v2865
      %v2911 = vunpack.c.h.b16 %v2865
      %v2912 = vunpack.c.l.b16 %v2866
      %v2913 = vunpack.c.h.b16 %v2866
      %v2914 = vunpack.c.l.b16 %v2867
      %v2915 = vunpack.c.h.b16 %v2867
      %v2916 = vpack.c.b16 %v2886, %v2884
      %v2917 = vpack.c.b16 %v2887, %v2885
      %v2918 = vpack.c.b16 %v2890, %v2888
      %v2919 = vpack.c.b16 %v2891, %v2889
      %v2920 = vpack.c.b16 %v2894, %v2892
      %v2921 = vpack.c.b16 %v2895, %v2893
      %v2922 = vpack.c.b16 %v2898, %v2896
      %v2923 = vpack.c.b16 %v2899, %v2897
      %v2924 = vpack.c.b16 %v2902, %v2900
      %v2925 = vpack.c.b16 %v2903, %v2901
      %v2926 = vpack.c.b16 %v2906, %v2904
      %v2927 = vpack.c.b16 %v2907, %v2905
      %v2928 = vpack.c.b16 %v2910, %v2908
      %v2929 = vpack.c.b16 %v2911, %v2909
      %v2930 = vpack.c.b16 %v2914, %v2912
      %v2931 = vpack.c.b16 %v2915, %v2913
      %2948 = vmatprep.subr.bf16.mxu0 %v2917
      %2949 = vmatpush1.bf16.msra.mxu0 %v2916
      %2950 = vmatprep.subr.bf16.mxu0 %v2919
      %2951 = vmatpush1.bf16.msra.mxu0 %v2918
      %2952 = vmatprep.subr.bf16.mxu0 %v2921
      %2953 = vmatpush1.bf16.msra.mxu0 %v2920
      %2954 = vmatprep.subr.bf16.mxu0 %v2923
      %2955 = vmatpush1.bf16.msra.mxu0 %v2922
      %2956 = vmatprep.subr.bf16.mxu0 %v2925
      %2957 = vmatpush1.bf16.msra.mxu0 %v2924
      %2958 = vmatprep.subr.bf16.mxu0 %v2927
      %2959 = vmatpush1.bf16.msra.mxu0 %v2926
      %2960 = vmatprep.subr.bf16.mxu0 %v2929
      %2961 = vmatpush1.bf16.msra.mxu0 %v2928
      %2962 = vmatprep.subr.bf16.mxu0 %v2931
      %2963 = vmatpush1.bf16.msra.mxu0 %v2930
      %2964 = vmatprep.subr.bf16.mxu0 0
      %2965 = vmatpush1.bf16.msra.mxu0 0
      %2966 = vmatprep.subr.bf16.mxu0 0
      %2967 = vmatpush1.bf16.msra.mxu0 0
      %2968 = vmatprep.subr.bf16.mxu0 0
      %2969 = vmatpush1.bf16.msra.mxu0 0
      %2970 = vmatprep.subr.bf16.mxu0 0
      %2971 = vmatpush1.bf16.msra.mxu0 0
      %2972 = vmatprep.subr.bf16.mxu0 0
      %2973 = vmatpush1.bf16.msra.mxu0 0
      %2974 = vmatprep.subr.bf16.mxu0 0
      %2975 = vmatpush1.bf16.msra.mxu0 0
      %2976 = vmatprep.subr.bf16.mxu0 0
      %2977 = vmatpush1.bf16.msra.mxu0 0
      %2978 = vmatprep.subr.bf16.mxu0 0
      %2979 = vmatpush1.bf16.msra.mxu0 0
      %2980 = vmatprep.mubr.bf16.mxu0 0
      %2981 = vmatmul.mubr.bf16.gmra.mrb[0].mxu0 %v2843
      %v2982 = vpop.f32.mrb[0].mxu0
      %v2983 = vadd.f32 0.0, %v2982
      %v2984 = vpop.f32.mrb[0].mxu0
      %v2985 = vadd.f32 0.0, %v2984
      %v2986 = vpop.f32.mrb[0].mxu0
      %v2987 = vadd.f32 0.0, %v2986
      %v2988 = vpop.f32.mrb[0].mxu0
      %v2989 = vadd.f32 0.0, %v2988
      %2990 = vmatprep.mubr.bf16.mxu0 0
      %2991 = vmatmul.mubr.bf16.gmra.mrb[0].mxu0 %v2844
      %v2992 = vpop.f32.mrb[0].mxu0
      %v2993 = vadd.f32 0.0, %v2992
      %v2994 = vpop.f32.mrb[0].mxu0
      %v2995 = vadd.f32 0.0, %v2994
      %v2996 = vpop.f32.mrb[0].mxu0
      %v2997 = vadd.f32 0.0, %v2996
      %v2998 = vpop.f32.mrb[0].mxu0
      %v2999 = vadd.f32 0.0, %v2998
      %3000 = vmatprep.mubr.bf16.mxu0 0
      %3001 = vmatmul.mubr.bf16.gmra.mrb[0].mxu0 %v2845
      %v3002 = vpop.f32.mrb[0].mxu0
      %v3003 = vadd.f32 0.0, %v3002
      %v3004 = vpop.f32.mrb[0].mxu0
      %v3005 = vadd.f32 0.0, %v3004
      %v3006 = vpop.f32.mrb[0].mxu0
      %v3007 = vadd.f32 0.0, %v3006
      %v3008 = vpop.f32.mrb[0].mxu0
      %v3009 = vadd.f32 0.0, %v3008
      %3010 = vmatprep.mubr.bf16.mxu0 0
      %3011 = vmatmul.mubr.bf16.gmra.mrb[0].mxu0 %v2846
      %v3012 = vpop.f32.mrb[0].mxu0
      %v3013 = vadd.f32 0.0, %v3012
      %v3014 = vpop.f32.mrb[0].mxu0
      %v3015 = vadd.f32 0.0, %v3014
      %v3016 = vpop.f32.mrb[0].mxu0
      %v3017 = vadd.f32 0.0, %v3016
      %v3018 = vpop.f32.mrb[0].mxu0
      %v3019 = vadd.f32 0.0, %v3018
      %3020 = vmatprep.mubr.bf16.mxu0 0
      %3021 = vmatmul.mubr.bf16.gmra.mrb[0].mxu0 %v2847
      %v3022 = vpop.f32.mrb[0].mxu0
      %v3023 = vadd.f32 0.0, %v3022
      %v3024 = vpop.f32.mrb[0].mxu0
      %v3025 = vadd.f32 0.0, %v3024
      %v3026 = vpop.f32.mrb[0].mxu0
      %v3027 = vadd.f32 0.0, %v3026
      %v3028 = vpop.f32.mrb[0].mxu0
      %v3029 = vadd.f32 0.0, %v3028
      %3030 = vmatprep.mubr.bf16.mxu0 0
      %3031 = vmatmul.mubr.bf16.gmra.mrb[0].mxu0 %v2848
      %v3032 = vpop.f32.mrb[0].mxu0
      %v3033 = vadd.f32 0.0, %v3032
      %v3034 = vpop.f32.mrb[0].mxu0
      %v3035 = vadd.f32 0.0, %v3034
      %v3036 = vpop.f32.mrb[0].mxu0
      %v3037 = vadd.f32 0.0, %v3036
      %v3038 = vpop.f32.mrb[0].mxu0
      %v3039 = vadd.f32 0.0, %v3038
      %3040 = vmatprep.mubr.bf16.mxu0 0
      %3041 = vmatmul.mubr.bf16.gmra.mrb[0].mxu0 %v2849
      %v3042 = vpop.f32.mrb[0].mxu0
      %v3043 = vadd.f32 0.0, %v3042
      %v3044 = vpop.f32.mrb[0].mxu0
      %v3045 = vadd.f32 0.0, %v3044
      %v3046 = vpop.f32.mrb[0].mxu0
      %v3047 = vadd.f32 0.0, %v3046
      %v3048 = vpop.f32.mrb[0].mxu0
      %v3049 = vadd.f32 0.0, %v3048
      %3050 = vmatprep.mubr.bf16.mxu0 0
      %3051 = vmatmul.mubr.bf16.gmra.mrb[0].mxu0 %v2850
      %v3052 = vpop.f32.mrb[0].mxu0
      %v3053 = vadd.f32 0.0, %v3052
      %v3054 = vpop.f32.mrb[0].mxu0
      %v3055 = vadd.f32 0.0, %v3054
      %v3056 = vpop.f32.mrb[0].mxu0
      %v3057 = vadd.f32 0.0, %v3056
      %v3058 = vpop.f32.mrb[0].mxu0
      %v3059 = vadd.f32 0.0, %v3058
      %3060 = vdwg.mxu0
      %v3061 = vadd.f32 %v2649, %v2983
      %v3062 = vadd.f32 %v2650, %v2985
      %v3063 = vadd.f32 %v2651, %v2987
      %v3064 = vadd.f32 %v2652, %v2989
      %v3065 = vadd.f32 %v2653, %v2993
      %v3066 = vadd.f32 %v2654, %v2995
      %v3067 = vadd.f32 %v2655, %v2997
      %v3068 = vadd.f32 %v2656, %v2999
      %v3069 = vadd.f32 %v2657, %v3003
      %v3070 = vadd.f32 %v2658, %v3005
      %v3071 = vadd.f32 %v2659, %v3007
      %v3072 = vadd.f32 %v2660, %v3009
      %v3073 = vadd.f32 %v2661, %v3013
      %v3074 = vadd.f32 %v2662, %v3015
      %v3075 = vadd.f32 %v2663, %v3017
      %v3076 = vadd.f32 %v2664, %v3019
      %v3077 = vadd.f32 %v2665, %v3023
      %v3078 = vadd.f32 %v2666, %v3025
      %v3079 = vadd.f32 %v2667, %v3027
      %v3080 = vadd.f32 %v2668, %v3029
      %v3081 = vadd.f32 %v2669, %v3033
      %v3082 = vadd.f32 %v2670, %v3035
      %v3083 = vadd.f32 %v2671, %v3037
      %v3084 = vadd.f32 %v2672, %v3039
      %v3085 = vadd.f32 %v2673, %v3043
      %v3086 = vadd.f32 %v2674, %v3045
      %v3087 = vadd.f32 %v2675, %v3047
      %v3088 = vadd.f32 %v2676, %v3049
      %v3089 = vadd.f32 %v2677, %v3053
      %v3090 = vadd.f32 %v2678, %v3055
      %v3091 = vadd.f32 %v2679, %v3057
      %v3092 = vadd.f32 %v2680, %v3059
      %s3093 = scalar_lea.vmem %s3, 384
      %v3094 = vld [vmem:[%s3093] sm:$0xf]
      %v3095 = vld [vmem:[%s3093 + $0x4] sm:$0xf]
      %v3096 = vld [vmem:[%s3093 + $0x8] sm:$0xf]
      %v3097 = vld [vmem:[%s3093 + $0xc] sm:$0xf]
      %v3098 = vld [vmem:[%s3093 + $0x10] sm:$0xf]
      %v3099 = vld [vmem:[%s3093 + $0x14] sm:$0xf]
      %v3100 = vld [vmem:[%s3093 + $0x18] sm:$0xf]
      %v3101 = vld [vmem:[%s3093 + $0x1c] sm:$0xf]
      %v3102 = vld [vmem:[%s3093 + $0x20] sm:$0xf]
      %v3103 = vld [vmem:[%s3093 + $0x24] sm:$0xf]
      %v3104 = vld [vmem:[%s3093 + $0x28] sm:$0xf]
      %v3105 = vld [vmem:[%s3093 + $0x2c] sm:$0xf]
      %v3106 = vld [vmem:[%s3093 + $0x30] sm:$0xf]
      %v3107 = vld [vmem:[%s3093 + $0x34] sm:$0xf]
      %v3108 = vld [vmem:[%s3093 + $0x38] sm:$0xf]
      %v3109 = vld [vmem:[%s3093 + $0x3c] sm:$0xf]
      %v3126 = vunpack.c.l.b16 %v3094
      %v3127 = vunpack.c.l.b16 %v3095
      %v3128 = vunpack.c.l.b16 %v3096
      %v3129 = vunpack.c.l.b16 %v3097
      %v3130 = vunpack.c.l.b16 %v3098
      %v3131 = vunpack.c.l.b16 %v3099
      %v3132 = vunpack.c.l.b16 %v3100
      %v3133 = vunpack.c.l.b16 %v3101
      %v3134 = vunpack.c.l.b16 %v3102
      %v3135 = vunpack.c.l.b16 %v3103
      %v3136 = vunpack.c.l.b16 %v3104
      %v3137 = vunpack.c.l.b16 %v3105
      %v3138 = vunpack.c.l.b16 %v3106
      %v3139 = vunpack.c.l.b16 %v3107
      %v3140 = vunpack.c.l.b16 %v3108
      %v3141 = vunpack.c.l.b16 %v3109
      %v3142 = vpack.c.b16 %v3127, %v3126
      %v3143 = vpack.c.b16 %v3129, %v3128
      %v3144 = vpack.c.b16 %v3131, %v3130
      %v3145 = vpack.c.b16 %v3133, %v3132
      %v3146 = vpack.c.b16 %v3135, %v3134
      %v3147 = vpack.c.b16 %v3137, %v3136
      %v3148 = vpack.c.b16 %v3139, %v3138
      %v3149 = vpack.c.b16 %v3141, %v3140
      %3158 = vmatprep.subr.bf16.mxu0 0
      %3159 = vmatpush1.bf16.msra.mxu0 %v679
      %3160 = vmatprep.subr.bf16.mxu0 0
      %3161 = vmatpush1.bf16.msra.mxu0 %v680
      %3162 = vmatprep.subr.bf16.mxu0 0
      %3163 = vmatpush1.bf16.msra.mxu0 %v681
      %3164 = vmatprep.subr.bf16.mxu0 0
      %3165 = vmatpush1.bf16.msra.mxu0 %v682
      %3166 = vmatprep.subr.bf16.mxu0 0
      %3167 = vmatpush1.bf16.msra.mxu0 %v683
      %3168 = vmatprep.subr.bf16.mxu0 0
      %3169 = vmatpush1.bf16.msra.mxu0 %v684
      %3170 = vmatprep.subr.bf16.mxu0 0
      %3171 = vmatpush1.bf16.msra.mxu0 %v685
      %3172 = vmatprep.subr.bf16.mxu0 0
      %3173 = vmatpush1.bf16.msra.mxu0 %v686
      %3174 = vmatprep.subr.bf16.mxu0 0
      %3175 = vmatpush1.bf16.msra.mxu0 0
      %3176 = vmatprep.subr.bf16.mxu0 0
      %3177 = vmatpush1.bf16.msra.mxu0 0
      %3178 = vmatprep.subr.bf16.mxu0 0
      %3179 = vmatpush1.bf16.msra.mxu0 0
      %3180 = vmatprep.subr.bf16.mxu0 0
      %3181 = vmatpush1.bf16.msra.mxu0 0
      %3182 = vmatprep.subr.bf16.mxu0 0
      %3183 = vmatpush1.bf16.msra.mxu0 0
      %3184 = vmatprep.subr.bf16.mxu0 0
      %3185 = vmatpush1.bf16.msra.mxu0 0
      %3186 = vmatprep.subr.bf16.mxu0 0
      %3187 = vmatpush1.bf16.msra.mxu0 0
      %3188 = vmatprep.subr.bf16.mxu0 0
      %3189 = vmatpush1.bf16.msra.mxu0 0
      %3190 = vmatprep.mubr.bf16.mxu0 0
      %3191 = vmatmul.mubr.bf16.gmra.mrb[0].mxu0 %v3142
      %v3192 = vpop.f32.mrb[0].mxu0
      %v3193 = vadd.f32 0.0, %v3192
      %v3194 = vpop.f32.mrb[0].mxu0
      %v3195 = vpop.f32.mrb[0].mxu0
      %v3196 = vadd.f32 0.0, %v3195
      %v3197 = vpop.f32.mrb[0].mxu0
      %3198 = vmatprep.mubr.bf16.mxu0 0
      %3199 = vmatmul.mubr.bf16.gmra.mrb[0].mxu0 %v3143
      %v3200 = vpop.f32.mrb[0].mxu0
      %v3201 = vadd.f32 0.0, %v3200
      %v3202 = vpop.f32.mrb[0].mxu0
      %v3203 = vpop.f32.mrb[0].mxu0
      %v3204 = vadd.f32 0.0, %v3203
      %v3205 = vpop.f32.mrb[0].mxu0
      %3206 = vmatprep.mubr.bf16.mxu0 0
      %3207 = vmatmul.mubr.bf16.gmra.mrb[0].mxu0 %v3144
      %v3208 = vpop.f32.mrb[0].mxu0
      %v3209 = vadd.f32 0.0, %v3208
      %v3210 = vpop.f32.mrb[0].mxu0
      %v3211 = vpop.f32.mrb[0].mxu0
      %v3212 = vadd.f32 0.0, %v3211
      %v3213 = vpop.f32.mrb[0].mxu0
      %3214 = vmatprep.mubr.bf16.mxu0 0
      %3215 = vmatmul.mubr.bf16.gmra.mrb[0].mxu0 %v3145
      %v3216 = vpop.f32.mrb[0].mxu0
      %v3217 = vadd.f32 0.0, %v3216
      %v3218 = vpop.f32.mrb[0].mxu0
      %v3219 = vpop.f32.mrb[0].mxu0
      %v3220 = vadd.f32 0.0, %v3219
      %v3221 = vpop.f32.mrb[0].mxu0
      %3222 = vmatprep.mubr.bf16.mxu0 0
      %3223 = vmatmul.mubr.bf16.gmra.mrb[0].mxu0 %v3146
      %v3224 = vpop.f32.mrb[0].mxu0
      %v3225 = vadd.f32 0.0, %v3224
      %v3226 = vpop.f32.mrb[0].mxu0
      %v3227 = vpop.f32.mrb[0].mxu0
      %v3228 = vadd.f32 0.0, %v3227
      %v3229 = vpop.f32.mrb[0].mxu0
      %3230 = vmatprep.mubr.bf16.mxu0 0
      %3231 = vmatmul.mubr.bf16.gmra.mrb[0].mxu0 %v3147
      %v3232 = vpop.f32.mrb[0].mxu0
      %v3233 = vadd.f32 0.0, %v3232
      %v3234 = vpop.f32.mrb[0].mxu0
      %v3235 = vpop.f32.mrb[0].mxu0
      %v3236 = vadd.f32 0.0, %v3235
      %v3237 = vpop.f32.mrb[0].mxu0
      %3238 = vmatprep.mubr.bf16.mxu0 0
      %3239 = vmatmul.mubr.bf16.gmra.mrb[0].mxu0 %v3148
      %v3240 = vpop.f32.mrb[0].mxu0
      %v3241 = vadd.f32 0.0, %v3240
      %v3242 = vpop.f32.mrb[0].mxu0
      %v3243 = vpop.f32.mrb[0].mxu0
      %v3244 = vadd.f32 0.0, %v3243
      %v3245 = vpop.f32.mrb[0].mxu0
      %3246 = vmatprep.mubr.bf16.mxu0 0
      %3247 = vmatmul.mubr.bf16.gmra.mrb[0].mxu0 %v3149
      %v3248 = vpop.f32.mrb[0].mxu0
      %v3249 = vadd.f32 0.0, %v3248
      %v3250 = vpop.f32.mrb[0].mxu0
      %v3251 = vpop.f32.mrb[0].mxu0
      %v3252 = vadd.f32 0.0, %v3251
      %v3253 = vpop.f32.mrb[0].mxu0
      %3254 = vdwg.mxu0
      %v3255 = vpack.c.bf16 %v3196, %v3193
      %v3256 = vpack.c.bf16 %v3204, %v3201
      %v3257 = vpack.c.bf16 %v3212, %v3209
      %v3258 = vpack.c.bf16 %v3220, %v3217
      %v3259 = vpack.c.bf16 %v3228, %v3225
      %v3260 = vpack.c.bf16 %v3236, %v3233
      %v3261 = vpack.c.bf16 %v3244, %v3241
      %v3262 = vpack.c.bf16 %v3252, %v3249
      %s3263 = scalar_lea.vmem %s4, 768
      %v3264 = vld [vmem:[%s3263] sm:$0xff]
      %v3265 = vld [vmem:[%s3263 + $0x8] sm:$0xff]
      %v3266 = vld [vmem:[%s3263 + $0x10] sm:$0xff]
      %v3267 = vld [vmem:[%s3263 + $0x18] sm:$0xff]
      %v3268 = vld [vmem:[%s3263 + $0x20] sm:$0xff]
      %v3269 = vld [vmem:[%s3263 + $0x28] sm:$0xff]
      %v3270 = vld [vmem:[%s3263 + $0x30] sm:$0xff]
      %v3271 = vld [vmem:[%s3263 + $0x38] sm:$0xff]
      %v3272 = vld [vmem:[%s3263 + $0x40] sm:$0xff]
      %v3273 = vld [vmem:[%s3263 + $0x48] sm:$0xff]
      %v3274 = vld [vmem:[%s3263 + $0x50] sm:$0xff]
      %v3275 = vld [vmem:[%s3263 + $0x58] sm:$0xff]
      %v3276 = vld [vmem:[%s3263 + $0x60] sm:$0xff]
      %v3277 = vld [vmem:[%s3263 + $0x68] sm:$0xff]
      %v3278 = vld [vmem:[%s3263 + $0x70] sm:$0xff]
      %v3279 = vld [vmem:[%s3263 + $0x78] sm:$0xff]
      %v3296 = vunpack.c.l.b16 %v3264
      %v3297 = vunpack.c.h.b16 %v3264
      %v3298 = vunpack.c.l.b16 %v3265
      %v3299 = vunpack.c.h.b16 %v3265
      %v3300 = vunpack.c.l.b16 %v3266
      %v3301 = vunpack.c.h.b16 %v3266
      %v3302 = vunpack.c.l.b16 %v3267
      %v3303 = vunpack.c.h.b16 %v3267
      %v3304 = vunpack.c.l.b16 %v3268
      %v3305 = vunpack.c.h.b16 %v3268
      %v3306 = vunpack.c.l.b16 %v3269
      %v3307 = vunpack.c.h.b16 %v3269
      %v3308 = vunpack.c.l.b16 %v3270
      %v3309 = vunpack.c.h.b16 %v3270
      %v3310 = vunpack.c.l.b16 %v3271
      %v3311 = vunpack.c.h.b16 %v3271
      %v3312 = vunpack.c.l.b16 %v3272
      %v3313 = vunpack.c.h.b16 %v3272
      %v3314 = vunpack.c.l.b16 %v3273
      %v3315 = vunpack.c.h.b16 %v3273
      %v3316 = vunpack.c.l.b16 %v3274
      %v3317 = vunpack.c.h.b16 %v3274
      %v3318 = vunpack.c.l.b16 %v3275
      %v3319 = vunpack.c.h.b16 %v3275
      %v3320 = vunpack.c.l.b16 %v3276
      %v3321 = vunpack.c.h.b16 %v3276
      %v3322 = vunpack.c.l.b16 %v3277
      %v3323 = vunpack.c.h.b16 %v3277
      %v3324 = vunpack.c.l.b16 %v3278
      %v3325 = vunpack.c.h.b16 %v3278
      %v3326 = vunpack.c.l.b16 %v3279
      %v3327 = vunpack.c.h.b16 %v3279
      %v3328 = vpack.c.b16 %v3298, %v3296
      %v3329 = vpack.c.b16 %v3299, %v3297
      %v3330 = vpack.c.b16 %v3302, %v3300
      %v3331 = vpack.c.b16 %v3303, %v3301
      %v3332 = vpack.c.b16 %v3306, %v3304
      %v3333 = vpack.c.b16 %v3307, %v3305
      %v3334 = vpack.c.b16 %v3310, %v3308
      %v3335 = vpack.c.b16 %v3311, %v3309
      %v3336 = vpack.c.b16 %v3314, %v3312
      %v3337 = vpack.c.b16 %v3315, %v3313
      %v3338 = vpack.c.b16 %v3318, %v3316
      %v3339 = vpack.c.b16 %v3319, %v3317
      %v3340 = vpack.c.b16 %v3322, %v3320
      %v3341 = vpack.c.b16 %v3323, %v3321
      %v3342 = vpack.c.b16 %v3326, %v3324
      %v3343 = vpack.c.b16 %v3327, %v3325
      %3360 = vmatprep.subr.bf16.mxu0 %v3329
      %3361 = vmatpush1.bf16.msra.mxu0 %v3328
      %3362 = vmatprep.subr.bf16.mxu0 %v3331
      %3363 = vmatpush1.bf16.msra.mxu0 %v3330
      %3364 = vmatprep.subr.bf16.mxu0 %v3333
      %3365 = vmatpush1.bf16.msra.mxu0 %v3332
      %3366 = vmatprep.subr.bf16.mxu0 %v3335
      %3367 = vmatpush1.bf16.msra.mxu0 %v3334
      %3368 = vmatprep.subr.bf16.mxu0 %v3337
      %3369 = vmatpush1.bf16.msra.mxu0 %v3336
      %3370 = vmatprep.subr.bf16.mxu0 %v3339
      %3371 = vmatpush1.bf16.msra.mxu0 %v3338
      %3372 = vmatprep.subr.bf16.mxu0 %v3341
      %3373 = vmatpush1.bf16.msra.mxu0 %v3340
      %3374 = vmatprep.subr.bf16.mxu0 %v3343
      %3375 = vmatpush1.bf16.msra.mxu0 %v3342
      %3376 = vmatprep.subr.bf16.mxu0 0
      %3377 = vmatpush1.bf16.msra.mxu0 0
      %3378 = vmatprep.subr.bf16.mxu0 0
      %3379 = vmatpush1.bf16.msra.mxu0 0
      %3380 = vmatprep.subr.bf16.mxu0 0
      %3381 = vmatpush1.bf16.msra.mxu0 0
      %3382 = vmatprep.subr.bf16.mxu0 0
      %3383 = vmatpush1.bf16.msra.mxu0 0
      %3384 = vmatprep.subr.bf16.mxu0 0
      %3385 = vmatpush1.bf16.msra.mxu0 0
      %3386 = vmatprep.subr.bf16.mxu0 0
      %3387 = vmatpush1.bf16.msra.mxu0 0
      %3388 = vmatprep.subr.bf16.mxu0 0
      %3389 = vmatpush1.bf16.msra.mxu0 0
      %3390 = vmatprep.subr.bf16.mxu0 0
      %3391 = vmatpush1.bf16.msra.mxu0 0
      %3392 = vmatprep.mubr.bf16.mxu0 0
      %3393 = vmatmul.mubr.bf16.gmra.mrb[0].mxu0 %v3255
      %v3394 = vpop.f32.mrb[0].mxu0
      %v3395 = vadd.f32 0.0, %v3394
      %v3396 = vpop.f32.mrb[0].mxu0
      %v3397 = vadd.f32 0.0, %v3396
      %v3398 = vpop.f32.mrb[0].mxu0
      %v3399 = vadd.f32 0.0, %v3398
      %v3400 = vpop.f32.mrb[0].mxu0
      %v3401 = vadd.f32 0.0, %v3400
      %3402 = vmatprep.mubr.bf16.mxu0 0
      %3403 = vmatmul.mubr.bf16.gmra.mrb[0].mxu0 %v3256
      %v3404 = vpop.f32.mrb[0].mxu0
      %v3405 = vadd.f32 0.0, %v3404
      %v3406 = vpop.f32.mrb[0].mxu0
      %v3407 = vadd.f32 0.0, %v3406
      %v3408 = vpop.f32.mrb[0].mxu0
      %v3409 = vadd.f32 0.0, %v3408
      %v3410 = vpop.f32.mrb[0].mxu0
      %v3411 = vadd.f32 0.0, %v3410
      %3412 = vmatprep.mubr.bf16.mxu0 0
      %3413 = vmatmul.mubr.bf16.gmra.mrb[0].mxu0 %v3257
      %v3414 = vpop.f32.mrb[0].mxu0
      %v3415 = vadd.f32 0.0, %v3414
      %v3416 = vpop.f32.mrb[0].mxu0
      %v3417 = vadd.f32 0.0, %v3416
      %v3418 = vpop.f32.mrb[0].mxu0
      %v3419 = vadd.f32 0.0, %v3418
      %v3420 = vpop.f32.mrb[0].mxu0
      %v3421 = vadd.f32 0.0, %v3420
      %3422 = vmatprep.mubr.bf16.mxu0 0
      %3423 = vmatmul.mubr.bf16.gmra.mrb[0].mxu0 %v3258
      %v3424 = vpop.f32.mrb[0].mxu0
      %v3425 = vadd.f32 0.0, %v3424
      %v3426 = vpop.f32.mrb[0].mxu0
      %v3427 = vadd.f32 0.0, %v3426
      %v3428 = vpop.f32.mrb[0].mxu0
      %v3429 = vadd.f32 0.0, %v3428
      %v3430 = vpop.f32.mrb[0].mxu0
      %v3431 = vadd.f32 0.0, %v3430
      %3432 = vmatprep.mubr.bf16.mxu0 0
      %3433 = vmatmul.mubr.bf16.gmra.mrb[0].mxu0 %v3259
      %v3434 = vpop.f32.mrb[0].mxu0
      %v3435 = vadd.f32 0.0, %v3434
      %v3436 = vpop.f32.mrb[0].mxu0
      %v3437 = vadd.f32 0.0, %v3436
      %v3438 = vpop.f32.mrb[0].mxu0
      %v3439 = vadd.f32 0.0, %v3438
      %v3440 = vpop.f32.mrb[0].mxu0
      %v3441 = vadd.f32 0.0, %v3440
      %3442 = vmatprep.mubr.bf16.mxu0 0
      %3443 = vmatmul.mubr.bf16.gmra.mrb[0].mxu0 %v3260
      %v3444 = vpop.f32.mrb[0].mxu0
      %v3445 = vadd.f32 0.0, %v3444
      %v3446 = vpop.f32.mrb[0].mxu0
      %v3447 = vadd.f32 0.0, %v3446
      %v3448 = vpop.f32.mrb[0].mxu0
      %v3449 = vadd.f32 0.0, %v3448
      %v3450 = vpop.f32.mrb[0].mxu0
      %v3451 = vadd.f32 0.0, %v3450
      %3452 = vmatprep.mubr.bf16.mxu0 0
      %3453 = vmatmul.mubr.bf16.gmra.mrb[0].mxu0 %v3261
      %v3454 = vpop.f32.mrb[0].mxu0
      %v3455 = vadd.f32 0.0, %v3454
      %v3456 = vpop.f32.mrb[0].mxu0
      %v3457 = vadd.f32 0.0, %v3456
      %v3458 = vpop.f32.mrb[0].mxu0
      %v3459 = vadd.f32 0.0, %v3458
      %v3460 = vpop.f32.mrb[0].mxu0
      %v3461 = vadd.f32 0.0, %v3460
      %3462 = vmatprep.mubr.bf16.mxu0 0
      %3463 = vmatmul.mubr.bf16.gmra.mrb[0].mxu0 %v3262
      %v3464 = vpop.f32.mrb[0].mxu0
      %v3465 = vadd.f32 0.0, %v3464
      %v3466 = vpop.f32.mrb[0].mxu0
      %v3467 = vadd.f32 0.0, %v3466
      %v3468 = vpop.f32.mrb[0].mxu0
      %v3469 = vadd.f32 0.0, %v3468
      %v3470 = vpop.f32.mrb[0].mxu0
      %v3471 = vadd.f32 0.0, %v3470
      %3472 = vdwg.mxu0
      %v3473 = vadd.f32 %v3061, %v3395
      %v3474 = vadd.f32 %v3062, %v3397
      %v3475 = vadd.f32 %v3063, %v3399
      %v3476 = vadd.f32 %v3064, %v3401
      %v3477 = vadd.f32 %v3065, %v3405
      %v3478 = vadd.f32 %v3066, %v3407
      %v3479 = vadd.f32 %v3067, %v3409
      %v3480 = vadd.f32 %v3068, %v3411
      %v3481 = vadd.f32 %v3069, %v3415
      %v3482 = vadd.f32 %v3070, %v3417
      %v3483 = vadd.f32 %v3071, %v3419
      %v3484 = vadd.f32 %v3072, %v3421
      %v3485 = vadd.f32 %v3073, %v3425
      %v3486 = vadd.f32 %v3074, %v3427
      %v3487 = vadd.f32 %v3075, %v3429
      %v3488 = vadd.f32 %v3076, %v3431
      %v3489 = vadd.f32 %v3077, %v3435
      %v3490 = vadd.f32 %v3078, %v3437
      %v3491 = vadd.f32 %v3079, %v3439
      %v3492 = vadd.f32 %v3080, %v3441
      %v3493 = vadd.f32 %v3081, %v3445
      %v3494 = vadd.f32 %v3082, %v3447
      %v3495 = vadd.f32 %v3083, %v3449
      %v3496 = vadd.f32 %v3084, %v3451
      %v3497 = vadd.f32 %v3085, %v3455
      %v3498 = vadd.f32 %v3086, %v3457
      %v3499 = vadd.f32 %v3087, %v3459
      %v3500 = vadd.f32 %v3088, %v3461
      %v3501 = vadd.f32 %v3089, %v3465
      %v3502 = vadd.f32 %v3090, %v3467
      %v3503 = vadd.f32 %v3091, %v3469
      %v3504 = vadd.f32 %v3092, %v3471
      %s3505 = scalar_lea.vmem %s3, 448
      %v3506 = vld [vmem:[%s3505] sm:$0xf]
      %v3507 = vld [vmem:[%s3505 + $0x4] sm:$0xf]
      %v3508 = vld [vmem:[%s3505 + $0x8] sm:$0xf]
      %v3509 = vld [vmem:[%s3505 + $0xc] sm:$0xf]
      %v3510 = vld [vmem:[%s3505 + $0x10] sm:$0xf]
      %v3511 = vld [vmem:[%s3505 + $0x14] sm:$0xf]
      %v3512 = vld [vmem:[%s3505 + $0x18] sm:$0xf]
      %v3513 = vld [vmem:[%s3505 + $0x1c] sm:$0xf]
      %v3514 = vld [vmem:[%s3505 + $0x20] sm:$0xf]
      %v3515 = vld [vmem:[%s3505 + $0x24] sm:$0xf]
      %v3516 = vld [vmem:[%s3505 + $0x28] sm:$0xf]
      %v3517 = vld [vmem:[%s3505 + $0x2c] sm:$0xf]
      %v3518 = vld [vmem:[%s3505 + $0x30] sm:$0xf]
      %v3519 = vld [vmem:[%s3505 + $0x34] sm:$0xf]
      %v3520 = vld [vmem:[%s3505 + $0x38] sm:$0xf]
      %v3521 = vld [vmem:[%s3505 + $0x3c] sm:$0xf]
      %v3538 = vunpack.c.l.b16 %v3506
      %v3539 = vunpack.c.l.b16 %v3507
      %v3540 = vunpack.c.l.b16 %v3508
      %v3541 = vunpack.c.l.b16 %v3509
      %v3542 = vunpack.c.l.b16 %v3510
      %v3543 = vunpack.c.l.b16 %v3511
      %v3544 = vunpack.c.l.b16 %v3512
      %v3545 = vunpack.c.l.b16 %v3513
      %v3546 = vunpack.c.l.b16 %v3514
      %v3547 = vunpack.c.l.b16 %v3515
      %v3548 = vunpack.c.l.b16 %v3516
      %v3549 = vunpack.c.l.b16 %v3517
      %v3550 = vunpack.c.l.b16 %v3518
      %v3551 = vunpack.c.l.b16 %v3519
      %v3552 = vunpack.c.l.b16 %v3520
      %v3553 = vunpack.c.l.b16 %v3521
      %v3554 = vpack.c.b16 %v3539, %v3538
      %v3555 = vpack.c.b16 %v3541, %v3540
      %v3556 = vpack.c.b16 %v3543, %v3542
      %v3557 = vpack.c.b16 %v3545, %v3544
      %v3558 = vpack.c.b16 %v3547, %v3546
      %v3559 = vpack.c.b16 %v3549, %v3548
      %v3560 = vpack.c.b16 %v3551, %v3550
      %v3561 = vpack.c.b16 %v3553, %v3552
      %3570 = vmatprep.subr.bf16.mxu0 0
      %3571 = vmatpush1.bf16.msra.mxu0 %v679
      %3572 = vmatprep.subr.bf16.mxu0 0
      %3573 = vmatpush1.bf16.msra.mxu0 %v680
      %3574 = vmatprep.subr.bf16.mxu0 0
      %3575 = vmatpush1.bf16.msra.mxu0 %v681
      %3576 = vmatprep.subr.bf16.mxu0 0
      %3577 = vmatpush1.bf16.msra.mxu0 %v682
      %3578 = vmatprep.subr.bf16.mxu0 0
      %3579 = vmatpush1.bf16.msra.mxu0 %v683
      %3580 = vmatprep.subr.bf16.mxu0 0
      %3581 = vmatpush1.bf16.msra.mxu0 %v684
      %3582 = vmatprep.subr.bf16.mxu0 0
      %3583 = vmatpush1.bf16.msra.mxu0 %v685
      %3584 = vmatprep.subr.bf16.mxu0 0
      %3585 = vmatpush1.bf16.msra.mxu0 %v686
      %3586 = vmatprep.subr.bf16.mxu0 0
      %3587 = vmatpush1.bf16.msra.mxu0 0
      %3588 = vmatprep.subr.bf16.mxu0 0
      %3589 = vmatpush1.bf16.msra.mxu0 0
      %3590 = vmatprep.subr.bf16.mxu0 0
      %3591 = vmatpush1.bf16.msra.mxu0 0
      %3592 = vmatprep.subr.bf16.mxu0 0
      %3593 = vmatpush1.bf16.msra.mxu0 0
      %3594 = vmatprep.subr.bf16.mxu0 0
      %3595 = vmatpush1.bf16.msra.mxu0 0
      %3596 = vmatprep.subr.bf16.mxu0 0
      %3597 = vmatpush1.bf16.msra.mxu0 0
      %3598 = vmatprep.subr.bf16.mxu0 0
      %3599 = vmatpush1.bf16.msra.mxu0 0
      %3600 = vmatprep.subr.bf16.mxu0 0
      %3601 = vmatpush1.bf16.msra.mxu0 0
      %3602 = vmatprep.mubr.bf16.mxu0 0
      %3603 = vmatmul.mubr.bf16.gmra.mrb[0].mxu0 %v3554
      %v3604 = vpop.f32.mrb[0].mxu0
      %v3605 = vadd.f32 0.0, %v3604
      %v3606 = vpop.f32.mrb[0].mxu0
      %v3607 = vpop.f32.mrb[0].mxu0
      %v3608 = vadd.f32 0.0, %v3607
      %v3609 = vpop.f32.mrb[0].mxu0
      %3610 = vmatprep.mubr.bf16.mxu0 0
      %3611 = vmatmul.mubr.bf16.gmra.mrb[0].mxu0 %v3555
      %v3612 = vpop.f32.mrb[0].mxu0
      %v3613 = vadd.f32 0.0, %v3612
      %v3614 = vpop.f32.mrb[0].mxu0
      %v3615 = vpop.f32.mrb[0].mxu0
      %v3616 = vadd.f32 0.0, %v3615
      %v3617 = vpop.f32.mrb[0].mxu0
      %3618 = vmatprep.mubr.bf16.mxu0 0
      %3619 = vmatmul.mubr.bf16.gmra.mrb[0].mxu0 %v3556
      %v3620 = vpop.f32.mrb[0].mxu0
      %v3621 = vadd.f32 0.0, %v3620
      %v3622 = vpop.f32.mrb[0].mxu0
      %v3623 = vpop.f32.mrb[0].mxu0
      %v3624 = vadd.f32 0.0, %v3623
      %v3625 = vpop.f32.mrb[0].mxu0
      %3626 = vmatprep.mubr.bf16.mxu0 0
      %3627 = vmatmul.mubr.bf16.gmra.mrb[0].mxu0 %v3557
      %v3628 = vpop.f32.mrb[0].mxu0
      %v3629 = vadd.f32 0.0, %v3628
      %v3630 = vpop.f32.mrb[0].mxu0
      %v3631 = vpop.f32.mrb[0].mxu0
      %v3632 = vadd.f32 0.0, %v3631
      %v3633 = vpop.f32.mrb[0].mxu0
      %3634 = vmatprep.mubr.bf16.mxu0 0
      %3635 = vmatmul.mubr.bf16.gmra.mrb[0].mxu0 %v3558
      %v3636 = vpop.f32.mrb[0].mxu0
      %v3637 = vadd.f32 0.0, %v3636
      %v3638 = vpop.f32.mrb[0].mxu0
      %v3639 = vpop.f32.mrb[0].mxu0
      %v3640 = vadd.f32 0.0, %v3639
      %v3641 = vpop.f32.mrb[0].mxu0
      %3642 = vmatprep.mubr.bf16.mxu0 0
      %3643 = vmatmul.mubr.bf16.gmra.mrb[0].mxu0 %v3559
      %v3644 = vpop.f32.mrb[0].mxu0
      %v3645 = vadd.f32 0.0, %v3644
      %v3646 = vpop.f32.mrb[0].mxu0
      %v3647 = vpop.f32.mrb[0].mxu0
      %v3648 = vadd.f32 0.0, %v3647
      %v3649 = vpop.f32.mrb[0].mxu0
      %3650 = vmatprep.mubr.bf16.mxu0 0
      %3651 = vmatmul.mubr.bf16.gmra.mrb[0].mxu0 %v3560
      %v3652 = vpop.f32.mrb[0].mxu0
      %v3653 = vadd.f32 0.0, %v3652
      %v3654 = vpop.f32.mrb[0].mxu0
      %v3655 = vpop.f32.mrb[0].mxu0
      %v3656 = vadd.f32 0.0, %v3655
      %v3657 = vpop.f32.mrb[0].mxu0
      %3658 = vmatprep.mubr.bf16.mxu0 0
      %3659 = vmatmul.mubr.bf16.gmra.mrb[0].mxu0 %v3561
      %v3660 = vpop.f32.mrb[0].mxu0
      %v3661 = vadd.f32 0.0, %v3660
      %v3662 = vpop.f32.mrb[0].mxu0
      %v3663 = vpop.f32.mrb[0].mxu0
      %v3664 = vadd.f32 0.0, %v3663
      %v3665 = vpop.f32.mrb[0].mxu0
      %3666 = vdwg.mxu0
      %v3667 = vpack.c.bf16 %v3608, %v3605
      %v3668 = vpack.c.bf16 %v3616, %v3613
      %v3669 = vpack.c.bf16 %v3624, %v3621
      %v3670 = vpack.c.bf16 %v3632, %v3629
      %v3671 = vpack.c.bf16 %v3640, %v3637
      %v3672 = vpack.c.bf16 %v3648, %v3645
      %v3673 = vpack.c.bf16 %v3656, %v3653
      %v3674 = vpack.c.bf16 %v3664, %v3661
      %s3675 = scalar_lea.vmem %s4, 896
      %v3676 = vld [vmem:[%s3675] sm:$0xff]
      %v3677 = vld [vmem:[%s3675 + $0x8] sm:$0xff]
      %v3678 = vld [vmem:[%s3675 + $0x10] sm:$0xff]
      %v3679 = vld [vmem:[%s3675 + $0x18] sm:$0xff]
      %v3680 = vld [vmem:[%s3675 + $0x20] sm:$0xff]
      %v3681 = vld [vmem:[%s3675 + $0x28] sm:$0xff]
      %v3682 = vld [vmem:[%s3675 + $0x30] sm:$0xff]
      %v3683 = vld [vmem:[%s3675 + $0x38] sm:$0xff]
      %v3684 = vld [vmem:[%s3675 + $0x40] sm:$0xff]
      %v3685 = vld [vmem:[%s3675 + $0x48] sm:$0xff]
      %v3686 = vld [vmem:[%s3675 + $0x50] sm:$0xff]
      %v3687 = vld [vmem:[%s3675 + $0x58] sm:$0xff]
      %v3688 = vld [vmem:[%s3675 + $0x60] sm:$0xff]
      %v3689 = vld [vmem:[%s3675 + $0x68] sm:$0xff]
      %v3690 = vld [vmem:[%s3675 + $0x70] sm:$0xff]
      %v3691 = vld [vmem:[%s3675 + $0x78] sm:$0xff]
      %v3708 = vunpack.c.l.b16 %v3676
      %v3709 = vunpack.c.h.b16 %v3676
      %v3710 = vunpack.c.l.b16 %v3677
      %v3711 = vunpack.c.h.b16 %v3677
      %v3712 = vunpack.c.l.b16 %v3678
      %v3713 = vunpack.c.h.b16 %v3678
      %v3714 = vunpack.c.l.b16 %v3679
      %v3715 = vunpack.c.h.b16 %v3679
      %v3716 = vunpack.c.l.b16 %v3680
      %v3717 = vunpack.c.h.b16 %v3680
      %v3718 = vunpack.c.l.b16 %v3681
      %v3719 = vunpack.c.h.b16 %v3681
      %v3720 = vunpack.c.l.b16 %v3682
      %v3721 = vunpack.c.h.b16 %v3682
      %v3722 = vunpack.c.l.b16 %v3683
      %v3723 = vunpack.c.h.b16 %v3683
      %v3724 = vunpack.c.l.b16 %v3684
      %v3725 = vunpack.c.h.b16 %v3684
      %v3726 = vunpack.c.l.b16 %v3685
      %v3727 = vunpack.c.h.b16 %v3685
      %v3728 = vunpack.c.l.b16 %v3686
      %v3729 = vunpack.c.h.b16 %v3686
      %v3730 = vunpack.c.l.b16 %v3687
      %v3731 = vunpack.c.h.b16 %v3687
      %v3732 = vunpack.c.l.b16 %v3688
      %v3733 = vunpack.c.h.b16 %v3688
      %v3734 = vunpack.c.l.b16 %v3689
      %v3735 = vunpack.c.h.b16 %v3689
      %v3736 = vunpack.c.l.b16 %v3690
      %v3737 = vunpack.c.h.b16 %v3690
      %v3738 = vunpack.c.l.b16 %v3691
      %v3739 = vunpack.c.h.b16 %v3691
      %v3740 = vpack.c.b16 %v3710, %v3708
      %v3741 = vpack.c.b16 %v3711, %v3709
      %v3742 = vpack.c.b16 %v3714, %v3712
      %v3743 = vpack.c.b16 %v3715, %v3713
      %v3744 = vpack.c.b16 %v3718, %v3716
      %v3745 = vpack.c.b16 %v3719, %v3717
      %v3746 = vpack.c.b16 %v3722, %v3720
      %v3747 = vpack.c.b16 %v3723, %v3721
      %v3748 = vpack.c.b16 %v3726, %v3724
      %v3749 = vpack.c.b16 %v3727, %v3725
      %v3750 = vpack.c.b16 %v3730, %v3728
      %v3751 = vpack.c.b16 %v3731, %v3729
      %v3752 = vpack.c.b16 %v3734, %v3732
      %v3753 = vpack.c.b16 %v3735, %v3733
      %v3754 = vpack.c.b16 %v3738, %v3736
      %v3755 = vpack.c.b16 %v3739, %v3737
      %3772 = vmatprep.subr.bf16.mxu0 %v3741
      %3773 = vmatpush1.bf16.msra.mxu0 %v3740
      %3774 = vmatprep.subr.bf16.mxu0 %v3743
      %3775 = vmatpush1.bf16.msra.mxu0 %v3742
      %3776 = vmatprep.subr.bf16.mxu0 %v3745
      %3777 = vmatpush1.bf16.msra.mxu0 %v3744
      %3778 = vmatprep.subr.bf16.mxu0 %v3747
      %3779 = vmatpush1.bf16.msra.mxu0 %v3746
      %3780 = vmatprep.subr.bf16.mxu0 %v3749
      %3781 = vmatpush1.bf16.msra.mxu0 %v3748
      %3782 = vmatprep.subr.bf16.mxu0 %v3751
      %3783 = vmatpush1.bf16.msra.mxu0 %v3750
      %3784 = vmatprep.subr.bf16.mxu0 %v3753
      %3785 = vmatpush1.bf16.msra.mxu0 %v3752
      %3786 = vmatprep.subr.bf16.mxu0 %v3755
      %3787 = vmatpush1.bf16.msra.mxu0 %v3754
      %3788 = vmatprep.subr.bf16.mxu0 0
      %3789 = vmatpush1.bf16.msra.mxu0 0
      %3790 = vmatprep.subr.bf16.mxu0 0
      %3791 = vmatpush1.bf16.msra.mxu0 0
      %3792 = vmatprep.subr.bf16.mxu0 0
      %3793 = vmatpush1.bf16.msra.mxu0 0
      %3794 = vmatprep.subr.bf16.mxu0 0
      %3795 = vmatpush1.bf16.msra.mxu0 0
      %3796 = vmatprep.subr.bf16.mxu0 0
      %3797 = vmatpush1.bf16.msra.mxu0 0
      %3798 = vmatprep.subr.bf16.mxu0 0
      %3799 = vmatpush1.bf16.msra.mxu0 0
      %3800 = vmatprep.subr.bf16.mxu0 0
      %3801 = vmatpush1.bf16.msra.mxu0 0
      %3802 = vmatprep.subr.bf16.mxu0 0
      %3803 = vmatpush1.bf16.msra.mxu0 0
      %3804 = vmatprep.mubr.bf16.mxu0 0
      %3805 = vmatmul.mubr.bf16.gmra.mrb[0].mxu0 %v3667
      %v3806 = vpop.f32.mrb[0].mxu0
      %v3807 = vadd.f32 0.0, %v3806
      %v3808 = vpop.f32.mrb[0].mxu0
      %v3809 = vadd.f32 0.0, %v3808
      %v3810 = vpop.f32.mrb[0].mxu0
      %v3811 = vadd.f32 0.0, %v3810
      %v3812 = vpop.f32.mrb[0].mxu0
      %v3813 = vadd.f32 0.0, %v3812
      %3814 = vmatprep.mubr.bf16.mxu0 0
      %3815 = vmatmul.mubr.bf16.gmra.mrb[0].mxu0 %v3668
      %v3816 = vpop.f32.mrb[0].mxu0
      %v3817 = vadd.f32 0.0, %v3816
      %v3818 = vpop.f32.mrb[0].mxu0
      %v3819 = vadd.f32 0.0, %v3818
      %v3820 = vpop.f32.mrb[0].mxu0
      %v3821 = vadd.f32 0.0, %v3820
      %v3822 = vpop.f32.mrb[0].mxu0
      %v3823 = vadd.f32 0.0, %v3822
      %3824 = vmatprep.mubr.bf16.mxu0 0
      %3825 = vmatmul.mubr.bf16.gmra.mrb[0].mxu0 %v3669
      %v3826 = vpop.f32.mrb[0].mxu0
      %v3827 = vadd.f32 0.0, %v3826
      %v3828 = vpop.f32.mrb[0].mxu0
      %v3829 = vadd.f32 0.0, %v3828
      %v3830 = vpop.f32.mrb[0].mxu0
      %v3831 = vadd.f32 0.0, %v3830
      %v3832 = vpop.f32.mrb[0].mxu0
      %v3833 = vadd.f32 0.0, %v3832
      %3834 = vmatprep.mubr.bf16.mxu0 0
      %3835 = vmatmul.mubr.bf16.gmra.mrb[0].mxu0 %v3670
      %v3836 = vpop.f32.mrb[0].mxu0
      %v3837 = vadd.f32 0.0, %v3836
      %v3838 = vpop.f32.mrb[0].mxu0
      %v3839 = vadd.f32 0.0, %v3838
      %v3840 = vpop.f32.mrb[0].mxu0
      %v3841 = vadd.f32 0.0, %v3840
      %v3842 = vpop.f32.mrb[0].mxu0
      %v3843 = vadd.f32 0.0, %v3842
      %3844 = vmatprep.mubr.bf16.mxu0 0
      %3845 = vmatmul.mubr.bf16.gmra.mrb[0].mxu0 %v3671
      %v3846 = vpop.f32.mrb[0].mxu0
      %v3847 = vadd.f32 0.0, %v3846
      %v3848 = vpop.f32.mrb[0].mxu0
      %v3849 = vadd.f32 0.0, %v3848
      %v3850 = vpop.f32.mrb[0].mxu0
      %v3851 = vadd.f32 0.0, %v3850
      %v3852 = vpop.f32.mrb[0].mxu0
      %v3853 = vadd.f32 0.0, %v3852
      %3854 = vmatprep.mubr.bf16.mxu0 0
      %3855 = vmatmul.mubr.bf16.gmra.mrb[0].mxu0 %v3672
      %v3856 = vpop.f32.mrb[0].mxu0
      %v3857 = vadd.f32 0.0, %v3856
      %v3858 = vpop.f32.mrb[0].mxu0
      %v3859 = vadd.f32 0.0, %v3858
      %v3860 = vpop.f32.mrb[0].mxu0
      %v3861 = vadd.f32 0.0, %v3860
      %v3862 = vpop.f32.mrb[0].mxu0
      %v3863 = vadd.f32 0.0, %v3862
      %3864 = vmatprep.mubr.bf16.mxu0 0
      %3865 = vmatmul.mubr.bf16.gmra.mrb[0].mxu0 %v3673
      %v3866 = vpop.f32.mrb[0].mxu0
      %v3867 = vadd.f32 0.0, %v3866
      %v3868 = vpop.f32.mrb[0].mxu0
      %v3869 = vadd.f32 0.0, %v3868
      %v3870 = vpop.f32.mrb[0].mxu0
      %v3871 = vadd.f32 0.0, %v3870
      %v3872 = vpop.f32.mrb[0].mxu0
      %v3873 = vadd.f32 0.0, %v3872
      %3874 = vmatprep.mubr.bf16.mxu0 0
      %3875 = vmatmul.mubr.bf16.gmra.mrb[0].mxu0 %v3674
      %v3876 = vpop.f32.mrb[0].mxu0
      %v3877 = vadd.f32 0.0, %v3876
      %v3878 = vpop.f32.mrb[0].mxu0
      %v3879 = vadd.f32 0.0, %v3878
      %v3880 = vpop.f32.mrb[0].mxu0
      %v3881 = vadd.f32 0.0, %v3880
      %v3882 = vpop.f32.mrb[0].mxu0
      %v3883 = vadd.f32 0.0, %v3882
      %3884 = vdwg.mxu0
      %v3885 = vadd.f32 %v3473, %v3807
      %v3886 = vadd.f32 %v3474, %v3809
      %v3887 = vadd.f32 %v3475, %v3811
      %v3888 = vadd.f32 %v3476, %v3813
      %v3889 = vadd.f32 %v3477, %v3817
      %v3890 = vadd.f32 %v3478, %v3819
      %v3891 = vadd.f32 %v3479, %v3821
      %v3892 = vadd.f32 %v3480, %v3823
      %v3893 = vadd.f32 %v3481, %v3827
      %v3894 = vadd.f32 %v3482, %v3829
      %v3895 = vadd.f32 %v3483, %v3831
      %v3896 = vadd.f32 %v3484, %v3833
      %v3897 = vadd.f32 %v3485, %v3837
      %v3898 = vadd.f32 %v3486, %v3839
      %v3899 = vadd.f32 %v3487, %v3841
      %v3900 = vadd.f32 %v3488, %v3843
      %v3901 = vadd.f32 %v3489, %v3847
      %v3902 = vadd.f32 %v3490, %v3849
      %v3903 = vadd.f32 %v3491, %v3851
      %v3904 = vadd.f32 %v3492, %v3853
      %v3905 = vadd.f32 %v3493, %v3857
      %v3906 = vadd.f32 %v3494, %v3859
      %v3907 = vadd.f32 %v3495, %v3861
      %v3908 = vadd.f32 %v3496, %v3863
      %v3909 = vadd.f32 %v3497, %v3867
      %v3910 = vadd.f32 %v3498, %v3869
      %v3911 = vadd.f32 %v3499, %v3871
      %v3912 = vadd.f32 %v3500, %v3873
      %v3913 = vadd.f32 %v3501, %v3877
      %v3914 = vadd.f32 %v3502, %v3879
      %v3915 = vadd.f32 %v3503, %v3881
      %v3916 = vadd.f32 %v3504, %v3883
      %s3917 = scalar_lea.vmem %s3, 512
      %v3918 = vld [vmem:[%s3917] sm:$0xf]
      %v3919 = vld [vmem:[%s3917 + $0x4] sm:$0xf]
      %v3920 = vld [vmem:[%s3917 + $0x8] sm:$0xf]
      %v3921 = vld [vmem:[%s3917 + $0xc] sm:$0xf]
      %v3922 = vld [vmem:[%s3917 + $0x10] sm:$0xf]
      %v3923 = vld [vmem:[%s3917 + $0x14] sm:$0xf]
      %v3924 = vld [vmem:[%s3917 + $0x18] sm:$0xf]
      %v3925 = vld [vmem:[%s3917 + $0x1c] sm:$0xf]
      %v3926 = vld [vmem:[%s3917 + $0x20] sm:$0xf]
      %v3927 = vld [vmem:[%s3917 + $0x24] sm:$0xf]
      %v3928 = vld [vmem:[%s3917 + $0x28] sm:$0xf]
      %v3929 = vld [vmem:[%s3917 + $0x2c] sm:$0xf]
      %v3930 = vld [vmem:[%s3917 + $0x30] sm:$0xf]
      %v3931 = vld [vmem:[%s3917 + $0x34] sm:$0xf]
      %v3932 = vld [vmem:[%s3917 + $0x38] sm:$0xf]
      %v3933 = vld [vmem:[%s3917 + $0x3c] sm:$0xf]
      %v3950 = vunpack.c.l.b16 %v3918
      %v3951 = vunpack.c.l.b16 %v3919
      %v3952 = vunpack.c.l.b16 %v3920
      %v3953 = vunpack.c.l.b16 %v3921
      %v3954 = vunpack.c.l.b16 %v3922
      %v3955 = vunpack.c.l.b16 %v3923
      %v3956 = vunpack.c.l.b16 %v3924
      %v3957 = vunpack.c.l.b16 %v3925
      %v3958 = vunpack.c.l.b16 %v3926
      %v3959 = vunpack.c.l.b16 %v3927
      %v3960 = vunpack.c.l.b16 %v3928
      %v3961 = vunpack.c.l.b16 %v3929
      %v3962 = vunpack.c.l.b16 %v3930
      %v3963 = vunpack.c.l.b16 %v3931
      %v3964 = vunpack.c.l.b16 %v3932
      %v3965 = vunpack.c.l.b16 %v3933
      %v3966 = vpack.c.b16 %v3951, %v3950
      %v3967 = vpack.c.b16 %v3953, %v3952
      %v3968 = vpack.c.b16 %v3955, %v3954
      %v3969 = vpack.c.b16 %v3957, %v3956
      %v3970 = vpack.c.b16 %v3959, %v3958
      %v3971 = vpack.c.b16 %v3961, %v3960
      %v3972 = vpack.c.b16 %v3963, %v3962
      %v3973 = vpack.c.b16 %v3965, %v3964
      %3982 = vmatprep.subr.bf16.mxu0 0
      %3983 = vmatpush1.bf16.msra.mxu0 %v679
      %3984 = vmatprep.subr.bf16.mxu0 0
      %3985 = vmatpush1.bf16.msra.mxu0 %v680
      %3986 = vmatprep.subr.bf16.mxu0 0
      %3987 = vmatpush1.bf16.msra.mxu0 %v681
      %3988 = vmatprep.subr.bf16.mxu0 0
      %3989 = vmatpush1.bf16.msra.mxu0 %v682
      %3990 = vmatprep.subr.bf16.mxu0 0
      %3991 = vmatpush1.bf16.msra.mxu0 %v683
      %3992 = vmatprep.subr.bf16.mxu0 0
      %3993 = vmatpush1.bf16.msra.mxu0 %v684
      %3994 = vmatprep.subr.bf16.mxu0 0
      %3995 = vmatpush1.bf16.msra.mxu0 %v685
      %3996 = vmatprep.subr.bf16.mxu0 0
      %3997 = vmatpush1.bf16.msra.mxu0 %v686
      %3998 = vmatprep.subr.bf16.mxu0 0
      %3999 = vmatpush1.bf16.msra.mxu0 0
      %4000 = vmatprep.subr.bf16.mxu0 0
      %4001 = vmatpush1.bf16.msra.mxu0 0
      %4002 = vmatprep.subr.bf16.mxu0 0
      %4003 = vmatpush1.bf16.msra.mxu0 0
      %4004 = vmatprep.subr.bf16.mxu0 0
      %4005 = vmatpush1.bf16.msra.mxu0 0
      %4006 = vmatprep.subr.bf16.mxu0 0
      %4007 = vmatpush1.bf16.msra.mxu0 0
      %4008 = vmatprep.subr.bf16.mxu0 0
      %4009 = vmatpush1.bf16.msra.mxu0 0
      %4010 = vmatprep.subr.bf16.mxu0 0
      %4011 = vmatpush1.bf16.msra.mxu0 0
      %4012 = vmatprep.subr.bf16.mxu0 0
      %4013 = vmatpush1.bf16.msra.mxu0 0
      %4014 = vmatprep.mubr.bf16.mxu0 0
      %4015 = vmatmul.mubr.bf16.gmra.mrb[0].mxu0 %v3966
      %v4016 = vpop.f32.mrb[0].mxu0
      %v4017 = vadd.f32 0.0, %v4016
      %v4018 = vpop.f32.mrb[0].mxu0
      %v4019 = vpop.f32.mrb[0].mxu0
      %v4020 = vadd.f32 0.0, %v4019
      %v4021 = vpop.f32.mrb[0].mxu0
      %4022 = vmatprep.mubr.bf16.mxu0 0
      %4023 = vmatmul.mubr.bf16.gmra.mrb[0].mxu0 %v3967
      %v4024 = vpop.f32.mrb[0].mxu0
      %v4025 = vadd.f32 0.0, %v4024
      %v4026 = vpop.f32.mrb[0].mxu0
      %v4027 = vpop.f32.mrb[0].mxu0
      %v4028 = vadd.f32 0.0, %v4027
      %v4029 = vpop.f32.mrb[0].mxu0
      %4030 = vmatprep.mubr.bf16.mxu0 0
      %4031 = vmatmul.mubr.bf16.gmra.mrb[0].mxu0 %v3968
      %v4032 = vpop.f32.mrb[0].mxu0
      %v4033 = vadd.f32 0.0, %v4032
      %v4034 = vpop.f32.mrb[0].mxu0
      %v4035 = vpop.f32.mrb[0].mxu0
      %v4036 = vadd.f32 0.0, %v4035
      %v4037 = vpop.f32.mrb[0].mxu0
      %4038 = vmatprep.mubr.bf16.mxu0 0
      %4039 = vmatmul.mubr.bf16.gmra.mrb[0].mxu0 %v3969
      %v4040 = vpop.f32.mrb[0].mxu0
      %v4041 = vadd.f32 0.0, %v4040
      %v4042 = vpop.f32.mrb[0].mxu0
      %v4043 = vpop.f32.mrb[0].mxu0
      %v4044 = vadd.f32 0.0, %v4043
      %v4045 = vpop.f32.mrb[0].mxu0
      %4046 = vmatprep.mubr.bf16.mxu0 0
      %4047 = vmatmul.mubr.bf16.gmra.mrb[0].mxu0 %v3970
      %v4048 = vpop.f32.mrb[0].mxu0
      %v4049 = vadd.f32 0.0, %v4048
      %v4050 = vpop.f32.mrb[0].mxu0
      %v4051 = vpop.f32.mrb[0].mxu0
      %v4052 = vadd.f32 0.0, %v4051
      %v4053 = vpop.f32.mrb[0].mxu0
      %4054 = vmatprep.mubr.bf16.mxu0 0
      %4055 = vmatmul.mubr.bf16.gmra.mrb[0].mxu0 %v3971
      %v4056 = vpop.f32.mrb[0].mxu0
      %v4057 = vadd.f32 0.0, %v4056
      %v4058 = vpop.f32.mrb[0].mxu0
      %v4059 = vpop.f32.mrb[0].mxu0
      %v4060 = vadd.f32 0.0, %v4059
      %v4061 = vpop.f32.mrb[0].mxu0
      %4062 = vmatprep.mubr.bf16.mxu0 0
      %4063 = vmatmul.mubr.bf16.gmra.mrb[0].mxu0 %v3972
      %v4064 = vpop.f32.mrb[0].mxu0
      %v4065 = vadd.f32 0.0, %v4064
      %v4066 = vpop.f32.mrb[0].mxu0
      %v4067 = vpop.f32.mrb[0].mxu0
      %v4068 = vadd.f32 0.0, %v4067
      %v4069 = vpop.f32.mrb[0].mxu0
      %4070 = vmatprep.mubr.bf16.mxu0 0
      %4071 = vmatmul.mubr.bf16.gmra.mrb[0].mxu0 %v3973
      %v4072 = vpop.f32.mrb[0].mxu0
      %v4073 = vadd.f32 0.0, %v4072
      %v4074 = vpop.f32.mrb[0].mxu0
      %v4075 = vpop.f32.mrb[0].mxu0
      %v4076 = vadd.f32 0.0, %v4075
      %v4077 = vpop.f32.mrb[0].mxu0
      %4078 = vdwg.mxu0
      %v4079 = vpack.c.bf16 %v4020, %v4017
      %v4080 = vpack.c.bf16 %v4028, %v4025
      %v4081 = vpack.c.bf16 %v4036, %v4033
      %v4082 = vpack.c.bf16 %v4044, %v4041
      %v4083 = vpack.c.bf16 %v4052, %v4049
      %v4084 = vpack.c.bf16 %v4060, %v4057
      %v4085 = vpack.c.bf16 %v4068, %v4065
      %v4086 = vpack.c.bf16 %v4076, %v4073
      %s4087 = scalar_lea.vmem %s4, 1024
      %v4088 = vld [vmem:[%s4087] sm:$0xff]
      %v4089 = vld [vmem:[%s4087 + $0x8] sm:$0xff]
      %v4090 = vld [vmem:[%s4087 + $0x10] sm:$0xff]
      %v4091 = vld [vmem:[%s4087 + $0x18] sm:$0xff]
      %v4092 = vld [vmem:[%s4087 + $0x20] sm:$0xff]
      %v4093 = vld [vmem:[%s4087 + $0x28] sm:$0xff]
      %v4094 = vld [vmem:[%s4087 + $0x30] sm:$0xff]
      %v4095 = vld [vmem:[%s4087 + $0x38] sm:$0xff]
      %v4096 = vld [vmem:[%s4087 + $0x40] sm:$0xff]
      %v4097 = vld [vmem:[%s4087 + $0x48] sm:$0xff]
      %v4098 = vld [vmem:[%s4087 + $0x50] sm:$0xff]
      %v4099 = vld [vmem:[%s4087 + $0x58] sm:$0xff]
      %v4100 = vld [vmem:[%s4087 + $0x60] sm:$0xff]
      %v4101 = vld [vmem:[%s4087 + $0x68] sm:$0xff]
      %v4102 = vld [vmem:[%s4087 + $0x70] sm:$0xff]
      %v4103 = vld [vmem:[%s4087 + $0x78] sm:$0xff]
      %v4120 = vunpack.c.l.b16 %v4088
      %v4121 = vunpack.c.h.b16 %v4088
      %v4122 = vunpack.c.l.b16 %v4089
      %v4123 = vunpack.c.h.b16 %v4089
      %v4124 = vunpack.c.l.b16 %v4090
      %v4125 = vunpack.c.h.b16 %v4090
      %v4126 = vunpack.c.l.b16 %v4091
      %v4127 = vunpack.c.h.b16 %v4091
      %v4128 = vunpack.c.l.b16 %v4092
      %v4129 = vunpack.c.h.b16 %v4092
      %v4130 = vunpack.c.l.b16 %v4093
      %v4131 = vunpack.c.h.b16 %v4093
      %v4132 = vunpack.c.l.b16 %v4094
      %v4133 = vunpack.c.h.b16 %v4094
      %v4134 = vunpack.c.l.b16 %v4095
      %v4135 = vunpack.c.h.b16 %v4095
      %v4136 = vunpack.c.l.b16 %v4096
      %v4137 = vunpack.c.h.b16 %v4096
      %v4138 = vunpack.c.l.b16 %v4097
      %v4139 = vunpack.c.h.b16 %v4097
      %v4140 = vunpack.c.l.b16 %v4098
      %v4141 = vunpack.c.h.b16 %v4098
      %v4142 = vunpack.c.l.b16 %v4099
      %v4143 = vunpack.c.h.b16 %v4099
      %v4144 = vunpack.c.l.b16 %v4100
      %v4145 = vunpack.c.h.b16 %v4100
      %v4146 = vunpack.c.l.b16 %v4101
      %v4147 = vunpack.c.h.b16 %v4101
      %v4148 = vunpack.c.l.b16 %v4102
      %v4149 = vunpack.c.h.b16 %v4102
      %v4150 = vunpack.c.l.b16 %v4103
      %v4151 = vunpack.c.h.b16 %v4103
      %v4152 = vpack.c.b16 %v4122, %v4120
      %v4153 = vpack.c.b16 %v4123, %v4121
      %v4154 = vpack.c.b16 %v4126, %v4124
      %v4155 = vpack.c.b16 %v4127, %v4125
      %v4156 = vpack.c.b16 %v4130, %v4128
      %v4157 = vpack.c.b16 %v4131, %v4129
      %v4158 = vpack.c.b16 %v4134, %v4132
      %v4159 = vpack.c.b16 %v4135, %v4133
      %v4160 = vpack.c.b16 %v4138, %v4136
      %v4161 = vpack.c.b16 %v4139, %v4137
      %v4162 = vpack.c.b16 %v4142, %v4140
      %v4163 = vpack.c.b16 %v4143, %v4141
      %v4164 = vpack.c.b16 %v4146, %v4144
      %v4165 = vpack.c.b16 %v4147, %v4145
      %v4166 = vpack.c.b16 %v4150, %v4148
      %v4167 = vpack.c.b16 %v4151, %v4149
      %4184 = vmatprep.subr.bf16.mxu0 %v4153
      %4185 = vmatpush1.bf16.msra.mxu0 %v4152
      %4186 = vmatprep.subr.bf16.mxu0 %v4155
      %4187 = vmatpush1.bf16.msra.mxu0 %v4154
      %4188 = vmatprep.subr.bf16.mxu0 %v4157
      %4189 = vmatpush1.bf16.msra.mxu0 %v4156
      %4190 = vmatprep.subr.bf16.mxu0 %v4159
      %4191 = vmatpush1.bf16.msra.mxu0 %v4158
      %4192 = vmatprep.subr.bf16.mxu0 %v4161
      %4193 = vmatpush1.bf16.msra.mxu0 %v4160
      %4194 = vmatprep.subr.bf16.mxu0 %v4163
      %4195 = vmatpush1.bf16.msra.mxu0 %v4162
      %4196 = vmatprep.subr.bf16.mxu0 %v4165
      %4197 = vmatpush1.bf16.msra.mxu0 %v4164
      %4198 = vmatprep.subr.bf16.mxu0 %v4167
      %4199 = vmatpush1.bf16.msra.mxu0 %v4166
      %4200 = vmatprep.subr.bf16.mxu0 0
      %4201 = vmatpush1.bf16.msra.mxu0 0
      %4202 = vmatprep.subr.bf16.mxu0 0
      %4203 = vmatpush1.bf16.msra.mxu0 0
      %4204 = vmatprep.subr.bf16.mxu0 0
      %4205 = vmatpush1.bf16.msra.mxu0 0
      %4206 = vmatprep.subr.bf16.mxu0 0
      %4207 = vmatpush1.bf16.msra.mxu0 0
      %4208 = vmatprep.subr.bf16.mxu0 0
      %4209 = vmatpush1.bf16.msra.mxu0 0
      %4210 = vmatprep.subr.bf16.mxu0 0
      %4211 = vmatpush1.bf16.msra.mxu0 0
      %4212 = vmatprep.subr.bf16.mxu0 0
      %4213 = vmatpush1.bf16.msra.mxu0 0
      %4214 = vmatprep.subr.bf16.mxu0 0
      %4215 = vmatpush1.bf16.msra.mxu0 0
      %4216 = vmatprep.mubr.bf16.mxu0 0
      %4217 = vmatmul.mubr.bf16.gmra.mrb[0].mxu0 %v4079
      %v4218 = vpop.f32.mrb[0].mxu0
      %v4219 = vadd.f32 0.0, %v4218
      %v4220 = vpop.f32.mrb[0].mxu0
      %v4221 = vadd.f32 0.0, %v4220
      %v4222 = vpop.f32.mrb[0].mxu0
      %v4223 = vadd.f32 0.0, %v4222
      %v4224 = vpop.f32.mrb[0].mxu0
      %v4225 = vadd.f32 0.0, %v4224
      %4226 = vmatprep.mubr.bf16.mxu0 0
      %4227 = vmatmul.mubr.bf16.gmra.mrb[0].mxu0 %v4080
      %v4228 = vpop.f32.mrb[0].mxu0
      %v4229 = vadd.f32 0.0, %v4228
      %v4230 = vpop.f32.mrb[0].mxu0
      %v4231 = vadd.f32 0.0, %v4230
      %v4232 = vpop.f32.mrb[0].mxu0
      %v4233 = vadd.f32 0.0, %v4232
      %v4234 = vpop.f32.mrb[0].mxu0
      %v4235 = vadd.f32 0.0, %v4234
      %4236 = vmatprep.mubr.bf16.mxu0 0
      %4237 = vmatmul.mubr.bf16.gmra.mrb[0].mxu0 %v4081
      %v4238 = vpop.f32.mrb[0].mxu0
      %v4239 = vadd.f32 0.0, %v4238
      %v4240 = vpop.f32.mrb[0].mxu0
      %v4241 = vadd.f32 0.0, %v4240
      %v4242 = vpop.f32.mrb[0].mxu0
      %v4243 = vadd.f32 0.0, %v4242
      %v4244 = vpop.f32.mrb[0].mxu0
      %v4245 = vadd.f32 0.0, %v4244
      %4246 = vmatprep.mubr.bf16.mxu0 0
      %4247 = vmatmul.mubr.bf16.gmra.mrb[0].mxu0 %v4082
      %v4248 = vpop.f32.mrb[0].mxu0
      %v4249 = vadd.f32 0.0, %v4248
      %v4250 = vpop.f32.mrb[0].mxu0
      %v4251 = vadd.f32 0.0, %v4250
      %v4252 = vpop.f32.mrb[0].mxu0
      %v4253 = vadd.f32 0.0, %v4252
      %v4254 = vpop.f32.mrb[0].mxu0
      %v4255 = vadd.f32 0.0, %v4254
      %4256 = vmatprep.mubr.bf16.mxu0 0
      %4257 = vmatmul.mubr.bf16.gmra.mrb[0].mxu0 %v4083
      %v4258 = vpop.f32.mrb[0].mxu0
      %v4259 = vadd.f32 0.0, %v4258
      %v4260 = vpop.f32.mrb[0].mxu0
      %v4261 = vadd.f32 0.0, %v4260
      %v4262 = vpop.f32.mrb[0].mxu0
      %v4263 = vadd.f32 0.0, %v4262
      %v4264 = vpop.f32.mrb[0].mxu0
      %v4265 = vadd.f32 0.0, %v4264
      %4266 = vmatprep.mubr.bf16.mxu0 0
      %4267 = vmatmul.mubr.bf16.gmra.mrb[0].mxu0 %v4084
      %v4268 = vpop.f32.mrb[0].mxu0
      %v4269 = vadd.f32 0.0, %v4268
      %v4270 = vpop.f32.mrb[0].mxu0
      %v4271 = vadd.f32 0.0, %v4270
      %v4272 = vpop.f32.mrb[0].mxu0
      %v4273 = vadd.f32 0.0, %v4272
      %v4274 = vpop.f32.mrb[0].mxu0
      %v4275 = vadd.f32 0.0, %v4274
      %4276 = vmatprep.mubr.bf16.mxu0 0
      %4277 = vmatmul.mubr.bf16.gmra.mrb[0].mxu0 %v4085
      %v4278 = vpop.f32.mrb[0].mxu0
      %v4279 = vadd.f32 0.0, %v4278
      %v4280 = vpop.f32.mrb[0].mxu0
      %v4281 = vadd.f32 0.0, %v4280
      %v4282 = vpop.f32.mrb[0].mxu0
      %v4283 = vadd.f32 0.0, %v4282
      %v4284 = vpop.f32.mrb[0].mxu0
      %v4285 = vadd.f32 0.0, %v4284
      %4286 = vmatprep.mubr.bf16.mxu0 0
      %4287 = vmatmul.mubr.bf16.gmra.mrb[0].mxu0 %v4086
      %v4288 = vpop.f32.mrb[0].mxu0
      %v4289 = vadd.f32 0.0, %v4288
      %v4290 = vpop.f32.mrb[0].mxu0
      %v4291 = vadd.f32 0.0, %v4290
      %v4292 = vpop.f32.mrb[0].mxu0
      %v4293 = vadd.f32 0.0, %v4292
      %v4294 = vpop.f32.mrb[0].mxu0
      %v4295 = vadd.f32 0.0, %v4294
      %4296 = vdwg.mxu0
      %v4297 = vadd.f32 %v3885, %v4219
      %v4298 = vadd.f32 %v3886, %v4221
      %v4299 = vadd.f32 %v3887, %v4223
      %v4300 = vadd.f32 %v3888, %v4225
      %v4301 = vadd.f32 %v3889, %v4229
      %v4302 = vadd.f32 %v3890, %v4231
      %v4303 = vadd.f32 %v3891, %v4233
      %v4304 = vadd.f32 %v3892, %v4235
      %v4305 = vadd.f32 %v3893, %v4239
      %v4306 = vadd.f32 %v3894, %v4241
      %v4307 = vadd.f32 %v3895, %v4243
      %v4308 = vadd.f32 %v3896, %v4245
      %v4309 = vadd.f32 %v3897, %v4249
      %v4310 = vadd.f32 %v3898, %v4251
      %v4311 = vadd.f32 %v3899, %v4253
      %v4312 = vadd.f32 %v3900, %v4255
      %v4313 = vadd.f32 %v3901, %v4259
      %v4314 = vadd.f32 %v3902, %v4261
      %v4315 = vadd.f32 %v3903, %v4263
      %v4316 = vadd.f32 %v3904, %v4265
      %v4317 = vadd.f32 %v3905, %v4269
      %v4318 = vadd.f32 %v3906, %v4271
      %v4319 = vadd.f32 %v3907, %v4273
      %v4320 = vadd.f32 %v3908, %v4275
      %v4321 = vadd.f32 %v3909, %v4279
      %v4322 = vadd.f32 %v3910, %v4281
      %v4323 = vadd.f32 %v3911, %v4283
      %v4324 = vadd.f32 %v3912, %v4285
      %v4325 = vadd.f32 %v3913, %v4289
      %v4326 = vadd.f32 %v3914, %v4291
      %v4327 = vadd.f32 %v3915, %v4293
      %v4328 = vadd.f32 %v3916, %v4295
      %v4329 = vld [vmem:[%s5] sm:$0x3]
      %v4331 = vlaneseq
      %v4332 = vshrl.u32 %v4331, 7
      %v4333 = vsub.s32 0, %v4332
      %v4334 = vrot.slane %v4329, %v4333
      %v4335 = vlaneseq
      %v4336 = vshrl.u32 %v4335, 7
      %v4337 = vsub.s32 1, %v4336
      %v4338 = vrot.slane %v4329, %v4337
      %v4341 = vadd.f32 %v4297, %v4334
      %v4342 = vadd.f32 %v4298, %v4338
      %v4343 = vadd.f32 %v4299, %v4334
      %v4344 = vadd.f32 %v4300, %v4338
      %v4345 = vadd.f32 %v4301, %v4334
      %v4346 = vadd.f32 %v4302, %v4338
      %v4347 = vadd.f32 %v4303, %v4334
      %v4348 = vadd.f32 %v4304, %v4338
      %v4349 = vadd.f32 %v4305, %v4334
      %v4350 = vadd.f32 %v4306, %v4338
      %v4351 = vadd.f32 %v4307, %v4334
      %v4352 = vadd.f32 %v4308, %v4338
      %v4353 = vadd.f32 %v4309, %v4334
      %v4354 = vadd.f32 %v4310, %v4338
      %v4355 = vadd.f32 %v4311, %v4334
      %v4356 = vadd.f32 %v4312, %v4338
      %v4357 = vadd.f32 %v4313, %v4334
      %v4358 = vadd.f32 %v4314, %v4338
      %v4359 = vadd.f32 %v4315, %v4334
      %v4360 = vadd.f32 %v4316, %v4338
      %v4361 = vadd.f32 %v4317, %v4334
      %v4362 = vadd.f32 %v4318, %v4338
      %v4363 = vadd.f32 %v4319, %v4334
      %v4364 = vadd.f32 %v4320, %v4338
      %v4365 = vadd.f32 %v4321, %v4334
      %v4366 = vadd.f32 %v4322, %v4338
      %v4367 = vadd.f32 %v4323, %v4334
      %v4368 = vadd.f32 %v4324, %v4338
      %v4369 = vadd.f32 %v4325, %v4334
      %v4370 = vadd.f32 %v4326, %v4338
      %v4371 = vadd.f32 %v4327, %v4334
      %v4372 = vadd.f32 %v4328, %v4338
      %v4373 = vmax.f32 %v4341, 0.0
      %v4374 = vmax.f32 %v4342, 0.0
      %v4375 = vmax.f32 %v4343, 0.0
      %v4376 = vmax.f32 %v4344, 0.0
      %v4377 = vmax.f32 %v4345, 0.0
      %v4378 = vmax.f32 %v4346, 0.0
      %v4379 = vmax.f32 %v4347, 0.0
      %v4380 = vmax.f32 %v4348, 0.0
      %v4381 = vmax.f32 %v4349, 0.0
      %v4382 = vmax.f32 %v4350, 0.0
      %v4383 = vmax.f32 %v4351, 0.0
      %v4384 = vmax.f32 %v4352, 0.0
      %v4385 = vmax.f32 %v4353, 0.0
      %v4386 = vmax.f32 %v4354, 0.0
      %v4387 = vmax.f32 %v4355, 0.0
      %v4388 = vmax.f32 %v4356, 0.0
      %v4389 = vmax.f32 %v4357, 0.0
      %v4390 = vmax.f32 %v4358, 0.0
      %v4391 = vmax.f32 %v4359, 0.0
      %v4392 = vmax.f32 %v4360, 0.0
      %v4393 = vmax.f32 %v4361, 0.0
      %v4394 = vmax.f32 %v4362, 0.0
      %v4395 = vmax.f32 %v4363, 0.0
      %v4396 = vmax.f32 %v4364, 0.0
      %v4397 = vmax.f32 %v4365, 0.0
      %v4398 = vmax.f32 %v4366, 0.0
      %v4399 = vmax.f32 %v4367, 0.0
      %v4400 = vmax.f32 %v4368, 0.0
      %v4401 = vmax.f32 %v4369, 0.0
      %v4402 = vmax.f32 %v4370, 0.0
      %v4403 = vmax.f32 %v4371, 0.0
      %v4404 = vmax.f32 %v4372, 0.0
      %v4405 = vpack.c.bf16 %v4375, %v4373
      %v4406 = vpack.c.bf16 %v4376, %v4374
      %v4407 = vpack.c.bf16 %v4379, %v4377
      %v4408 = vpack.c.bf16 %v4380, %v4378
      %v4409 = vpack.c.bf16 %v4383, %v4381
      %v4410 = vpack.c.bf16 %v4384, %v4382
      %v4411 = vpack.c.bf16 %v4387, %v4385
      %v4412 = vpack.c.bf16 %v4388, %v4386
      %v4413 = vpack.c.bf16 %v4391, %v4389
      %v4414 = vpack.c.bf16 %v4392, %v4390
      %v4415 = vpack.c.bf16 %v4395, %v4393
      %v4416 = vpack.c.bf16 %v4396, %v4394
      %v4417 = vpack.c.bf16 %v4399, %v4397
      %v4418 = vpack.c.bf16 %v4400, %v4398
      %v4419 = vpack.c.bf16 %v4403, %v4401
      %v4420 = vpack.c.bf16 %v4404, %v4402
      %v4421 = vld [vmem:[%s6] sm:$0xff]
      %v4422 = vld [vmem:[%s6 + $0x8] sm:$0xff]
      %v4423 = vld [vmem:[%s6 + $0x10] sm:$0xff]
      %v4424 = vld [vmem:[%s6 + $0x18] sm:$0xff]
      %v4425 = vld [vmem:[%s6 + $0x20] sm:$0xff]
      %v4426 = vld [vmem:[%s6 + $0x28] sm:$0xff]
      %v4427 = vld [vmem:[%s6 + $0x30] sm:$0xff]
      %v4428 = vld [vmem:[%s6 + $0x38] sm:$0xff]
      %v4429 = vld [vmem:[%s6 + $0x40] sm:$0xff]
      %v4430 = vld [vmem:[%s6 + $0x48] sm:$0xff]
      %v4431 = vld [vmem:[%s6 + $0x50] sm:$0xff]
      %v4432 = vld [vmem:[%s6 + $0x58] sm:$0xff]
      %v4433 = vld [vmem:[%s6 + $0x60] sm:$0xff]
      %v4434 = vld [vmem:[%s6 + $0x68] sm:$0xff]
      %v4435 = vld [vmem:[%s6 + $0x70] sm:$0xff]
      %v4436 = vld [vmem:[%s6 + $0x78] sm:$0xff]
      %v4437 = vld [vmem:[%s6 + $0x80] sm:$0xff]
      %v4438 = vld [vmem:[%s6 + $0x88] sm:$0xff]
      %v4439 = vld [vmem:[%s6 + $0x90] sm:$0xff]
      %v4440 = vld [vmem:[%s6 + $0x98] sm:$0xff]
      %v4441 = vld [vmem:[%s6 + $0xa0] sm:$0xff]
      %v4442 = vld [vmem:[%s6 + $0xa8] sm:$0xff]
      %v4443 = vld [vmem:[%s6 + $0xb0] sm:$0xff]
      %v4444 = vld [vmem:[%s6 + $0xb8] sm:$0xff]
      %v4445 = vld [vmem:[%s6 + $0xc0] sm:$0xff]
      %v4446 = vld [vmem:[%s6 + $0xc8] sm:$0xff]
      %v4447 = vld [vmem:[%s6 + $0xd0] sm:$0xff]
      %v4448 = vld [vmem:[%s6 + $0xd8] sm:$0xff]
      %v4449 = vld [vmem:[%s6 + $0xe0] sm:$0xff]
      %v4450 = vld [vmem:[%s6 + $0xe8] sm:$0xff]
      %v4451 = vld [vmem:[%s6 + $0xf0] sm:$0xff]
      %v4452 = vld [vmem:[%s6 + $0xf8] sm:$0xff]
      %v4453 = vld [vmem:[%s6 + $0x100] sm:$0xff]
      %v4454 = vld [vmem:[%s6 + $0x108] sm:$0xff]
      %v4455 = vld [vmem:[%s6 + $0x110] sm:$0xff]
      %v4456 = vld [vmem:[%s6 + $0x118] sm:$0xff]
      %v4457 = vld [vmem:[%s6 + $0x120] sm:$0xff]
      %v4458 = vld [vmem:[%s6 + $0x128] sm:$0xff]
      %v4459 = vld [vmem:[%s6 + $0x130] sm:$0xff]
      %v4460 = vld [vmem:[%s6 + $0x138] sm:$0xff]
      %v4461 = vld [vmem:[%s6 + $0x140] sm:$0xff]
      %v4462 = vld [vmem:[%s6 + $0x148] sm:$0xff]
      %v4463 = vld [vmem:[%s6 + $0x150] sm:$0xff]
      %v4464 = vld [vmem:[%s6 + $0x158] sm:$0xff]
      %v4465 = vld [vmem:[%s6 + $0x160] sm:$0xff]
      %v4466 = vld [vmem:[%s6 + $0x168] sm:$0xff]
      %v4467 = vld [vmem:[%s6 + $0x170] sm:$0xff]
      %v4468 = vld [vmem:[%s6 + $0x178] sm:$0xff]
      %v4469 = vld [vmem:[%s6 + $0x180] sm:$0xff]
      %v4470 = vld [vmem:[%s6 + $0x188] sm:$0xff]
      %v4471 = vld [vmem:[%s6 + $0x190] sm:$0xff]
      %v4472 = vld [vmem:[%s6 + $0x198] sm:$0xff]
      %v4473 = vld [vmem:[%s6 + $0x1a0] sm:$0xff]
      %v4474 = vld [vmem:[%s6 + $0x1a8] sm:$0xff]
      %v4475 = vld [vmem:[%s6 + $0x1b0] sm:$0xff]
      %v4476 = vld [vmem:[%s6 + $0x1b8] sm:$0xff]
      %v4477 = vld [vmem:[%s6 + $0x1c0] sm:$0xff]
      %v4478 = vld [vmem:[%s6 + $0x1c8] sm:$0xff]
      %v4479 = vld [vmem:[%s6 + $0x1d0] sm:$0xff]
      %v4480 = vld [vmem:[%s6 + $0x1d8] sm:$0xff]
      %v4481 = vld [vmem:[%s6 + $0x1e0] sm:$0xff]
      %v4482 = vld [vmem:[%s6 + $0x1e8] sm:$0xff]
      %v4483 = vld [vmem:[%s6 + $0x1f0] sm:$0xff]
      %v4484 = vld [vmem:[%s6 + $0x1f8] sm:$0xff]
      %v4549 = vunpack.c.l.b16 %v4421
      %v4550 = vunpack.c.h.b16 %v4421
      %v4551 = vunpack.c.l.b16 %v4422
      %v4552 = vunpack.c.h.b16 %v4422
      %v4553 = vunpack.c.l.b16 %v4423
      %v4554 = vunpack.c.h.b16 %v4423
      %v4555 = vunpack.c.l.b16 %v4424
      %v4556 = vunpack.c.h.b16 %v4424
      %v4557 = vunpack.c.l.b16 %v4425
      %v4558 = vunpack.c.h.b16 %v4425
      %v4559 = vunpack.c.l.b16 %v4426
      %v4560 = vunpack.c.h.b16 %v4426
      %v4561 = vunpack.c.l.b16 %v4427
      %v4562 = vunpack.c.h.b16 %v4427
      %v4563 = vunpack.c.l.b16 %v4428
      %v4564 = vunpack.c.h.b16 %v4428
      %v4565 = vunpack.c.l.b16 %v4429
      %v4566 = vunpack.c.h.b16 %v4429
      %v4567 = vunpack.c.l.b16 %v4430
      %v4568 = vunpack.c.h.b16 %v4430
      %v4569 = vunpack.c.l.b16 %v4431
      %v4570 = vunpack.c.h.b16 %v4431
      %v4571 = vunpack.c.l.b16 %v4432
      %v4572 = vunpack.c.h.b16 %v4432
      %v4573 = vunpack.c.l.b16 %v4433
      %v4574 = vunpack.c.h.b16 %v4433
      %v4575 = vunpack.c.l.b16 %v4434
      %v4576 = vunpack.c.h.b16 %v4434
      %v4577 = vunpack.c.l.b16 %v4435
      %v4578 = vunpack.c.h.b16 %v4435
      %v4579 = vunpack.c.l.b16 %v4436
      %v4580 = vunpack.c.h.b16 %v4436
      %v4581 = vunpack.c.l.b16 %v4437
      %v4582 = vunpack.c.h.b16 %v4437
      %v4583 = vunpack.c.l.b16 %v4438
      %v4584 = vunpack.c.h.b16 %v4438
      %v4585 = vunpack.c.l.b16 %v4439
      %v4586 = vunpack.c.h.b16 %v4439
      %v4587 = vunpack.c.l.b16 %v4440
      %v4588 = vunpack.c.h.b16 %v4440
      %v4589 = vunpack.c.l.b16 %v4441
      %v4590 = vunpack.c.h.b16 %v4441
      %v4591 = vunpack.c.l.b16 %v4442
      %v4592 = vunpack.c.h.b16 %v4442
      %v4593 = vunpack.c.l.b16 %v4443
      %v4594 = vunpack.c.h.b16 %v4443
      %v4595 = vunpack.c.l.b16 %v4444
      %v4596 = vunpack.c.h.b16 %v4444
      %v4597 = vunpack.c.l.b16 %v4445
      %v4598 = vunpack.c.h.b16 %v4445
      %v4599 = vunpack.c.l.b16 %v4446
      %v4600 = vunpack.c.h.b16 %v4446
      %v4601 = vunpack.c.l.b16 %v4447
      %v4602 = vunpack.c.h.b16 %v4447
      %v4603 = vunpack.c.l.b16 %v4448
      %v4604 = vunpack.c.h.b16 %v4448
      %v4605 = vunpack.c.l.b16 %v4449
      %v4606 = vunpack.c.h.b16 %v4449
      %v4607 = vunpack.c.l.b16 %v4450
      %v4608 = vunpack.c.h.b16 %v4450
      %v4609 = vunpack.c.l.b16 %v4451
      %v4610 = vunpack.c.h.b16 %v4451
      %v4611 = vunpack.c.l.b16 %v4452
      %v4612 = vunpack.c.h.b16 %v4452
      %v4613 = vunpack.c.l.b16 %v4453
      %v4614 = vunpack.c.h.b16 %v4453
      %v4615 = vunpack.c.l.b16 %v4454
      %v4616 = vunpack.c.h.b16 %v4454
      %v4617 = vunpack.c.l.b16 %v4455
      %v4618 = vunpack.c.h.b16 %v4455
      %v4619 = vunpack.c.l.b16 %v4456
      %v4620 = vunpack.c.h.b16 %v4456
      %v4621 = vunpack.c.l.b16 %v4457
      %v4622 = vunpack.c.h.b16 %v4457
      %v4623 = vunpack.c.l.b16 %v4458
      %v4624 = vunpack.c.h.b16 %v4458
      %v4625 = vunpack.c.l.b16 %v4459
      %v4626 = vunpack.c.h.b16 %v4459
      %v4627 = vunpack.c.l.b16 %v4460
      %v4628 = vunpack.c.h.b16 %v4460
      %v4629 = vunpack.c.l.b16 %v4461
      %v4630 = vunpack.c.h.b16 %v4461
      %v4631 = vunpack.c.l.b16 %v4462
      %v4632 = vunpack.c.h.b16 %v4462
      %v4633 = vunpack.c.l.b16 %v4463
      %v4634 = vunpack.c.h.b16 %v4463
      %v4635 = vunpack.c.l.b16 %v4464
      %v4636 = vunpack.c.h.b16 %v4464
      %v4637 = vunpack.c.l.b16 %v4465
      %v4638 = vunpack.c.h.b16 %v4465
      %v4639 = vunpack.c.l.b16 %v4466
      %v4640 = vunpack.c.h.b16 %v4466
      %v4641 = vunpack.c.l.b16 %v4467
      %v4642 = vunpack.c.h.b16 %v4467
      %v4643 = vunpack.c.l.b16 %v4468
      %v4644 = vunpack.c.h.b16 %v4468
      %v4645 = vunpack.c.l.b16 %v4469
      %v4646 = vunpack.c.h.b16 %v4469
      %v4647 = vunpack.c.l.b16 %v4470
      %v4648 = vunpack.c.h.b16 %v4470
      %v4649 = vunpack.c.l.b16 %v4471
      %v4650 = vunpack.c.h.b16 %v4471
      %v4651 = vunpack.c.l.b16 %v4472
      %v4652 = vunpack.c.h.b16 %v4472
      %v4653 = vunpack.c.l.b16 %v4473
      %v4654 = vunpack.c.h.b16 %v4473
      %v4655 = vunpack.c.l.b16 %v4474
      %v4656 = vunpack.c.h.b16 %v4474
      %v4657 = vunpack.c.l.b16 %v4475
      %v4658 = vunpack.c.h.b16 %v4475
      %v4659 = vunpack.c.l.b16 %v4476
      %v4660 = vunpack.c.h.b16 %v4476
      %v4661 = vunpack.c.l.b16 %v4477
      %v4662 = vunpack.c.h.b16 %v4477
      %v4663 = vunpack.c.l.b16 %v4478
      %v4664 = vunpack.c.h.b16 %v4478
      %v4665 = vunpack.c.l.b16 %v4479
      %v4666 = vunpack.c.h.b16 %v4479
      %v4667 = vunpack.c.l.b16 %v4480
      %v4668 = vunpack.c.h.b16 %v4480
      %v4669 = vunpack.c.l.b16 %v4481
      %v4670 = vunpack.c.h.b16 %v4481
      %v4671 = vunpack.c.l.b16 %v4482
      %v4672 = vunpack.c.h.b16 %v4482
      %v4673 = vunpack.c.l.b16 %v4483
      %v4674 = vunpack.c.h.b16 %v4483
      %v4675 = vunpack.c.l.b16 %v4484
      %v4676 = vunpack.c.h.b16 %v4484
      %v4677 = vpack.c.b16 %v4553, %v4549
      %v4678 = vpack.c.b16 %v4554, %v4550
      %v4679 = vpack.c.b16 %v4555, %v4551
      %v4680 = vpack.c.b16 %v4556, %v4552
      %v4681 = vpack.c.b16 %v4561, %v4557
      %v4682 = vpack.c.b16 %v4562, %v4558
      %v4683 = vpack.c.b16 %v4563, %v4559
      %v4684 = vpack.c.b16 %v4564, %v4560
      %v4685 = vpack.c.b16 %v4569, %v4565
      %v4686 = vpack.c.b16 %v4570, %v4566
      %v4687 = vpack.c.b16 %v4571, %v4567
      %v4688 = vpack.c.b16 %v4572, %v4568
      %v4689 = vpack.c.b16 %v4577, %v4573
      %v4690 = vpack.c.b16 %v4578, %v4574
      %v4691 = vpack.c.b16 %v4579, %v4575
      %v4692 = vpack.c.b16 %v4580, %v4576
      %v4693 = vpack.c.b16 %v4585, %v4581
      %v4694 = vpack.c.b16 %v4586, %v4582
      %v4695 = vpack.c.b16 %v4587, %v4583
      %v4696 = vpack.c.b16 %v4588, %v4584
      %v4697 = vpack.c.b16 %v4593, %v4589
      %v4698 = vpack.c.b16 %v4594, %v4590
      %v4699 = vpack.c.b16 %v4595, %v4591
      %v4700 = vpack.c.b16 %v4596, %v4592
      %v4701 = vpack.c.b16 %v4601, %v4597
      %v4702 = vpack.c.b16 %v4602, %v4598
      %v4703 = vpack.c.b16 %v4603, %v4599
      %v4704 = vpack.c.b16 %v4604, %v4600
      %v4705 = vpack.c.b16 %v4609, %v4605
      %v4706 = vpack.c.b16 %v4610, %v4606
      %v4707 = vpack.c.b16 %v4611, %v4607
      %v4708 = vpack.c.b16 %v4612, %v4608
      %v4709 = vpack.c.b16 %v4617, %v4613
      %v4710 = vpack.c.b16 %v4618, %v4614
      %v4711 = vpack.c.b16 %v4619, %v4615
      %v4712 = vpack.c.b16 %v4620, %v4616
      %v4713 = vpack.c.b16 %v4625, %v4621
      %v4714 = vpack.c.b16 %v4626, %v4622
      %v4715 = vpack.c.b16 %v4627, %v4623
      %v4716 = vpack.c.b16 %v4628, %v4624
      %v4717 = vpack.c.b16 %v4633, %v4629
      %v4718 = vpack.c.b16 %v4634, %v4630
      %v4719 = vpack.c.b16 %v4635, %v4631
      %v4720 = vpack.c.b16 %v4636, %v4632
      %v4721 = vpack.c.b16 %v4641, %v4637
      %v4722 = vpack.c.b16 %v4642, %v4638
      %v4723 = vpack.c.b16 %v4643, %v4639
      %v4724 = vpack.c.b16 %v4644, %v4640
      %v4725 = vpack.c.b16 %v4649, %v4645
      %v4726 = vpack.c.b16 %v4650, %v4646
      %v4727 = vpack.c.b16 %v4651, %v4647
      %v4728 = vpack.c.b16 %v4652, %v4648
      %v4729 = vpack.c.b16 %v4657, %v4653
      %v4730 = vpack.c.b16 %v4658, %v4654
      %v4731 = vpack.c.b16 %v4659, %v4655
      %v4732 = vpack.c.b16 %v4660, %v4656
      %v4733 = vpack.c.b16 %v4665, %v4661
      %v4734 = vpack.c.b16 %v4666, %v4662
      %v4735 = vpack.c.b16 %v4667, %v4663
      %v4736 = vpack.c.b16 %v4668, %v4664
      %v4737 = vpack.c.b16 %v4673, %v4669
      %v4738 = vpack.c.b16 %v4674, %v4670
      %v4739 = vpack.c.b16 %v4675, %v4671
      %v4740 = vpack.c.b16 %v4676, %v4672
      %4805 = vmatprep.subr.bf16.mxu0 %v4678
      %4806 = vmatpush1.bf16.msra.mxu0 %v4677
      %4807 = vmatprep.subr.bf16.mxu0 %v4682
      %4808 = vmatpush1.bf16.msra.mxu0 %v4681
      %4809 = vmatprep.subr.bf16.mxu0 %v4686
      %4810 = vmatpush1.bf16.msra.mxu0 %v4685
      %4811 = vmatprep.subr.bf16.mxu0 %v4690
      %4812 = vmatpush1.bf16.msra.mxu0 %v4689
      %4813 = vmatprep.subr.bf16.mxu0 %v4694
      %4814 = vmatpush1.bf16.msra.mxu0 %v4693
      %4815 = vmatprep.subr.bf16.mxu0 %v4698
      %4816 = vmatpush1.bf16.msra.mxu0 %v4697
      %4817 = vmatprep.subr.bf16.mxu0 %v4702
      %4818 = vmatpush1.bf16.msra.mxu0 %v4701
      %4819 = vmatprep.subr.bf16.mxu0 %v4706
      %4820 = vmatpush1.bf16.msra.mxu0 %v4705
      %4821 = vmatprep.subr.bf16.mxu0 %v4710
      %4822 = vmatpush1.bf16.msra.mxu0 %v4709
      %4823 = vmatprep.subr.bf16.mxu0 %v4714
      %4824 = vmatpush1.bf16.msra.mxu0 %v4713
      %4825 = vmatprep.subr.bf16.mxu0 %v4718
      %4826 = vmatpush1.bf16.msra.mxu0 %v4717
      %4827 = vmatprep.subr.bf16.mxu0 %v4722
      %4828 = vmatpush1.bf16.msra.mxu0 %v4721
      %4829 = vmatprep.subr.bf16.mxu0 %v4726
      %4830 = vmatpush1.bf16.msra.mxu0 %v4725
      %4831 = vmatprep.subr.bf16.mxu0 %v4730
      %4832 = vmatpush1.bf16.msra.mxu0 %v4729
      %4833 = vmatprep.subr.bf16.mxu0 %v4734
      %4834 = vmatpush1.bf16.msra.mxu0 %v4733
      %4835 = vmatprep.subr.bf16.mxu0 %v4738
      %4836 = vmatpush1.bf16.msra.mxu0 %v4737
      %4837 = vmatprep.mubr.bf16.mxu0 %v4406
      %4838 = vmatmul.mubr.bf16.gmra.mrb[0].mxu0 %v4405
      %v4839 = vpop.f32.mrb[0].mxu0
      %v4840 = vadd.f32 0.0, %v4839
      %v4841 = vpop.f32.mrb[0].mxu0
      %v4842 = vadd.f32 0.0, %v4841
      %v4843 = vpop.f32.mrb[0].mxu0
      %v4844 = vadd.f32 0.0, %v4843
      %v4845 = vpop.f32.mrb[0].mxu0
      %v4846 = vadd.f32 0.0, %v4845
      %4847 = vmatprep.mubr.bf16.mxu0 %v4408
      %4848 = vmatmul.mubr.bf16.gmra.mrb[0].mxu0 %v4407
      %v4849 = vpop.f32.mrb[0].mxu0
      %v4850 = vadd.f32 0.0, %v4849
      %v4851 = vpop.f32.mrb[0].mxu0
      %v4852 = vadd.f32 0.0, %v4851
      %v4853 = vpop.f32.mrb[0].mxu0
      %v4854 = vadd.f32 0.0, %v4853
      %v4855 = vpop.f32.mrb[0].mxu0
      %v4856 = vadd.f32 0.0, %v4855
      %4857 = vmatprep.mubr.bf16.mxu0 %v4410
      %4858 = vmatmul.mubr.bf16.gmra.mrb[0].mxu0 %v4409
      %v4859 = vpop.f32.mrb[0].mxu0
      %v4860 = vadd.f32 0.0, %v4859
      %v4861 = vpop.f32.mrb[0].mxu0
      %v4862 = vadd.f32 0.0, %v4861
      %v4863 = vpop.f32.mrb[0].mxu0
      %v4864 = vadd.f32 0.0, %v4863
      %v4865 = vpop.f32.mrb[0].mxu0
      %v4866 = vadd.f32 0.0, %v4865
      %4867 = vmatprep.mubr.bf16.mxu0 %v4412
      %4868 = vmatmul.mubr.bf16.gmra.mrb[0].mxu0 %v4411
      %v4869 = vpop.f32.mrb[0].mxu0
      %v4870 = vadd.f32 0.0, %v4869
      %v4871 = vpop.f32.mrb[0].mxu0
      %v4872 = vadd.f32 0.0, %v4871
      %v4873 = vpop.f32.mrb[0].mxu0
      %v4874 = vadd.f32 0.0, %v4873
      %v4875 = vpop.f32.mrb[0].mxu0
      %v4876 = vadd.f32 0.0, %v4875
      %4877 = vmatprep.mubr.bf16.mxu0 %v4414
      %4878 = vmatmul.mubr.bf16.gmra.mrb[0].mxu0 %v4413
      %v4879 = vpop.f32.mrb[0].mxu0
      %v4880 = vadd.f32 0.0, %v4879
      %v4881 = vpop.f32.mrb[0].mxu0
      %v4882 = vadd.f32 0.0, %v4881
      %v4883 = vpop.f32.mrb[0].mxu0
      %v4884 = vadd.f32 0.0, %v4883
      %v4885 = vpop.f32.mrb[0].mxu0
      %v4886 = vadd.f32 0.0, %v4885
      %4887 = vmatprep.mubr.bf16.mxu0 %v4416
      %4888 = vmatmul.mubr.bf16.gmra.mrb[0].mxu0 %v4415
      %v4889 = vpop.f32.mrb[0].mxu0
      %v4890 = vadd.f32 0.0, %v4889
      %v4891 = vpop.f32.mrb[0].mxu0
      %v4892 = vadd.f32 0.0, %v4891
      %v4893 = vpop.f32.mrb[0].mxu0
      %v4894 = vadd.f32 0.0, %v4893
      %v4895 = vpop.f32.mrb[0].mxu0
      %v4896 = vadd.f32 0.0, %v4895
      %4897 = vmatprep.mubr.bf16.mxu0 %v4418
      %4898 = vmatmul.mubr.bf16.gmra.mrb[0].mxu0 %v4417
      %v4899 = vpop.f32.mrb[0].mxu0
      %v4900 = vadd.f32 0.0, %v4899
      %v4901 = vpop.f32.mrb[0].mxu0
      %v4902 = vadd.f32 0.0, %v4901
      %v4903 = vpop.f32.mrb[0].mxu0
      %v4904 = vadd.f32 0.0, %v4903
      %v4905 = vpop.f32.mrb[0].mxu0
      %v4906 = vadd.f32 0.0, %v4905
      %4907 = vmatprep.mubr.bf16.mxu0 %v4420
      %4908 = vmatmul.mubr.bf16.gmra.mrb[0].mxu0 %v4419
      %v4909 = vpop.f32.mrb[0].mxu0
      %v4910 = vadd.f32 0.0, %v4909
      %v4911 = vpop.f32.mrb[0].mxu0
      %v4912 = vadd.f32 0.0, %v4911
      %v4913 = vpop.f32.mrb[0].mxu0
      %v4914 = vadd.f32 0.0, %v4913
      %v4915 = vpop.f32.mrb[0].mxu0
      %v4916 = vadd.f32 0.0, %v4915
      %4917 = vdwg.mxu0
      %4918 = vmatprep.subr.bf16.mxu0 %v4680
      %4919 = vmatpush1.bf16.msra.mxu0 %v4679
      %4920 = vmatprep.subr.bf16.mxu0 %v4684
      %4921 = vmatpush1.bf16.msra.mxu0 %v4683
      %4922 = vmatprep.subr.bf16.mxu0 %v4688
      %4923 = vmatpush1.bf16.msra.mxu0 %v4687
      %4924 = vmatprep.subr.bf16.mxu0 %v4692
      %4925 = vmatpush1.bf16.msra.mxu0 %v4691
      %4926 = vmatprep.subr.bf16.mxu0 %v4696
      %4927 = vmatpush1.bf16.msra.mxu0 %v4695
      %4928 = vmatprep.subr.bf16.mxu0 %v4700
      %4929 = vmatpush1.bf16.msra.mxu0 %v4699
      %4930 = vmatprep.subr.bf16.mxu0 %v4704
      %4931 = vmatpush1.bf16.msra.mxu0 %v4703
      %4932 = vmatprep.subr.bf16.mxu0 %v4708
      %4933 = vmatpush1.bf16.msra.mxu0 %v4707
      %4934 = vmatprep.subr.bf16.mxu0 %v4712
      %4935 = vmatpush1.bf16.msra.mxu0 %v4711
      %4936 = vmatprep.subr.bf16.mxu0 %v4716
      %4937 = vmatpush1.bf16.msra.mxu0 %v4715
      %4938 = vmatprep.subr.bf16.mxu0 %v4720
      %4939 = vmatpush1.bf16.msra.mxu0 %v4719
      %4940 = vmatprep.subr.bf16.mxu0 %v4724
      %4941 = vmatpush1.bf16.msra.mxu0 %v4723
      %4942 = vmatprep.subr.bf16.mxu0 %v4728
      %4943 = vmatpush1.bf16.msra.mxu0 %v4727
      %4944 = vmatprep.subr.bf16.mxu0 %v4732
      %4945 = vmatpush1.bf16.msra.mxu0 %v4731
      %4946 = vmatprep.subr.bf16.mxu0 %v4736
      %4947 = vmatpush1.bf16.msra.mxu0 %v4735
      %4948 = vmatprep.subr.bf16.mxu0 %v4740
      %4949 = vmatpush1.bf16.msra.mxu0 %v4739
      %4950 = vmatprep.mubr.bf16.mxu0 %v4406
      %4951 = vmatmul.mubr.bf16.gmra.mrb[0].mxu0 %v4405
      %v4952 = vpop.f32.mrb[0].mxu0
      %v4953 = vadd.f32 0.0, %v4952
      %v4954 = vpop.f32.mrb[0].mxu0
      %v4955 = vadd.f32 0.0, %v4954
      %v4956 = vpop.f32.mrb[0].mxu0
      %v4957 = vadd.f32 0.0, %v4956
      %v4958 = vpop.f32.mrb[0].mxu0
      %v4959 = vadd.f32 0.0, %v4958
      %4960 = vmatprep.mubr.bf16.mxu0 %v4408
      %4961 = vmatmul.mubr.bf16.gmra.mrb[0].mxu0 %v4407
      %v4962 = vpop.f32.mrb[0].mxu0
      %v4963 = vadd.f32 0.0, %v4962
      %v4964 = vpop.f32.mrb[0].mxu0
      %v4965 = vadd.f32 0.0, %v4964
      %v4966 = vpop.f32.mrb[0].mxu0
      %v4967 = vadd.f32 0.0, %v4966
      %v4968 = vpop.f32.mrb[0].mxu0
      %v4969 = vadd.f32 0.0, %v4968
      %4970 = vmatprep.mubr.bf16.mxu0 %v4410
      %4971 = vmatmul.mubr.bf16.gmra.mrb[0].mxu0 %v4409
      %v4972 = vpop.f32.mrb[0].mxu0
      %v4973 = vadd.f32 0.0, %v4972
      %v4974 = vpop.f32.mrb[0].mxu0
      %v4975 = vadd.f32 0.0, %v4974
      %v4976 = vpop.f32.mrb[0].mxu0
      %v4977 = vadd.f32 0.0, %v4976
      %v4978 = vpop.f32.mrb[0].mxu0
      %v4979 = vadd.f32 0.0, %v4978
      %4980 = vmatprep.mubr.bf16.mxu0 %v4412
      %4981 = vmatmul.mubr.bf16.gmra.mrb[0].mxu0 %v4411
      %v4982 = vpop.f32.mrb[0].mxu0
      %v4983 = vadd.f32 0.0, %v4982
      %v4984 = vpop.f32.mrb[0].mxu0
      %v4985 = vadd.f32 0.0, %v4984
      %v4986 = vpop.f32.mrb[0].mxu0
      %v4987 = vadd.f32 0.0, %v4986
      %v4988 = vpop.f32.mrb[0].mxu0
      %v4989 = vadd.f32 0.0, %v4988
      %4990 = vmatprep.mubr.bf16.mxu0 %v4414
      %4991 = vmatmul.mubr.bf16.gmra.mrb[0].mxu0 %v4413
      %v4992 = vpop.f32.mrb[0].mxu0
      %v4993 = vadd.f32 0.0, %v4992
      %v4994 = vpop.f32.mrb[0].mxu0
      %v4995 = vadd.f32 0.0, %v4994
      %v4996 = vpop.f32.mrb[0].mxu0
      %v4997 = vadd.f32 0.0, %v4996
      %v4998 = vpop.f32.mrb[0].mxu0
      %v4999 = vadd.f32 0.0, %v4998
      %5000 = vmatprep.mubr.bf16.mxu0 %v4416
      %5001 = vmatmul.mubr.bf16.gmra.mrb[0].mxu0 %v4415
      %v5002 = vpop.f32.mrb[0].mxu0
      %v5003 = vadd.f32 0.0, %v5002
      %v5004 = vpop.f32.mrb[0].mxu0
      %v5005 = vadd.f32 0.0, %v5004
      %v5006 = vpop.f32.mrb[0].mxu0
      %v5007 = vadd.f32 0.0, %v5006
      %v5008 = vpop.f32.mrb[0].mxu0
      %v5009 = vadd.f32 0.0, %v5008
      %5010 = vmatprep.mubr.bf16.mxu0 %v4418
      %5011 = vmatmul.mubr.bf16.gmra.mrb[0].mxu0 %v4417
      %v5012 = vpop.f32.mrb[0].mxu0
      %v5013 = vadd.f32 0.0, %v5012
      %v5014 = vpop.f32.mrb[0].mxu0
      %v5015 = vadd.f32 0.0, %v5014
      %v5016 = vpop.f32.mrb[0].mxu0
      %v5017 = vadd.f32 0.0, %v5016
      %v5018 = vpop.f32.mrb[0].mxu0
      %v5019 = vadd.f32 0.0, %v5018
      %5020 = vmatprep.mubr.bf16.mxu0 %v4420
      %5021 = vmatmul.mubr.bf16.gmra.mrb[0].mxu0 %v4419
      %v5022 = vpop.f32.mrb[0].mxu0
      %v5023 = vadd.f32 0.0, %v5022
      %v5024 = vpop.f32.mrb[0].mxu0
      %v5025 = vadd.f32 0.0, %v5024
      %v5026 = vpop.f32.mrb[0].mxu0
      %v5027 = vadd.f32 0.0, %v5026
      %v5028 = vpop.f32.mrb[0].mxu0
      %v5029 = vadd.f32 0.0, %v5028
      %5030 = vdwg.mxu0
      %v5031 = vpack.c.bf16 %v4844, %v4840
      %v5032 = vpack.c.bf16 %v4846, %v4842
      %v5033 = vpack.c.bf16 %v4957, %v4953
      %v5034 = vpack.c.bf16 %v4959, %v4955
      %v5035 = vpack.c.bf16 %v4854, %v4850
      %v5036 = vpack.c.bf16 %v4856, %v4852
      %v5037 = vpack.c.bf16 %v4967, %v4963
      %v5038 = vpack.c.bf16 %v4969, %v4965
      %v5039 = vpack.c.bf16 %v4864, %v4860
      %v5040 = vpack.c.bf16 %v4866, %v4862
      %v5041 = vpack.c.bf16 %v4977, %v4973
      %v5042 = vpack.c.bf16 %v4979, %v4975
      %v5043 = vpack.c.bf16 %v4874, %v4870
      %v5044 = vpack.c.bf16 %v4876, %v4872
      %v5045 = vpack.c.bf16 %v4987, %v4983
      %v5046 = vpack.c.bf16 %v4989, %v4985
      %v5047 = vpack.c.bf16 %v4884, %v4880
      %v5048 = vpack.c.bf16 %v4886, %v4882
      %v5049 = vpack.c.bf16 %v4997, %v4993
      %v5050 = vpack.c.bf16 %v4999, %v4995
      %v5051 = vpack.c.bf16 %v4894, %v4890
      %v5052 = vpack.c.bf16 %v4896, %v4892
      %v5053 = vpack.c.bf16 %v5007, %v5003
      %v5054 = vpack.c.bf16 %v5009, %v5005
      %v5055 = vpack.c.bf16 %v4904, %v4900
      %v5056 = vpack.c.bf16 %v4906, %v4902
      %v5057 = vpack.c.bf16 %v5017, %v5013
      %v5058 = vpack.c.bf16 %v5019, %v5015
      %v5059 = vpack.c.bf16 %v4914, %v4910
      %v5060 = vpack.c.bf16 %v4916, %v4912
      %v5061 = vpack.c.bf16 %v5027, %v5023
      %v5062 = vpack.c.bf16 %v5029, %v5025
      %v5063 = vld [vmem:[%s7] sm:$0xff]
      %v5064 = vld [vmem:[%s7 + $0x8] sm:$0xff]
      %v5065 = vld [vmem:[%s7 + $0x10] sm:$0xff]
      %v5066 = vld [vmem:[%s7 + $0x18] sm:$0xff]
      %v5067 = vld [vmem:[%s7 + $0x20] sm:$0xff]
      %v5068 = vld [vmem:[%s7 + $0x28] sm:$0xff]
      %v5069 = vld [vmem:[%s7 + $0x30] sm:$0xff]
      %v5070 = vld [vmem:[%s7 + $0x38] sm:$0xff]
      %v5071 = vld [vmem:[%s7 + $0x40] sm:$0xff]
      %v5072 = vld [vmem:[%s7 + $0x48] sm:$0xff]
      %v5073 = vld [vmem:[%s7 + $0x50] sm:$0xff]
      %v5074 = vld [vmem:[%s7 + $0x58] sm:$0xff]
      %v5075 = vld [vmem:[%s7 + $0x60] sm:$0xff]
      %v5076 = vld [vmem:[%s7 + $0x68] sm:$0xff]
      %v5077 = vld [vmem:[%s7 + $0x70] sm:$0xff]
      %v5078 = vld [vmem:[%s7 + $0x78] sm:$0xff]
      %v5079 = vld [vmem:[%s7 + $0x80] sm:$0xff]
      %v5080 = vld [vmem:[%s7 + $0x88] sm:$0xff]
      %v5081 = vld [vmem:[%s7 + $0x90] sm:$0xff]
      %v5082 = vld [vmem:[%s7 + $0x98] sm:$0xff]
      %v5083 = vld [vmem:[%s7 + $0xa0] sm:$0xff]
      %v5084 = vld [vmem:[%s7 + $0xa8] sm:$0xff]
      %v5085 = vld [vmem:[%s7 + $0xb0] sm:$0xff]
      %v5086 = vld [vmem:[%s7 + $0xb8] sm:$0xff]
      %v5087 = vld [vmem:[%s7 + $0xc0] sm:$0xff]
      %v5088 = vld [vmem:[%s7 + $0xc8] sm:$0xff]
      %v5089 = vld [vmem:[%s7 + $0xd0] sm:$0xff]
      %v5090 = vld [vmem:[%s7 + $0xd8] sm:$0xff]
      %v5091 = vld [vmem:[%s7 + $0xe0] sm:$0xff]
      %v5092 = vld [vmem:[%s7 + $0xe8] sm:$0xff]
      %v5093 = vld [vmem:[%s7 + $0xf0] sm:$0xff]
      %v5094 = vld [vmem:[%s7 + $0xf8] sm:$0xff]
      %v5127 = vunpack.c.l.b16 %v5063
      %v5128 = vunpack.c.h.b16 %v5063
      %v5129 = vunpack.c.l.b16 %v5064
      %v5130 = vunpack.c.h.b16 %v5064
      %v5131 = vunpack.c.l.b16 %v5065
      %v5132 = vunpack.c.h.b16 %v5065
      %v5133 = vunpack.c.l.b16 %v5066
      %v5134 = vunpack.c.h.b16 %v5066
      %v5135 = vunpack.c.l.b16 %v5067
      %v5136 = vunpack.c.h.b16 %v5067
      %v5137 = vunpack.c.l.b16 %v5068
      %v5138 = vunpack.c.h.b16 %v5068
      %v5139 = vunpack.c.l.b16 %v5069
      %v5140 = vunpack.c.h.b16 %v5069
      %v5141 = vunpack.c.l.b16 %v5070
      %v5142 = vunpack.c.h.b16 %v5070
      %v5143 = vunpack.c.l.b16 %v5071
      %v5144 = vunpack.c.h.b16 %v5071
      %v5145 = vunpack.c.l.b16 %v5072
      %v5146 = vunpack.c.h.b16 %v5072
      %v5147 = vunpack.c.l.b16 %v5073
      %v5148 = vunpack.c.h.b16 %v5073
      %v5149 = vunpack.c.l.b16 %v5074
      %v5150 = vunpack.c.h.b16 %v5074
      %v5151 = vunpack.c.l.b16 %v5075
      %v5152 = vunpack.c.h.b16 %v5075
      %v5153 = vunpack.c.l.b16 %v5076
      %v5154 = vunpack.c.h.b16 %v5076
      %v5155 = vunpack.c.l.b16 %v5077
      %v5156 = vunpack.c.h.b16 %v5077
      %v5157 = vunpack.c.l.b16 %v5078
      %v5158 = vunpack.c.h.b16 %v5078
      %v5159 = vunpack.c.l.b16 %v5079
      %v5160 = vunpack.c.h.b16 %v5079
      %v5161 = vunpack.c.l.b16 %v5080
      %v5162 = vunpack.c.h.b16 %v5080
      %v5163 = vunpack.c.l.b16 %v5081
      %v5164 = vunpack.c.h.b16 %v5081
      %v5165 = vunpack.c.l.b16 %v5082
      %v5166 = vunpack.c.h.b16 %v5082
      %v5167 = vunpack.c.l.b16 %v5083
      %v5168 = vunpack.c.h.b16 %v5083
      %v5169 = vunpack.c.l.b16 %v5084
      %v5170 = vunpack.c.h.b16 %v5084
      %v5171 = vunpack.c.l.b16 %v5085
      %v5172 = vunpack.c.h.b16 %v5085
      %v5173 = vunpack.c.l.b16 %v5086
      %v5174 = vunpack.c.h.b16 %v5086
      %v5175 = vunpack.c.l.b16 %v5087
      %v5176 = vunpack.c.h.b16 %v5087
      %v5177 = vunpack.c.l.b16 %v5088
      %v5178 = vunpack.c.h.b16 %v5088
      %v5179 = vunpack.c.l.b16 %v5089
      %v5180 = vunpack.c.h.b16 %v5089
      %v5181 = vunpack.c.l.b16 %v5090
      %v5182 = vunpack.c.h.b16 %v5090
      %v5183 = vunpack.c.l.b16 %v5091
      %v5184 = vunpack.c.h.b16 %v5091
      %v5185 = vunpack.c.l.b16 %v5092
      %v5186 = vunpack.c.h.b16 %v5092
      %v5187 = vunpack.c.l.b16 %v5093
      %v5188 = vunpack.c.h.b16 %v5093
      %v5189 = vunpack.c.l.b16 %v5094
      %v5190 = vunpack.c.h.b16 %v5094
      %v5191 = vpack.c.b16 %v5131, %v5127
      %v5192 = vpack.c.b16 %v5132, %v5128
      %v5193 = vpack.c.b16 %v5133, %v5129
      %v5194 = vpack.c.b16 %v5134, %v5130
      %v5195 = vpack.c.b16 %v5139, %v5135
      %v5196 = vpack.c.b16 %v5140, %v5136
      %v5197 = vpack.c.b16 %v5141, %v5137
      %v5198 = vpack.c.b16 %v5142, %v5138
      %v5199 = vpack.c.b16 %v5147, %v5143
      %v5200 = vpack.c.b16 %v5148, %v5144
      %v5201 = vpack.c.b16 %v5149, %v5145
      %v5202 = vpack.c.b16 %v5150, %v5146
      %v5203 = vpack.c.b16 %v5155, %v5151
      %v5204 = vpack.c.b16 %v5156, %v5152
      %v5205 = vpack.c.b16 %v5157, %v5153
      %v5206 = vpack.c.b16 %v5158, %v5154
      %v5207 = vpack.c.b16 %v5163, %v5159
      %v5208 = vpack.c.b16 %v5164, %v5160
      %v5209 = vpack.c.b16 %v5165, %v5161
      %v5210 = vpack.c.b16 %v5166, %v5162
      %v5211 = vpack.c.b16 %v5171, %v5167
      %v5212 = vpack.c.b16 %v5172, %v5168
      %v5213 = vpack.c.b16 %v5173, %v5169
      %v5214 = vpack.c.b16 %v5174, %v5170
      %v5215 = vpack.c.b16 %v5179, %v5175
      %v5216 = vpack.c.b16 %v5180, %v5176
      %v5217 = vpack.c.b16 %v5181, %v5177
      %v5218 = vpack.c.b16 %v5182, %v5178
      %v5219 = vpack.c.b16 %v5187, %v5183
      %v5220 = vpack.c.b16 %v5188, %v5184
      %v5221 = vpack.c.b16 %v5189, %v5185
      %v5222 = vpack.c.b16 %v5190, %v5186
      %v5255 = vmul.bf16 %v5031, %v5191
      %v5256 = vmul.bf16 %v5032, %v5192
      %v5257 = vmul.bf16 %v5033, %v5193
      %v5258 = vmul.bf16 %v5034, %v5194
      %v5259 = vmul.bf16 %v5035, %v5195
      %v5260 = vmul.bf16 %v5036, %v5196
      %v5261 = vmul.bf16 %v5037, %v5197
      %v5262 = vmul.bf16 %v5038, %v5198
      %v5263 = vmul.bf16 %v5039, %v5199
      %v5264 = vmul.bf16 %v5040, %v5200
      %v5265 = vmul.bf16 %v5041, %v5201
      %v5266 = vmul.bf16 %v5042, %v5202
      %v5267 = vmul.bf16 %v5043, %v5203
      %v5268 = vmul.bf16 %v5044, %v5204
      %v5269 = vmul.bf16 %v5045, %v5205
      %v5270 = vmul.bf16 %v5046, %v5206
      %v5271 = vmul.bf16 %v5047, %v5207
      %v5272 = vmul.bf16 %v5048, %v5208
      %v5273 = vmul.bf16 %v5049, %v5209
      %v5274 = vmul.bf16 %v5050, %v5210
      %v5275 = vmul.bf16 %v5051, %v5211
      %v5276 = vmul.bf16 %v5052, %v5212
      %v5277 = vmul.bf16 %v5053, %v5213
      %v5278 = vmul.bf16 %v5054, %v5214
      %v5279 = vmul.bf16 %v5055, %v5215
      %v5280 = vmul.bf16 %v5056, %v5216
      %v5281 = vmul.bf16 %v5057, %v5217
      %v5282 = vmul.bf16 %v5058, %v5218
      %v5283 = vmul.bf16 %v5059, %v5219
      %v5284 = vmul.bf16 %v5060, %v5220
      %v5285 = vmul.bf16 %v5061, %v5221
      %v5286 = vmul.bf16 %v5062, %v5222
      %v5287 = vld [vmem:[%s8] sm:$0xf]
      %v5288 = vld [vmem:[%s9] sm:$0xf]
      %v5290 = vlaneseq
      %v5291 = vshrl.u32 %v5290, 7
      %v5292 = vsub.s32 0, %v5291
      %v5293 = vrot.slane %v5288, %v5292
      %v5294 = vlaneseq
      %v5295 = vshrl.u32 %v5294, 7
      %v5296 = vsub.s32 1, %v5295
      %v5297 = vrot.slane %v5288, %v5296
      %v5298 = vlaneseq
      %v5299 = vshrl.u32 %v5298, 7
      %v5300 = vsub.s32 2, %v5299
      %v5301 = vrot.slane %v5288, %v5300
      %v5302 = vlaneseq
      %v5303 = vshrl.u32 %v5302, 7
      %v5304 = vsub.s32 3, %v5303
      %v5305 = vrot.slane %v5288, %v5304
      %5310 = vmatprep.subr.bf16.mxu0 %v5256
      %5311 = vmatpush1.bf16.msra.mxu0 %v5255
      %5312 = vmatprep.subr.bf16.mxu0 %v5260
      %5313 = vmatpush1.bf16.msra.mxu0 %v5259
      %5314 = vmatprep.subr.bf16.mxu0 %v5264
      %5315 = vmatpush1.bf16.msra.mxu0 %v5263
      %5316 = vmatprep.subr.bf16.mxu0 %v5268
      %5317 = vmatpush1.bf16.msra.mxu0 %v5267
      %5318 = vmatprep.subr.bf16.mxu0 %v5272
      %5319 = vmatpush1.bf16.msra.mxu0 %v5271
      %5320 = vmatprep.subr.bf16.mxu0 %v5276
      %5321 = vmatpush1.bf16.msra.mxu0 %v5275
      %5322 = vmatprep.subr.bf16.mxu0 %v5280
      %5323 = vmatpush1.bf16.msra.mxu0 %v5279
      %5324 = vmatprep.subr.bf16.mxu0 %v5284
      %5325 = vmatpush1.bf16.msra.mxu0 %v5283
      %5326 = vmatprep.subr.bf16.mxu0 0
      %5327 = vmatpush1.bf16.msra.mxu0 0
      %5328 = vmatprep.subr.bf16.mxu0 0
      %5329 = vmatpush1.bf16.msra.mxu0 0
      %5330 = vmatprep.subr.bf16.mxu0 0
      %5331 = vmatpush1.bf16.msra.mxu0 0
      %5332 = vmatprep.subr.bf16.mxu0 0
      %5333 = vmatpush1.bf16.msra.mxu0 0
      %5334 = vmatprep.subr.bf16.mxu0 0
      %5335 = vmatpush1.bf16.msra.mxu0 0
      %5336 = vmatprep.subr.bf16.mxu0 0
      %5337 = vmatpush1.bf16.msra.mxu0 0
      %5338 = vmatprep.subr.bf16.mxu0 0
      %5339 = vmatpush1.bf16.msra.mxu0 0
      %5340 = vmatprep.subr.bf16.mxu0 0
      %5341 = vmatpush1.bf16.msra.mxu0 0
      %5342 = vmatprep.mubr.bf16.mxu0 0
      %5343 = vmatmul.mubr.bf16.gmra.mrb[0].mxu0 %v5287
      %v5344 = vpop.f32.mrb[0].mxu0
      %v5345 = vadd.f32 %v5293, %v5344
      %v5346 = vpop.f32.mrb[0].mxu0
      %v5347 = vadd.f32 %v5297, %v5346
      %v5348 = vpop.f32.mrb[0].mxu0
      %v5349 = vpop.f32.mrb[0].mxu0
      %5350 = vdwg.mxu0
      %5351 = vmatprep.subr.bf16.mxu0 %v5258
      %5352 = vmatpush1.bf16.msra.mxu0 %v5257
      %5353 = vmatprep.subr.bf16.mxu0 %v5262
      %5354 = vmatpush1.bf16.msra.mxu0 %v5261
      %5355 = vmatprep.subr.bf16.mxu0 %v5266
      %5356 = vmatpush1.bf16.msra.mxu0 %v5265
      %5357 = vmatprep.subr.bf16.mxu0 %v5270
      %5358 = vmatpush1.bf16.msra.mxu0 %v5269
      %5359 = vmatprep.subr.bf16.mxu0 %v5274
      %5360 = vmatpush1.bf16.msra.mxu0 %v5273
      %5361 = vmatprep.subr.bf16.mxu0 %v5278
      %5362 = vmatpush1.bf16.msra.mxu0 %v5277
      %5363 = vmatprep.subr.bf16.mxu0 %v5282
      %5364 = vmatpush1.bf16.msra.mxu0 %v5281
      %5365 = vmatprep.subr.bf16.mxu0 %v5286
      %5366 = vmatpush1.bf16.msra.mxu0 %v5285
      %5367 = vmatprep.subr.bf16.mxu0 0
      %5368 = vmatpush1.bf16.msra.mxu0 0
      %5369 = vmatprep.subr.bf16.mxu0 0
      %5370 = vmatpush1.bf16.msra.mxu0 0
      %5371 = vmatprep.subr.bf16.mxu0 0
      %5372 = vmatpush1.bf16.msra.mxu0 0
      %5373 = vmatprep.subr.bf16.mxu0 0
      %5374 = vmatpush1.bf16.msra.mxu0 0
      %5375 = vmatprep.subr.bf16.mxu0 0
      %5376 = vmatpush1.bf16.msra.mxu0 0
      %5377 = vmatprep.subr.bf16.mxu0 0
      %5378 = vmatpush1.bf16.msra.mxu0 0
      %5379 = vmatprep.subr.bf16.mxu0 0
      %5380 = vmatpush1.bf16.msra.mxu0 0
      %5381 = vmatprep.subr.bf16.mxu0 0
      %5382 = vmatpush1.bf16.msra.mxu0 0
      %5383 = vmatprep.mubr.bf16.mxu0 0
      %5384 = vmatmul.mubr.bf16.gmra.mrb[0].mxu0 %v5287
      %v5385 = vpop.f32.mrb[0].mxu0
      %v5386 = vadd.f32 %v5301, %v5385
      %v5387 = vpop.f32.mrb[0].mxu0
      %v5388 = vadd.f32 %v5305, %v5387
      %v5389 = vpop.f32.mrb[0].mxu0
      %v5390 = vpop.f32.mrb[0].mxu0
      %5391 = vdwg.mxu0
      %5392 = vst [vmem:[%s364] sm:$0xff] %v5345
      %5393 = vst [vmem:[%s364 + $0x8] sm:$0xff] %v5347
      %5394 = vst [vmem:[%s364 + $0x10] sm:$0xff] %v5386
      %5395 = vst [vmem:[%s364 + $0x18] sm:$0xff] %v5388
      %p5396 = scmp.lt.s32.totalorder %s21, 1
      %s5397 = scalar_select %p5396, %s21, 1
      %s5398 = smul.addr %s5397, 4
      %s5399 = smul.addr %s5398, 8
      %s5400 = scalar_lea.vmem %s10, %s5399
      // Predicated region
      $region61: #{_lambda_.1} parent=59 // pred_check
        %p5401 = pneg %p254
      $region62: #{_lambda_.1} parent=59 // pred_check_branch
        %5403 = sbr.rel (%p5401) target = $region64
      $region63: #{_lambda_.1} parent=59 // pred_region
        _
      $region64: #{_lambda_.1} parent=59 // pred_fallthru
        _
    $region60: #{_lambda_.1} parent=5 // pred_fallthru
      _
    %p5404 = scmp.le.s32.totalorder 2, %s16
    // Predicated region
    $region65: #{_lambda_.1} parent=5 // pred_check
      %p5405 = pneg %p5404
    $region66: #{_lambda_.1} parent=5 // pred_check_branch
      %5407 = sbr.rel (%p5405) target = $region68
    $region67: #{_lambda_.1} parent=5 // pred_region
      %s5408 = ssub.s32 %s16, 2
      // Predicated region
      $region69: #{_lambda_.1} parent=67 // pred_check
        %p5409 = pneg %p260
      $region70: #{_lambda_.1} parent=67 // pred_check_branch
        %5411 = sbr.rel (%p5409) target = $region72
      $region71: #{_lambda_.1} parent=67 // pred_region
        %p5412 = scmp.lt.s32.totalorder %s22, 1
        %s5413 = scalar_select %p5412, %s22, 1
        %s5414 = smul.addr %s5413, 4
        %s5415 = smul.addr %s5414, 8
        %s5416 = scalar_lea.vmem %s10, %s5415
      $region72: #{_lambda_.1} parent=67 // pred_fallthru
        _
    $region68: #{_lambda_.1} parent=5 // pred_fallthru
      _
  $region6: #{_lambda_.1} parent=0 // loop_footer
    %s20 = sadd.s32 1, %s16
  $region7: #{_lambda_.1} parent=0 // loop_footer_branch
    %15 = sbr.rel target = $region3
  $region8: #{_lambda_.1} parent=0 // loop_exit
    _

</llo_original>
